<compile_context>
chip_gen: v7x
topology: tpu7x:2x2x1
jax: 0.10.0
libtpu: 0.0.40
codegen_flags: <defaults>
</compile_context>

<pallas_src>
import functools

import jax
import jax.numpy as jnp
from jax.experimental import pallas as pl
from jax.experimental.pallas import tpu as pltpu


# ----------------------------------------------------------------------------- kernel
def _cross_attn_block_kernel(
    x_ref, c_ref,
    ln1_w_ref, ln1_b_ref,
    wq_ref, wk_ref, wv_ref, wo_ref, bo_ref,
    ln2_w_ref, ln2_b_ref,
    w1_ref, b1_ref, w2_ref, b2_ref,
    o_ref,
    *, heads, dim_head, bt, n_q, n_kv, matmul_dtype, approx_recip,
):
    eps = 1e-5
    neg_slope = 0.01                     # PyTorch nn.LeakyReLU() default
    d_model = x_ref.shape[-1]
    d_ctx = c_ref.shape[-1]
    inner = heads * dim_head
    cd = matmul_dtype

    # (bt, n, d) -> (bt*n, d): layout-trivial merge (n_q, n_kv multiples of 8, or bt == 1).
    x = x_ref[...].astype(jnp.float32).reshape(bt * n_q, d_model)
    c = c_ref[...].astype(jnp.float32).reshape(bt * n_kv, d_ctx)

    # ---- LayerNorm 1 (row-wise, batch-independent -> flattened rows) ----
    mu = jnp.mean(x, axis=-1, keepdims=True)
    var = jnp.mean((x - mu) ** 2, axis=-1, keepdims=True)
    xn = (x - mu) * jax.lax.rsqrt(var + eps)
    xn = xn * ln1_w_ref[...] + ln1_b_ref[...]

    # ---- Q/K/V projections as single GEMMs over all rows of the tile ----
    # (1/sqrt(dim_head) is pre-folded into wq by prepare_cross_attn_params.)
    q = jnp.dot(xn.astype(cd), wq_ref[...], preferred_element_type=jnp.float32)
    k = jnp.dot(c.astype(cd),  wk_ref[...], preferred_element_type=jnp.float32)
    v = jnp.dot(c.astype(cd),  wv_ref[...], preferred_element_type=jnp.float32)

    # Per-head lane-masked copies of V (hoisted out of the batch loop): P_h @ V_masked_h
    # lands already placed in head h's lane range of a (n_q, inner) slab, so no
    # lane-offset stores / concatenates are needed downstream.
    lane_ids = jax.lax.broadcasted_iota(jnp.int32, (bt * n_kv, inner), 1)
    v_masked = [
        jnp.where((lane_ids >= h * dim_head) & (lane_ids < (h + 1) * dim_head), v, 0.0
                  ).astype(cd)
        for h in range(heads)
    ]

    # ---- attention: per (batch element, head); head outputs accumulate lane-placed ----
    per_batch = []
    for b in range(bt):
        qb = q[b * n_q:(b + 1) * n_q, :]
        kb = k[b * n_kv:(b + 1) * n_kv, :]
        o_b = None
        for h in range(heads):
            lo, hi = h * dim_head, (h + 1) * dim_head
            s = jnp.dot(qb[:, lo:hi].astype(cd), kb[:, lo:hi].astype(cd).T,
                        preferred_element_type=jnp.float32)            # (n_q, n_kv)
            s = s - jnp.max(s, axis=-1, keepdims=True)
            p = jnp.exp(s)
            denom = jnp.sum(p, axis=-1, keepdims=True)
            if approx_recip:
                p = p * pl.reciprocal(denom, approx=True)               # EUP slot
            else:
                p = p / denom                                           # exact f32 path
            contrib = jnp.dot(p.astype(cd),
                              v_masked[h][b * n_kv:(b + 1) * n_kv, :],
                              preferred_element_type=jnp.float32)       # (n_q, inner)
            o_b = contrib if o_b is None else o_b + contrib
        per_batch.append(o_b)
    # sublane-aligned row concat (n_q is a multiple of 8 whenever bt > 1)
    attn = per_batch[0] if bt == 1 else jnp.concatenate(per_batch, axis=0)

    # ---- output projection: ONE GEMM over all rows (dropout == 0 -> identity) ----
    attn_out = jnp.dot(attn.astype(cd), wo_ref[...],
                       preferred_element_type=jnp.float32) + bo_ref[...]

    x1 = x + attn_out                    # first residual

    # ---- LayerNorm 2 ----
    mu2 = jnp.mean(x1, axis=-1, keepdims=True)
    var2 = jnp.mean((x1 - mu2) ** 2, axis=-1, keepdims=True)
    x2n = (x1 - mu2) * jax.lax.rsqrt(var2 + eps)
    x2n = x2n * ln2_w_ref[...] + ln2_b_ref[...]

    # ---- MLP: fc1 -> LeakyReLU -> fc2 ----
    h1 = jnp.dot(x2n.astype(cd), w1_ref[...],
                 preferred_element_type=jnp.float32) + b1_ref[...]
    h1 = jnp.where(h1 >= 0, h1, neg_slope * h1)
    mlp = jnp.dot(h1.astype(cd), w2_ref[...],
                  preferred_element_type=jnp.float32) + b2_ref[...]

    # ---- second residual, back to (bt, n_q, D) ----
    o_ref[...] = (x1 + mlp).reshape(bt, n_q, d_model).astype(o_ref.dtype)


# ----------------------------------------------------------------------------- sizing
def _tpu_params():
    """Generation-aware limits: VMEM budget, #TensorCores, MXU row width."""
    kind = ""
    try:
        kind = jax.devices()[0].device_kind.lower()
    except Exception:
        pass
    if "v7" in kind or "7x" in kind:       # 64 MiB VMEM, 2 TCs, 256-wide MXU
        return dict(vmem_limit_bytes=48 * 1024 * 1024, num_tensorcores=2,
                    mxu_rows=256, single_buffer_weights=True)
    if "v6" in kind:                        # 128 MiB VMEM, 1 TC, 256-wide MXU
        return dict(vmem_limit_bytes=100 * 1024 * 1024, num_tensorcores=1,
                    mxu_rows=256, single_buffer_weights=False)
    if "v5e" in kind or "v5 lite" in kind or "v5lite" in kind:
        return dict(vmem_limit_bytes=100 * 1024 * 1024, num_tensorcores=1,
                    mxu_rows=128, single_buffer_weights=False)
    # unknown generation: conservative, previously-validated limit
    return dict(vmem_limit_bytes=48 * 1024 * 1024, num_tensorcores=1,
                mxu_rows=128, single_buffer_weights=False)


def _choose_query_tile(N):
    """Query rows are fully independent (small fixed context): tile N only when large."""
    if N <= 1024 or N % 8 != 0:
        return N
    for cand in range(512, 7, -8):          # largest multiple of 8 <= 512 dividing N
        if N % cand == 0:
            return cand
    return N


def _choose_batch_tile(B, nt, n_qsteps, M, D, C, inner, hidden, heads, *,
                       vmem_limit_bytes, num_tensorcores, mxu_rows):
    if nt % 8 != 0 or M % 8 != 0:
        return 1                              # keep (bt, n, d) -> (bt*n, d) merges layout-trivial
    # f32 intermediate footprint of one batch element inside the kernel body
    per_batch = 4 * (nt * (4 * D + 2 * inner + hidden + heads * M)
                     + M * (C + 2 * inner + heads * inner))
    budget = max(vmem_limit_bytes // 3, per_batch)   # leave room for weights + pipeline buffers
    cap = max(1, budget // per_batch)
    cap = min(cap, 8)                                 # bound unroll (bt*heads bodies) / vregs
    cap = min(cap, max(1, 2048 // max(nt, 1)), B)     # bound rows per grid step
    if num_tensorcores > 1 and n_qsteps < num_tensorcores:
        need = -(-num_tensorcores // n_qsteps)        # keep >= num_tensorcores grid steps
        if B >= need:
            cap = min(cap, B // need)
    cap = max(cap, 1)
    best, best_aligned = 1, None
    for cand in range(1, cap + 1):
        if B % cand == 0:
            best = cand
            if (cand * nt) % mxu_rows == 0:
                best_aligned = cand
    # prefer an MXU-row-aligned bt*nt unless it costs more than half the rows
    if best_aligned is not None and 2 * best_aligned >= best:
        return best_aligned
    return best


# ----------------------------------------------------------------------------- wrapper
def prepare_cross_attn_params(raw, *, dim_head, matmul_dtype=jnp.bfloat16):
    """One-time parameter prep: fold 1/sqrt(dim_head) into wq, convert MXU weights to
    matmul_dtype once (not per call), lay 1-D params out as (1, dim) f32 lane rows."""
    md = matmul_dtype
    row = lambda p: jnp.asarray(p, jnp.float32).reshape(1, -1)
    return {
        "ln1_w": row(raw["ln1_w"]), "ln1_b": row(raw["ln1_b"]),
        "wq": jnp.asarray(jnp.asarray(raw["wq"], jnp.float32) * (dim_head ** -0.5), md),
        "wk": jnp.asarray(raw["wk"], md),
        "wv": jnp.asarray(raw["wv"], md),
        "wo": jnp.asarray(raw["wo"], md),
        "bo": row(raw["bo"]),
        "ln2_w": row(raw["ln2_w"]), "ln2_b": row(raw["ln2_b"]),
        "w1": jnp.asarray(raw["w1"], md), "b1": row(raw["b1"]),
        "w2": jnp.asarray(raw["w2"], md), "b2": row(raw["b2"]),
    }


def cross_attn_block(x, c, params, *, heads, dim_head, batch_tile=None, query_tile=None):
    B, N, D = x.shape
    Bc, M, C = c.shape
    if Bc != B:
        raise ValueError("batch mismatch between x and context")
    inner = heads * dim_head
    hidden = params["w1"].shape[1]
    md = params["wq"].dtype                  # MXU operand dtype (set by prepare_*)
    approx_recip = (md != jnp.float32)       # exact softmax divide on the f32 path

    hw = _tpu_params()

    nt = _choose_query_tile(N) if query_tile is None else query_tile
    if N % nt != 0:
        raise ValueError(f"query_tile={nt} must divide N={N}")
    if nt != N and nt % 8 != 0:
        raise ValueError("query_tile must be a multiple of 8 (or equal to N)")
    n_qsteps = N // nt

    if batch_tile is None:
        batch_tile = _choose_batch_tile(
            B, nt, n_qsteps, M, D, C, inner, hidden, heads,
            vmem_limit_bytes=hw["vmem_limit_bytes"],
            num_tensorcores=hw["num_tensorcores"],
            mxu_rows=hw["mxu_rows"])
    bt = batch_tile
    if B % bt != 0:
        raise ValueError(f"batch_tile={bt} must divide batch={B}")
    if bt > 1 and (nt % 8 != 0 or M % 8 != 0):
        raise ValueError("batch_tile > 1 requires the query tile and context length to be "
                         "multiples of 8 (layout-trivial (bt, n, d)->(bt*n, d) merge)")

    grid = (B // bt, n_qsteps)

    kernel = functools.partial(
        _cross_attn_block_kernel,
        heads=heads, dim_head=dim_head, bt=bt, n_q=nt, n_kv=M,
        matmul_dtype=md, approx_recip=approx_recip)

    def resident(shape):
        # Full-array block with a constant index map -> stays resident across the grid.
        idx = lambda i, j: tuple(0 for _ in shape)
        if hw["single_buffer_weights"]:
            try:   # v7x: constant index map -> default double buffer is pure VMEM waste
                return pl.BlockSpec(shape, idx, pipeline_mode=pl.Buffered(1))
            except (TypeError, AttributeError):
                pass
        return pl.BlockSpec(shape, idx)

    grid_spec = pltpu.PrefetchScalarGridSpec(
        num_scalar_prefetch=0,
        grid=grid,
        in_specs=[
            pl.BlockSpec((bt, nt, D), lambda i, j: (i, j, 0)),   # x (batch, query tile)
            pl.BlockSpec((bt, M, C), lambda i, j: (i, 0, 0)),    # context (batch tile)
            resident((1, D)),        # ln1_w
            resident((1, D)),        # ln1_b
            resident((D, inner)),    # wq (softmax scale pre-folded)
            resident((C, inner)),    # wk
            resident((C, inner)),    # wv
            resident((inner, D)),    # wo
            resident((1, D)),        # bo
            resident((1, D)),        # ln2_w
            resident((1, D)),        # ln2_b
            resident((D, hidden)),   # w1
            resident((1, hidden)),   # b1
            resident((hidden, D)),   # w2
            resident((1, D)),        # b2
        ],
        out_specs=pl.BlockSpec((bt, nt, D), lambda i, j: (i, j, 0)),
    )

    return pl.pallas_call(
        kernel,
        out_shape=jax.ShapeDtypeStruct((B, N, D), x.dtype),
        grid_spec=grid_spec,
        compiler_params=pltpu.CompilerParams(
            dimension_semantics=("parallel", "parallel"),
            vmem_limit_bytes=hw["vmem_limit_bytes"],
        ),
    )(
        x, c,
        params["ln1_w"], params["ln1_b"],
        params["wq"], params["wk"], params["wv"], params["wo"], params["bo"],
        params["ln2_w"], params["ln2_b"],
        params["w1"], params["b1"], params["w2"], params["b2"],
    )


# ----------------------------------------------------------------------------- reference
def cross_attn_block_ref(x, c, raw, *, heads, dim_head):
    """Pure-JAX f32 reference of the PyTorch forward pass (for validation)."""
    eps = 1e-5

    def ln(z, w, b):
        mu = jnp.mean(z, -1, keepdims=True)
        var = jnp.mean((z - mu) ** 2, -1, keepdims=True)
        return (z - mu) * jax.lax.rsqrt(var + eps) * w + b

    xn = ln(x, raw["ln1_w"], raw["ln1_b"])
    q = xn @ raw["wq"]
    k = c @ raw["wk"]
    v = c @ raw["wv"]
    B, N, _ = q.shape
    M = k.shape[1]
    qh = q.reshape(B, N, heads, dim_head)
    kh = k.reshape(B, M, heads, dim_head)
    vh = v.reshape(B, M, heads, dim_head)
    s = jnp.einsum("bnhd,bmhd->bhnm", qh, kh) * (dim_head ** -0.5)
    p = jax.nn.softmax(s, axis=-1)
    o = jnp.einsum("bhnm,bmhd->bnhd", p, vh).reshape(B, N, heads * dim_head)
    attn_out = o @ raw["wo"] + raw["bo"]
    x1 = x + attn_out
    x2n = ln(x1, raw["ln2_w"], raw["ln2_b"])
    h1 = x2n @ raw["w1"] + raw["b1"]
    h1 = jnp.where(h1 >= 0, h1, 0.01 * h1)
    mlp = h1 @ raw["w2"] + raw["b2"]
    return x1 + mlp


# ----------------------------------------------------------------------------- demo / test
if __name__ == "__main__":
    # Small shapes implied by the forward: x (B, N, query_dim), context (B, M, context_dim)
    B, N, M = 4, 16, 8
    query_dim, context_dim = 32, 16
    heads, dim_head = 4, 8
    inner = heads * dim_head
    hidden = int(query_dim * 4.0)

    key = jax.random.PRNGKey(0)
    ks = jax.random.split(key, 12)

    x = jax.random.normal(ks[0], (B, N, query_dim), jnp.float32)
    c = jax.random.normal(ks[1], (B, M, context_dim), jnp.float32)

    raw = {
        "ln1_w": jnp.ones((query_dim,), jnp.float32),
        "ln1_b": jnp.zeros((query_dim,), jnp.float32),
        "wq": 0.05 * jax.random.normal(ks[2], (query_dim, inner), jnp.float32),
        "wk": 0.05 * jax.random.normal(ks[3], (context_dim, inner), jnp.float32),
        "wv": 0.05 * jax.random.normal(ks[4], (context_dim, inner), jnp.float32),
        "wo": 0.05 * jax.random.normal(ks[5], (inner, query_dim), jnp.float32),
        "bo": 0.01 * jax.random.normal(ks[6], (query_dim,), jnp.float32),
        "ln2_w": jnp.ones((query_dim,), jnp.float32),
        "ln2_b": jnp.zeros((query_dim,), jnp.float32),
        "w1": 0.05 * jax.random.normal(ks[7], (query_dim, hidden), jnp.float32),
        "b1": 0.01 * jax.random.normal(ks[8], (hidden,), jnp.float32),
        "w2": 0.05 * jax.random.normal(ks[9], (hidden, query_dim), jnp.float32),
        "b2": 0.01 * jax.random.normal(ks[10], (query_dim,), jnp.float32),
    }

    ref = cross_attn_block_ref(x, c, raw, heads=heads, dim_head=dim_head)

    # f32 MXU path: exact module semantics (exact softmax divide, f32 weights).
    p_f32 = prepare_cross_attn_params(raw, dim_head=dim_head, matmul_dtype=jnp.float32)
    out_f32 = jax.block_until_ready(
        cross_attn_block(x, c, p_f32, heads=heads, dim_head=dim_head))
    if not jnp.allclose(out_f32, ref, rtol=5e-3, atol=5e-3):
        raise AssertionError("f32 Pallas kernel does not match pure-JAX reference")

    # bf16-MXU-operand path (perf default for v5e/v6e/v7x), f32 accumulation.
    p_bf16 = prepare_cross_attn_params(raw, dim_head=dim_head, matmul_dtype=jnp.bfloat16)
    out_bf16 = jax.block_until_ready(
        cross_attn_block(x, c, p_bf16, heads=heads, dim_head=dim_head))
    if not jnp.allclose(out_bf16, ref, rtol=5e-2, atol=5e-2):
        raise AssertionError("bf16 Pallas kernel diverges from reference")

    print("KERNEL_OK")
</pallas_src>

<mosaic_0001>
module attributes {stable_mosaic.version = 11 : i64} {
  func.func @_cross_attn_block_kernel(%arg0: i32, %arg1: i32, %arg2: memref<4x16x32xf32, #tpu.memory_space<vmem>>, %arg3: memref<4x8x16xf32, #tpu.memory_space<vmem>>, %arg4: memref<1x32xf32, #tpu.memory_space<vmem>>, %arg5: memref<1x32xf32, #tpu.memory_space<vmem>>, %arg6: memref<32x32xf32, #tpu.memory_space<vmem>>, %arg7: memref<16x32xf32, #tpu.memory_space<vmem>>, %arg8: memref<16x32xf32, #tpu.memory_space<vmem>>, %arg9: memref<32x32xf32, #tpu.memory_space<vmem>>, %arg10: memref<1x32xf32, #tpu.memory_space<vmem>>, %arg11: memref<1x32xf32, #tpu.memory_space<vmem>>, %arg12: memref<1x32xf32, #tpu.memory_space<vmem>>, %arg13: memref<32x128xf32, #tpu.memory_space<vmem>>, %arg14: memref<1x128xf32, #tpu.memory_space<vmem>>, %arg15: memref<128x32xf32, #tpu.memory_space<vmem>>, %arg16: memref<1x32xf32, #tpu.memory_space<vmem>>, %arg17: memref<4x16x32xf32, #tpu.memory_space<vmem>>) attributes {dimension_semantics = [#tpu.dimension_semantics<parallel>, #tpu.dimension_semantics<parallel>], iteration_bounds = array<i64: 1, 1>, scalar_prefetch = 0 : i64, scratch_operands = 0 : i64, tpu.core_type = #tpu.core_type<tc>, window_params = [{transform_indices = @transform_0, window_bounds = array<i64: 4, 16, 32>}, {transform_indices = @transform_1, window_bounds = array<i64: 4, 8, 16>}, {pipeline_mode = #tpu.pipeline_mode<synchronous>, transform_indices = @transform_2, window_bounds = array<i64: 1, 32>}, {pipeline_mode = #tpu.pipeline_mode<synchronous>, transform_indices = @transform_3, window_bounds = array<i64: 1, 32>}, {pipeline_mode = #tpu.pipeline_mode<synchronous>, transform_indices = @transform_4, window_bounds = array<i64: 32, 32>}, {pipeline_mode = #tpu.pipeline_mode<synchronous>, transform_indices = @transform_5, window_bounds = array<i64: 16, 32>}, {pipeline_mode = #tpu.pipeline_mode<synchronous>, transform_indices = @transform_6, window_bounds = array<i64: 16, 32>}, {pipeline_mode = #tpu.pipeline_mode<synchronous>, transform_indices = @transform_7, window_bounds = array<i64: 32, 32>}, {pipeline_mode = #tpu.pipeline_mode<synchronous>, transform_indices = @transform_8, window_bounds = array<i64: 1, 32>}, {pipeline_mode = #tpu.pipeline_mode<synchronous>, transform_indices = @transform_9, window_bounds = array<i64: 1, 32>}, {pipeline_mode = #tpu.pipeline_mode<synchronous>, transform_indices = @transform_10, window_bounds = array<i64: 1, 32>}, {pipeline_mode = #tpu.pipeline_mode<synchronous>, transform_indices = @transform_11, window_bounds = array<i64: 32, 128>}, {pipeline_mode = #tpu.pipeline_mode<synchronous>, transform_indices = @transform_12, window_bounds = array<i64: 1, 128>}, {pipeline_mode = #tpu.pipeline_mode<synchronous>, transform_indices = @transform_13, window_bounds = array<i64: 128, 32>}, {pipeline_mode = #tpu.pipeline_mode<synchronous>, transform_indices = @transform_14, window_bounds = array<i64: 1, 32>}, {transform_indices = @transform_15, window_bounds = array<i64: 4, 16, 32>}]} {
    %c0 = arith.constant 0 : index
    %c0_0 = arith.constant 0 : index
    %c0_1 = arith.constant 0 : index
    %0 = vector.load %arg2[%c0, %c0_0, %c0_1] : memref<4x16x32xf32, #tpu.memory_space<vmem>>, vector<4x16x32xf32>
    %1 = vector.shape_cast %0 : vector<4x16x32xf32> to vector<64x32xf32>
    %c0_2 = arith.constant 0 : index
    %c0_3 = arith.constant 0 : index
    %c0_4 = arith.constant 0 : index
    %2 = vector.load %arg3[%c0_2, %c0_3, %c0_4] : memref<4x8x16xf32, #tpu.memory_space<vmem>>, vector<4x8x16xf32>
    %3 = vector.shape_cast %2 : vector<4x8x16xf32> to vector<32x16xf32>
    %cst = arith.constant dense<0.000000e+00> : vector<64xf32>
    %4 = vector.multi_reduction <add>, %1, %cst [1] : vector<64x32xf32> to vector<64xf32>
    %5 = vector.shape_cast %4 : vector<64xf32> to vector<64x1xf32>
    %cst_5 = arith.constant 3.200000e+01 : f32
    %6 = vector.broadcast %cst_5 : f32 to vector<64x1xf32>
    %7 = arith.divf %5, %6 : vector<64x1xf32>
    %8 = vector.broadcast %7 : vector<64x1xf32> to vector<64x32xf32>
    %9 = arith.subf %1, %8 : vector<64x32xf32>
    %10 = arith.mulf %9, %9 : vector<64x32xf32>
    %cst_6 = arith.constant dense<0.000000e+00> : vector<64xf32>
    %11 = vector.multi_reduction <add>, %10, %cst_6 [1] : vector<64x32xf32> to vector<64xf32>
    %12 = vector.shape_cast %11 : vector<64xf32> to vector<64x1xf32>
    %cst_7 = arith.constant 3.200000e+01 : f32
    %13 = vector.broadcast %cst_7 : f32 to vector<64x1xf32>
    %14 = arith.divf %12, %13 : vector<64x1xf32>
    %15 = vector.broadcast %7 : vector<64x1xf32> to vector<64x32xf32>
    %16 = arith.subf %1, %15 : vector<64x32xf32>
    %cst_8 = arith.constant 9.99999974E-6 : f32
    %17 = vector.broadcast %cst_8 : f32 to vector<64x1xf32>
    %18 = arith.addf %14, %17 : vector<64x1xf32>
    %19 = math.rsqrt %18 : vector<64x1xf32>
    %20 = vector.broadcast %19 : vector<64x1xf32> to vector<64x32xf32>
    %21 = arith.mulf %16, %20 : vector<64x32xf32>
    %c0_9 = arith.constant 0 : index
    %c0_10 = arith.constant 0 : index
    %22 = vector.load %arg4[%c0_9, %c0_10] : memref<1x32xf32, #tpu.memory_space<vmem>>, vector<1x32xf32>
    %23 = vector.broadcast %22 : vector<1x32xf32> to vector<64x32xf32>
    %24 = arith.mulf %21, %23 : vector<64x32xf32>
    %c0_11 = arith.constant 0 : index
    %c0_12 = arith.constant 0 : index
    %25 = vector.load %arg5[%c0_11, %c0_12] : memref<1x32xf32, #tpu.memory_space<vmem>>, vector<1x32xf32>
    %26 = vector.broadcast %25 : vector<1x32xf32> to vector<64x32xf32>
    %27 = arith.addf %24, %26 : vector<64x32xf32>
    %c0_13 = arith.constant 0 : index
    %c0_14 = arith.constant 0 : index
    %28 = vector.load %arg6[%c0_13, %c0_14] : memref<32x32xf32, #tpu.memory_space<vmem>>, vector<32x32xf32>
    %cst_15 = arith.constant dense<0.000000e+00> : vector<64x32xf32>
    %29 = tpu.matmul %27, %28, %cst_15 {dimension_numbers = #tpu.dot_dimension_numbers<[1], [0], [0], [1], [0, 0, 1, 1], [], []>} : vector<64x32xf32>, vector<32x32xf32>, vector<64x32xf32> -> vector<64x32xf32>
    %c0_16 = arith.constant 0 : index
    %c0_17 = arith.constant 0 : index
    %30 = vector.load %arg7[%c0_16, %c0_17] : memref<16x32xf32, #tpu.memory_space<vmem>>, vector<16x32xf32>
    %cst_18 = arith.constant dense<0.000000e+00> : vector<32x32xf32>
    %31 = tpu.matmul %3, %30, %cst_18 {dimension_numbers = #tpu.dot_dimension_numbers<[1], [0], [0], [1], [0, 0, 1, 1], [], []>} : vector<32x16xf32>, vector<16x32xf32>, vector<32x32xf32> -> vector<32x32xf32>
    %c0_19 = arith.constant 0 : index
    %c0_20 = arith.constant 0 : index
    %32 = vector.load %arg8[%c0_19, %c0_20] : memref<16x32xf32, #tpu.memory_space<vmem>>, vector<16x32xf32>
    %cst_21 = arith.constant dense<0.000000e+00> : vector<32x32xf32>
    %33 = tpu.matmul %3, %32, %cst_21 {dimension_numbers = #tpu.dot_dimension_numbers<[1], [0], [0], [1], [0, 0, 1, 1], [], []>} : vector<32x16xf32>, vector<16x32xf32>, vector<32x32xf32> -> vector<32x32xf32>
    %34 = tpu.iota {dimensions = array<i32: 1>} : vector<32x32xi32>
    %c0_i32 = arith.constant 0 : i32
    %35 = vector.broadcast %c0_i32 : i32 to vector<32x32xi32>
    %36 = arith.cmpi sge, %34, %35 : vector<32x32xi32>
    %c8_i32 = arith.constant 8 : i32
    %37 = vector.broadcast %c8_i32 : i32 to vector<32x32xi32>
    %38 = arith.cmpi slt, %34, %37 : vector<32x32xi32>
    %39 = arith.andi %36, %38 : vector<32x32xi1>
    %cst_22 = arith.constant 0.000000e+00 : f32
    %40 = vector.broadcast %cst_22 : f32 to vector<32x32xf32>
    %41 = arith.select %39, %33, %40 : vector<32x32xi1>, vector<32x32xf32>
    %c8_i32_23 = arith.constant 8 : i32
    %42 = vector.broadcast %c8_i32_23 : i32 to vector<32x32xi32>
    %43 = arith.cmpi sge, %34, %42 : vector<32x32xi32>
    %c16_i32 = arith.constant 16 : i32
    %44 = vector.broadcast %c16_i32 : i32 to vector<32x32xi32>
    %45 = arith.cmpi slt, %34, %44 : vector<32x32xi32>
    %46 = arith.andi %43, %45 : vector<32x32xi1>
    %cst_24 = arith.constant 0.000000e+00 : f32
    %47 = vector.broadcast %cst_24 : f32 to vector<32x32xf32>
    %48 = arith.select %46, %33, %47 : vector<32x32xi1>, vector<32x32xf32>
    %c16_i32_25 = arith.constant 16 : i32
    %49 = vector.broadcast %c16_i32_25 : i32 to vector<32x32xi32>
    %50 = arith.cmpi sge, %34, %49 : vector<32x32xi32>
    %c24_i32 = arith.constant 24 : i32
    %51 = vector.broadcast %c24_i32 : i32 to vector<32x32xi32>
    %52 = arith.cmpi slt, %34, %51 : vector<32x32xi32>
    %53 = arith.andi %50, %52 : vector<32x32xi1>
    %cst_26 = arith.constant 0.000000e+00 : f32
    %54 = vector.broadcast %cst_26 : f32 to vector<32x32xf32>
    %55 = arith.select %53, %33, %54 : vector<32x32xi1>, vector<32x32xf32>
    %c24_i32_27 = arith.constant 24 : i32
    %56 = vector.broadcast %c24_i32_27 : i32 to vector<32x32xi32>
    %57 = arith.cmpi sge, %34, %56 : vector<32x32xi32>
    %c32_i32 = arith.constant 32 : i32
    %58 = vector.broadcast %c32_i32 : i32 to vector<32x32xi32>
    %59 = arith.cmpi slt, %34, %58 : vector<32x32xi32>
    %60 = arith.andi %57, %59 : vector<32x32xi1>
    %cst_28 = arith.constant 0.000000e+00 : f32
    %61 = vector.broadcast %cst_28 : f32 to vector<32x32xf32>
    %62 = arith.select %60, %33, %61 : vector<32x32xi1>, vector<32x32xf32>
    %63 = vector.extract_strided_slice %29 {offsets = [0, 0], sizes = [16, 32], strides = [1, 1]} : vector<64x32xf32> to vector<16x32xf32>
    %64 = vector.extract_strided_slice %31 {offsets = [0, 0], sizes = [8, 32], strides = [1, 1]} : vector<32x32xf32> to vector<8x32xf32>
    %65 = vector.extract_strided_slice %63 {offsets = [0, 0], sizes = [16, 8], strides = [1, 1]} : vector<16x32xf32> to vector<16x8xf32>
    %66 = vector.extract_strided_slice %64 {offsets = [0, 0], sizes = [8, 8], strides = [1, 1]} : vector<8x32xf32> to vector<8x8xf32>
    %67 = tpu.transpose %66, [1, 0] : vector<8x8xf32> -> vector<8x8xf32>
    %cst_29 = arith.constant dense<0.000000e+00> : vector<16x8xf32>
    %68 = tpu.matmul %65, %67, %cst_29 {dimension_numbers = #tpu.dot_dimension_numbers<[1], [0], [0], [1], [0, 0, 1, 1], [], []>} : vector<16x8xf32>, vector<8x8xf32>, vector<16x8xf32> -> vector<16x8xf32>
    %cst_30 = arith.constant dense<0xFF800000> : vector<16xf32>
    %69 = vector.multi_reduction <maximumf>, %68, %cst_30 [1] : vector<16x8xf32> to vector<16xf32>
    %70 = vector.shape_cast %69 : vector<16xf32> to vector<16x1xf32>
    %71 = vector.broadcast %70 : vector<16x1xf32> to vector<16x8xf32>
    %72 = arith.subf %68, %71 : vector<16x8xf32>
    %73 = math.exp %72 : vector<16x8xf32>
    %cst_31 = arith.constant dense<0.000000e+00> : vector<16xf32>
    %74 = vector.multi_reduction <add>, %73, %cst_31 [1] : vector<16x8xf32> to vector<16xf32>
    %75 = vector.shape_cast %74 : vector<16xf32> to vector<16x1xf32>
    %76 = vector.broadcast %75 : vector<16x1xf32> to vector<16x8xf32>
    %77 = arith.divf %73, %76 : vector<16x8xf32>
    %78 = vector.extract_strided_slice %41 {offsets = [0, 0], sizes = [8, 32], strides = [1, 1]} : vector<32x32xf32> to vector<8x32xf32>
    %cst_32 = arith.constant dense<0.000000e+00> : vector<16x32xf32>
    %79 = tpu.matmul %77, %78, %cst_32 {dimension_numbers = #tpu.dot_dimension_numbers<[1], [0], [0], [1], [0, 0, 1, 1], [], []>} : vector<16x8xf32>, vector<8x32xf32>, vector<16x32xf32> -> vector<16x32xf32>
    %80 = vector.extract_strided_slice %63 {offsets = [0, 8], sizes = [16, 8], strides = [1, 1]} : vector<16x32xf32> to vector<16x8xf32>
    %81 = vector.extract_strided_slice %64 {offsets = [0, 8], sizes = [8, 8], strides = [1, 1]} : vector<8x32xf32> to vector<8x8xf32>
    %82 = tpu.transpose %81, [1, 0] : vector<8x8xf32> -> vector<8x8xf32>
    %cst_33 = arith.constant dense<0.000000e+00> : vector<16x8xf32>
    %83 = tpu.matmul %80, %82, %cst_33 {dimension_numbers = #tpu.dot_dimension_numbers<[1], [0], [0], [1], [0, 0, 1, 1], [], []>} : vector<16x8xf32>, vector<8x8xf32>, vector<16x8xf32> -> vector<16x8xf32>
    %cst_34 = arith.constant dense<0xFF800000> : vector<16xf32>
    %84 = vector.multi_reduction <maximumf>, %83, %cst_34 [1] : vector<16x8xf32> to vector<16xf32>
    %85 = vector.shape_cast %84 : vector<16xf32> to vector<16x1xf32>
    %86 = vector.broadcast %85 : vector<16x1xf32> to vector<16x8xf32>
    %87 = arith.subf %83, %86 : vector<16x8xf32>
    %88 = math.exp %87 : vector<16x8xf32>
    %cst_35 = arith.constant dense<0.000000e+00> : vector<16xf32>
    %89 = vector.multi_reduction <add>, %88, %cst_35 [1] : vector<16x8xf32> to vector<16xf32>
    %90 = vector.shape_cast %89 : vector<16xf32> to vector<16x1xf32>
    %91 = vector.broadcast %90 : vector<16x1xf32> to vector<16x8xf32>
    %92 = arith.divf %88, %91 : vector<16x8xf32>
    %93 = vector.extract_strided_slice %48 {offsets = [0, 0], sizes = [8, 32], strides = [1, 1]} : vector<32x32xf32> to vector<8x32xf32>
    %cst_36 = arith.constant dense<0.000000e+00> : vector<16x32xf32>
    %94 = tpu.matmul %92, %93, %cst_36 {dimension_numbers = #tpu.dot_dimension_numbers<[1], [0], [0], [1], [0, 0, 1, 1], [], []>} : vector<16x8xf32>, vector<8x32xf32>, vector<16x32xf32> -> vector<16x32xf32>
    %95 = arith.addf %79, %94 : vector<16x32xf32>
    %96 = vector.extract_strided_slice %63 {offsets = [0, 16], sizes = [16, 8], strides = [1, 1]} : vector<16x32xf32> to vector<16x8xf32>
    %97 = vector.extract_strided_slice %64 {offsets = [0, 16], sizes = [8, 8], strides = [1, 1]} : vector<8x32xf32> to vector<8x8xf32>
    %98 = tpu.transpose %97, [1, 0] : vector<8x8xf32> -> vector<8x8xf32>
    %cst_37 = arith.constant dense<0.000000e+00> : vector<16x8xf32>
    %99 = tpu.matmul %96, %98, %cst_37 {dimension_numbers = #tpu.dot_dimension_numbers<[1], [0], [0], [1], [0, 0, 1, 1], [], []>} : vector<16x8xf32>, vector<8x8xf32>, vector<16x8xf32> -> vector<16x8xf32>
    %cst_38 = arith.constant dense<0xFF800000> : vector<16xf32>
    %100 = vector.multi_reduction <maximumf>, %99, %cst_38 [1] : vector<16x8xf32> to vector<16xf32>
    %101 = vector.shape_cast %100 : vector<16xf32> to vector<16x1xf32>
    %102 = vector.broadcast %101 : vector<16x1xf32> to vector<16x8xf32>
    %103 = arith.subf %99, %102 : vector<16x8xf32>
    %104 = math.exp %103 : vector<16x8xf32>
    %cst_39 = arith.constant dense<0.000000e+00> : vector<16xf32>
    %105 = vector.multi_reduction <add>, %104, %cst_39 [1] : vector<16x8xf32> to vector<16xf32>
    %106 = vector.shape_cast %105 : vector<16xf32> to vector<16x1xf32>
    %107 = vector.broadcast %106 : vector<16x1xf32> to vector<16x8xf32>
    %108 = arith.divf %104, %107 : vector<16x8xf32>
    %109 = vector.extract_strided_slice %55 {offsets = [0, 0], sizes = [8, 32], strides = [1, 1]} : vector<32x32xf32> to vector<8x32xf32>
    %cst_40 = arith.constant dense<0.000000e+00> : vector<16x32xf32>
    %110 = tpu.matmul %108, %109, %cst_40 {dimension_numbers = #tpu.dot_dimension_numbers<[1], [0], [0], [1], [0, 0, 1, 1], [], []>} : vector<16x8xf32>, vector<8x32xf32>, vector<16x32xf32> -> vector<16x32xf32>
    %111 = arith.addf %95, %110 : vector<16x32xf32>
    %112 = vector.extract_strided_slice %63 {offsets = [0, 24], sizes = [16, 8], strides = [1, 1]} : vector<16x32xf32> to vector<16x8xf32>
    %113 = vector.extract_strided_slice %64 {offsets = [0, 24], sizes = [8, 8], strides = [1, 1]} : vector<8x32xf32> to vector<8x8xf32>
    %114 = tpu.transpose %113, [1, 0] : vector<8x8xf32> -> vector<8x8xf32>
    %cst_41 = arith.constant dense<0.000000e+00> : vector<16x8xf32>
    %115 = tpu.matmul %112, %114, %cst_41 {dimension_numbers = #tpu.dot_dimension_numbers<[1], [0], [0], [1], [0, 0, 1, 1], [], []>} : vector<16x8xf32>, vector<8x8xf32>, vector<16x8xf32> -> vector<16x8xf32>
    %cst_42 = arith.constant dense<0xFF800000> : vector<16xf32>
    %116 = vector.multi_reduction <maximumf>, %115, %cst_42 [1] : vector<16x8xf32> to vector<16xf32>
    %117 = vector.shape_cast %116 : vector<16xf32> to vector<16x1xf32>
    %118 = vector.broadcast %117 : vector<16x1xf32> to vector<16x8xf32>
    %119 = arith.subf %115, %118 : vector<16x8xf32>
    %120 = math.exp %119 : vector<16x8xf32>
    %cst_43 = arith.constant dense<0.000000e+00> : vector<16xf32>
    %121 = vector.multi_reduction <add>, %120, %cst_43 [1] : vector<16x8xf32> to vector<16xf32>
    %122 = vector.shape_cast %121 : vector<16xf32> to vector<16x1xf32>
    %123 = vector.broadcast %122 : vector<16x1xf32> to vector<16x8xf32>
    %124 = arith.divf %120, %123 : vector<16x8xf32>
    %125 = vector.extract_strided_slice %62 {offsets = [0, 0], sizes = [8, 32], strides = [1, 1]} : vector<32x32xf32> to vector<8x32xf32>
    %cst_44 = arith.constant dense<0.000000e+00> : vector<16x32xf32>
    %126 = tpu.matmul %124, %125, %cst_44 {dimension_numbers = #tpu.dot_dimension_numbers<[1], [0], [0], [1], [0, 0, 1, 1], [], []>} : vector<16x8xf32>, vector<8x32xf32>, vector<16x32xf32> -> vector<16x32xf32>
    %127 = arith.addf %111, %126 : vector<16x32xf32>
    %128 = vector.extract_strided_slice %29 {offsets = [16, 0], sizes = [16, 32], strides = [1, 1]} : vector<64x32xf32> to vector<16x32xf32>
    %129 = vector.extract_strided_slice %31 {offsets = [8, 0], sizes = [8, 32], strides = [1, 1]} : vector<32x32xf32> to vector<8x32xf32>
    %130 = vector.extract_strided_slice %128 {offsets = [0, 0], sizes = [16, 8], strides = [1, 1]} : vector<16x32xf32> to vector<16x8xf32>
    %131 = vector.extract_strided_slice %129 {offsets = [0, 0], sizes = [8, 8], strides = [1, 1]} : vector<8x32xf32> to vector<8x8xf32>
    %132 = tpu.transpose %131, [1, 0] : vector<8x8xf32> -> vector<8x8xf32>
    %cst_45 = arith.constant dense<0.000000e+00> : vector<16x8xf32>
    %133 = tpu.matmul %130, %132, %cst_45 {dimension_numbers = #tpu.dot_dimension_numbers<[1], [0], [0], [1], [0, 0, 1, 1], [], []>} : vector<16x8xf32>, vector<8x8xf32>, vector<16x8xf32> -> vector<16x8xf32>
    %cst_46 = arith.constant dense<0xFF800000> : vector<16xf32>
    %134 = vector.multi_reduction <maximumf>, %133, %cst_46 [1] : vector<16x8xf32> to vector<16xf32>
    %135 = vector.shape_cast %134 : vector<16xf32> to vector<16x1xf32>
    %136 = vector.broadcast %135 : vector<16x1xf32> to vector<16x8xf32>
    %137 = arith.subf %133, %136 : vector<16x8xf32>
    %138 = math.exp %137 : vector<16x8xf32>
    %cst_47 = arith.constant dense<0.000000e+00> : vector<16xf32>
    %139 = vector.multi_reduction <add>, %138, %cst_47 [1] : vector<16x8xf32> to vector<16xf32>
    %140 = vector.shape_cast %139 : vector<16xf32> to vector<16x1xf32>
    %141 = vector.broadcast %140 : vector<16x1xf32> to vector<16x8xf32>
    %142 = arith.divf %138, %141 : vector<16x8xf32>
    %143 = vector.extract_strided_slice %41 {offsets = [8, 0], sizes = [8, 32], strides = [1, 1]} : vector<32x32xf32> to vector<8x32xf32>
    %cst_48 = arith.constant dense<0.000000e+00> : vector<16x32xf32>
    %144 = tpu.matmul %142, %143, %cst_48 {dimension_numbers = #tpu.dot_dimension_numbers<[1], [0], [0], [1], [0, 0, 1, 1], [], []>} : vector<16x8xf32>, vector<8x32xf32>, vector<16x32xf32> -> vector<16x32xf32>
    %145 = vector.extract_strided_slice %128 {offsets = [0, 8], sizes = [16, 8], strides = [1, 1]} : vector<16x32xf32> to vector<16x8xf32>
    %146 = vector.extract_strided_slice %129 {offsets = [0, 8], sizes = [8, 8], strides = [1, 1]} : vector<8x32xf32> to vector<8x8xf32>
    %147 = tpu.transpose %146, [1, 0] : vector<8x8xf32> -> vector<8x8xf32>
    %cst_49 = arith.constant dense<0.000000e+00> : vector<16x8xf32>
    %148 = tpu.matmul %145, %147, %cst_49 {dimension_numbers = #tpu.dot_dimension_numbers<[1], [0], [0], [1], [0, 0, 1, 1], [], []>} : vector<16x8xf32>, vector<8x8xf32>, vector<16x8xf32> -> vector<16x8xf32>
    %cst_50 = arith.constant dense<0xFF800000> : vector<16xf32>
    %149 = vector.multi_reduction <maximumf>, %148, %cst_50 [1] : vector<16x8xf32> to vector<16xf32>
    %150 = vector.shape_cast %149 : vector<16xf32> to vector<16x1xf32>
    %151 = vector.broadcast %150 : vector<16x1xf32> to vector<16x8xf32>
    %152 = arith.subf %148, %151 : vector<16x8xf32>
    %153 = math.exp %152 : vector<16x8xf32>
    %cst_51 = arith.constant dense<0.000000e+00> : vector<16xf32>
    %154 = vector.multi_reduction <add>, %153, %cst_51 [1] : vector<16x8xf32> to vector<16xf32>
    %155 = vector.shape_cast %154 : vector<16xf32> to vector<16x1xf32>
    %156 = vector.broadcast %155 : vector<16x1xf32> to vector<16x8xf32>
    %157 = arith.divf %153, %156 : vector<16x8xf32>
    %158 = vector.extract_strided_slice %48 {offsets = [8, 0], sizes = [8, 32], strides = [1, 1]} : vector<32x32xf32> to vector<8x32xf32>
    %cst_52 = arith.constant dense<0.000000e+00> : vector<16x32xf32>
    %159 = tpu.matmul %157, %158, %cst_52 {dimension_numbers = #tpu.dot_dimension_numbers<[1], [0], [0], [1], [0, 0, 1, 1], [], []>} : vector<16x8xf32>, vector<8x32xf32>, vector<16x32xf32> -> vector<16x32xf32>
    %160 = arith.addf %144, %159 : vector<16x32xf32>
    %161 = vector.extract_strided_slice %128 {offsets = [0, 16], sizes = [16, 8], strides = [1, 1]} : vector<16x32xf32> to vector<16x8xf32>
    %162 = vector.extract_strided_slice %129 {offsets = [0, 16], sizes = [8, 8], strides = [1, 1]} : vector<8x32xf32> to vector<8x8xf32>
    %163 = tpu.transpose %162, [1, 0] : vector<8x8xf32> -> vector<8x8xf32>
    %cst_53 = arith.constant dense<0.000000e+00> : vector<16x8xf32>
    %164 = tpu.matmul %161, %163, %cst_53 {dimension_numbers = #tpu.dot_dimension_numbers<[1], [0], [0], [1], [0, 0, 1, 1], [], []>} : vector<16x8xf32>, vector<8x8xf32>, vector<16x8xf32> -> vector<16x8xf32>
    %cst_54 = arith.constant dense<0xFF800000> : vector<16xf32>
    %165 = vector.multi_reduction <maximumf>, %164, %cst_54 [1] : vector<16x8xf32> to vector<16xf32>
    %166 = vector.shape_cast %165 : vector<16xf32> to vector<16x1xf32>
    %167 = vector.broadcast %166 : vector<16x1xf32> to vector<16x8xf32>
    %168 = arith.subf %164, %167 : vector<16x8xf32>
    %169 = math.exp %168 : vector<16x8xf32>
    %cst_55 = arith.constant dense<0.000000e+00> : vector<16xf32>
    %170 = vector.multi_reduction <add>, %169, %cst_55 [1] : vector<16x8xf32> to vector<16xf32>
    %171 = vector.shape_cast %170 : vector<16xf32> to vector<16x1xf32>
    %172 = vector.broadcast %171 : vector<16x1xf32> to vector<16x8xf32>
    %173 = arith.divf %169, %172 : vector<16x8xf32>
    %174 = vector.extract_strided_slice %55 {offsets = [8, 0], sizes = [8, 32], strides = [1, 1]} : vector<32x32xf32> to vector<8x32xf32>
    %cst_56 = arith.constant dense<0.000000e+00> : vector<16x32xf32>
    %175 = tpu.matmul %173, %174, %cst_56 {dimension_numbers = #tpu.dot_dimension_numbers<[1], [0], [0], [1], [0, 0, 1, 1], [], []>} : vector<16x8xf32>, vector<8x32xf32>, vector<16x32xf32> -> vector<16x32xf32>
    %176 = arith.addf %160, %175 : vector<16x32xf32>
    %177 = vector.extract_strided_slice %128 {offsets = [0, 24], sizes = [16, 8], strides = [1, 1]} : vector<16x32xf32> to vector<16x8xf32>
    %178 = vector.extract_strided_slice %129 {offsets = [0, 24], sizes = [8, 8], strides = [1, 1]} : vector<8x32xf32> to vector<8x8xf32>
    %179 = tpu.transpose %178, [1, 0] : vector<8x8xf32> -> vector<8x8xf32>
    %cst_57 = arith.constant dense<0.000000e+00> : vector<16x8xf32>
    %180 = tpu.matmul %177, %179, %cst_57 {dimension_numbers = #tpu.dot_dimension_numbers<[1], [0], [0], [1], [0, 0, 1, 1], [], []>} : vector<16x8xf32>, vector<8x8xf32>, vector<16x8xf32> -> vector<16x8xf32>
    %cst_58 = arith.constant dense<0xFF800000> : vector<16xf32>
    %181 = vector.multi_reduction <maximumf>, %180, %cst_58 [1] : vector<16x8xf32> to vector<16xf32>
    %182 = vector.shape_cast %181 : vector<16xf32> to vector<16x1xf32>
    %183 = vector.broadcast %182 : vector<16x1xf32> to vector<16x8xf32>
    %184 = arith.subf %180, %183 : vector<16x8xf32>
    %185 = math.exp %184 : vector<16x8xf32>
    %cst_59 = arith.constant dense<0.000000e+00> : vector<16xf32>
    %186 = vector.multi_reduction <add>, %185, %cst_59 [1] : vector<16x8xf32> to vector<16xf32>
    %187 = vector.shape_cast %186 : vector<16xf32> to vector<16x1xf32>
    %188 = vector.broadcast %187 : vector<16x1xf32> to vector<16x8xf32>
    %189 = arith.divf %185, %188 : vector<16x8xf32>
    %190 = vector.extract_strided_slice %62 {offsets = [8, 0], sizes = [8, 32], strides = [1, 1]} : vector<32x32xf32> to vector<8x32xf32>
    %cst_60 = arith.constant dense<0.000000e+00> : vector<16x32xf32>
    %191 = tpu.matmul %189, %190, %cst_60 {dimension_numbers = #tpu.dot_dimension_numbers<[1], [0], [0], [1], [0, 0, 1, 1], [], []>} : vector<16x8xf32>, vector<8x32xf32>, vector<16x32xf32> -> vector<16x32xf32>
    %192 = arith.addf %176, %191 : vector<16x32xf32>
    %193 = vector.extract_strided_slice %29 {offsets = [32, 0], sizes = [16, 32], strides = [1, 1]} : vector<64x32xf32> to vector<16x32xf32>
    %194 = vector.extract_strided_slice %31 {offsets = [16, 0], sizes = [8, 32], strides = [1, 1]} : vector<32x32xf32> to vector<8x32xf32>
    %195 = vector.extract_strided_slice %193 {offsets = [0, 0], sizes = [16, 8], strides = [1, 1]} : vector<16x32xf32> to vector<16x8xf32>
    %196 = vector.extract_strided_slice %194 {offsets = [0, 0], sizes = [8, 8], strides = [1, 1]} : vector<8x32xf32> to vector<8x8xf32>
    %197 = tpu.transpose %196, [1, 0] : vector<8x8xf32> -> vector<8x8xf32>
    %cst_61 = arith.constant dense<0.000000e+00> : vector<16x8xf32>
    %198 = tpu.matmul %195, %197, %cst_61 {dimension_numbers = #tpu.dot_dimension_numbers<[1], [0], [0], [1], [0, 0, 1, 1], [], []>} : vector<16x8xf32>, vector<8x8xf32>, vector<16x8xf32> -> vector<16x8xf32>
    %cst_62 = arith.constant dense<0xFF800000> : vector<16xf32>
    %199 = vector.multi_reduction <maximumf>, %198, %cst_62 [1] : vector<16x8xf32> to vector<16xf32>
    %200 = vector.shape_cast %199 : vector<16xf32> to vector<16x1xf32>
    %201 = vector.broadcast %200 : vector<16x1xf32> to vector<16x8xf32>
    %202 = arith.subf %198, %201 : vector<16x8xf32>
    %203 = math.exp %202 : vector<16x8xf32>
    %cst_63 = arith.constant dense<0.000000e+00> : vector<16xf32>
    %204 = vector.multi_reduction <add>, %203, %cst_63 [1] : vector<16x8xf32> to vector<16xf32>
    %205 = vector.shape_cast %204 : vector<16xf32> to vector<16x1xf32>
    %206 = vector.broadcast %205 : vector<16x1xf32> to vector<16x8xf32>
    %207 = arith.divf %203, %206 : vector<16x8xf32>
    %208 = vector.extract_strided_slice %41 {offsets = [16, 0], sizes = [8, 32], strides = [1, 1]} : vector<32x32xf32> to vector<8x32xf32>
    %cst_64 = arith.constant dense<0.000000e+00> : vector<16x32xf32>
    %209 = tpu.matmul %207, %208, %cst_64 {dimension_numbers = #tpu.dot_dimension_numbers<[1], [0], [0], [1], [0, 0, 1, 1], [], []>} : vector<16x8xf32>, vector<8x32xf32>, vector<16x32xf32> -> vector<16x32xf32>
    %210 = vector.extract_strided_slice %193 {offsets = [0, 8], sizes = [16, 8], strides = [1, 1]} : vector<16x32xf32> to vector<16x8xf32>
    %211 = vector.extract_strided_slice %194 {offsets = [0, 8], sizes = [8, 8], strides = [1, 1]} : vector<8x32xf32> to vector<8x8xf32>
    %212 = tpu.transpose %211, [1, 0] : vector<8x8xf32> -> vector<8x8xf32>
    %cst_65 = arith.constant dense<0.000000e+00> : vector<16x8xf32>
    %213 = tpu.matmul %210, %212, %cst_65 {dimension_numbers = #tpu.dot_dimension_numbers<[1], [0], [0], [1], [0, 0, 1, 1], [], []>} : vector<16x8xf32>, vector<8x8xf32>, vector<16x8xf32> -> vector<16x8xf32>
    %cst_66 = arith.constant dense<0xFF800000> : vector<16xf32>
    %214 = vector.multi_reduction <maximumf>, %213, %cst_66 [1] : vector<16x8xf32> to vector<16xf32>
    %215 = vector.shape_cast %214 : vector<16xf32> to vector<16x1xf32>
    %216 = vector.broadcast %215 : vector<16x1xf32> to vector<16x8xf32>
    %217 = arith.subf %213, %216 : vector<16x8xf32>
    %218 = math.exp %217 : vector<16x8xf32>
    %cst_67 = arith.constant dense<0.000000e+00> : vector<16xf32>
    %219 = vector.multi_reduction <add>, %218, %cst_67 [1] : vector<16x8xf32> to vector<16xf32>
    %220 = vector.shape_cast %219 : vector<16xf32> to vector<16x1xf32>
    %221 = vector.broadcast %220 : vector<16x1xf32> to vector<16x8xf32>
    %222 = arith.divf %218, %221 : vector<16x8xf32>
    %223 = vector.extract_strided_slice %48 {offsets = [16, 0], sizes = [8, 32], strides = [1, 1]} : vector<32x32xf32> to vector<8x32xf32>
    %cst_68 = arith.constant dense<0.000000e+00> : vector<16x32xf32>
    %224 = tpu.matmul %222, %223, %cst_68 {dimension_numbers = #tpu.dot_dimension_numbers<[1], [0], [0], [1], [0, 0, 1, 1], [], []>} : vector<16x8xf32>, vector<8x32xf32>, vector<16x32xf32> -> vector<16x32xf32>
    %225 = arith.addf %209, %224 : vector<16x32xf32>
    %226 = vector.extract_strided_slice %193 {offsets = [0, 16], sizes = [16, 8], strides = [1, 1]} : vector<16x32xf32> to vector<16x8xf32>
    %227 = vector.extract_strided_slice %194 {offsets = [0, 16], sizes = [8, 8], strides = [1, 1]} : vector<8x32xf32> to vector<8x8xf32>
    %228 = tpu.transpose %227, [1, 0] : vector<8x8xf32> -> vector<8x8xf32>
    %cst_69 = arith.constant dense<0.000000e+00> : vector<16x8xf32>
    %229 = tpu.matmul %226, %228, %cst_69 {dimension_numbers = #tpu.dot_dimension_numbers<[1], [0], [0], [1], [0, 0, 1, 1], [], []>} : vector<16x8xf32>, vector<8x8xf32>, vector<16x8xf32> -> vector<16x8xf32>
    %cst_70 = arith.constant dense<0xFF800000> : vector<16xf32>
    %230 = vector.multi_reduction <maximumf>, %229, %cst_70 [1] : vector<16x8xf32> to vector<16xf32>
    %231 = vector.shape_cast %230 : vector<16xf32> to vector<16x1xf32>
    %232 = vector.broadcast %231 : vector<16x1xf32> to vector<16x8xf32>
    %233 = arith.subf %229, %232 : vector<16x8xf32>
    %234 = math.exp %233 : vector<16x8xf32>
    %cst_71 = arith.constant dense<0.000000e+00> : vector<16xf32>
    %235 = vector.multi_reduction <add>, %234, %cst_71 [1] : vector<16x8xf32> to vector<16xf32>
    %236 = vector.shape_cast %235 : vector<16xf32> to vector<16x1xf32>
    %237 = vector.broadcast %236 : vector<16x1xf32> to vector<16x8xf32>
    %238 = arith.divf %234, %237 : vector<16x8xf32>
    %239 = vector.extract_strided_slice %55 {offsets = [16, 0], sizes = [8, 32], strides = [1, 1]} : vector<32x32xf32> to vector<8x32xf32>
    %cst_72 = arith.constant dense<0.000000e+00> : vector<16x32xf32>
    %240 = tpu.matmul %238, %239, %cst_72 {dimension_numbers = #tpu.dot_dimension_numbers<[1], [0], [0], [1], [0, 0, 1, 1], [], []>} : vector<16x8xf32>, vector<8x32xf32>, vector<16x32xf32> -> vector<16x32xf32>
    %241 = arith.addf %225, %240 : vector<16x32xf32>
    %242 = vector.extract_strided_slice %193 {offsets = [0, 24], sizes = [16, 8], strides = [1, 1]} : vector<16x32xf32> to vector<16x8xf32>
    %243 = vector.extract_strided_slice %194 {offsets = [0, 24], sizes = [8, 8], strides = [1, 1]} : vector<8x32xf32> to vector<8x8xf32>
    %244 = tpu.transpose %243, [1, 0] : vector<8x8xf32> -> vector<8x8xf32>
    %cst_73 = arith.constant dense<0.000000e+00> : vector<16x8xf32>
    %245 = tpu.matmul %242, %244, %cst_73 {dimension_numbers = #tpu.dot_dimension_numbers<[1], [0], [0], [1], [0, 0, 1, 1], [], []>} : vector<16x8xf32>, vector<8x8xf32>, vector<16x8xf32> -> vector<16x8xf32>
    %cst_74 = arith.constant dense<0xFF800000> : vector<16xf32>
    %246 = vector.multi_reduction <maximumf>, %245, %cst_74 [1] : vector<16x8xf32> to vector<16xf32>
    %247 = vector.shape_cast %246 : vector<16xf32> to vector<16x1xf32>
    %248 = vector.broadcast %247 : vector<16x1xf32> to vector<16x8xf32>
    %249 = arith.subf %245, %248 : vector<16x8xf32>
    %250 = math.exp %249 : vector<16x8xf32>
    %cst_75 = arith.constant dense<0.000000e+00> : vector<16xf32>
    %251 = vector.multi_reduction <add>, %250, %cst_75 [1] : vector<16x8xf32> to vector<16xf32>
    %252 = vector.shape_cast %251 : vector<16xf32> to vector<16x1xf32>
    %253 = vector.broadcast %252 : vector<16x1xf32> to vector<16x8xf32>
    %254 = arith.divf %250, %253 : vector<16x8xf32>
    %255 = vector.extract_strided_slice %62 {offsets = [16, 0], sizes = [8, 32], strides = [1, 1]} : vector<32x32xf32> to vector<8x32xf32>
    %cst_76 = arith.constant dense<0.000000e+00> : vector<16x32xf32>
    %256 = tpu.matmul %254, %255, %cst_76 {dimension_numbers = #tpu.dot_dimension_numbers<[1], [0], [0], [1], [0, 0, 1, 1], [], []>} : vector<16x8xf32>, vector<8x32xf32>, vector<16x32xf32> -> vector<16x32xf32>
    %257 = arith.addf %241, %256 : vector<16x32xf32>
    %258 = vector.extract_strided_slice %29 {offsets = [48, 0], sizes = [16, 32], strides = [1, 1]} : vector<64x32xf32> to vector<16x32xf32>
    %259 = vector.extract_strided_slice %31 {offsets = [24, 0], sizes = [8, 32], strides = [1, 1]} : vector<32x32xf32> to vector<8x32xf32>
    %260 = vector.extract_strided_slice %258 {offsets = [0, 0], sizes = [16, 8], strides = [1, 1]} : vector<16x32xf32> to vector<16x8xf32>
    %261 = vector.extract_strided_slice %259 {offsets = [0, 0], sizes = [8, 8], strides = [1, 1]} : vector<8x32xf32> to vector<8x8xf32>
    %262 = tpu.transpose %261, [1, 0] : vector<8x8xf32> -> vector<8x8xf32>
    %cst_77 = arith.constant dense<0.000000e+00> : vector<16x8xf32>
    %263 = tpu.matmul %260, %262, %cst_77 {dimension_numbers = #tpu.dot_dimension_numbers<[1], [0], [0], [1], [0, 0, 1, 1], [], []>} : vector<16x8xf32>, vector<8x8xf32>, vector<16x8xf32> -> vector<16x8xf32>
    %cst_78 = arith.constant dense<0xFF800000> : vector<16xf32>
    %264 = vector.multi_reduction <maximumf>, %263, %cst_78 [1] : vector<16x8xf32> to vector<16xf32>
    %265 = vector.shape_cast %264 : vector<16xf32> to vector<16x1xf32>
    %266 = vector.broadcast %265 : vector<16x1xf32> to vector<16x8xf32>
    %267 = arith.subf %263, %266 : vector<16x8xf32>
    %268 = math.exp %267 : vector<16x8xf32>
    %cst_79 = arith.constant dense<0.000000e+00> : vector<16xf32>
    %269 = vector.multi_reduction <add>, %268, %cst_79 [1] : vector<16x8xf32> to vector<16xf32>
    %270 = vector.shape_cast %269 : vector<16xf32> to vector<16x1xf32>
    %271 = vector.broadcast %270 : vector<16x1xf32> to vector<16x8xf32>
    %272 = arith.divf %268, %271 : vector<16x8xf32>
    %273 = vector.extract_strided_slice %41 {offsets = [24, 0], sizes = [8, 32], strides = [1, 1]} : vector<32x32xf32> to vector<8x32xf32>
    %cst_80 = arith.constant dense<0.000000e+00> : vector<16x32xf32>
    %274 = tpu.matmul %272, %273, %cst_80 {dimension_numbers = #tpu.dot_dimension_numbers<[1], [0], [0], [1], [0, 0, 1, 1], [], []>} : vector<16x8xf32>, vector<8x32xf32>, vector<16x32xf32> -> vector<16x32xf32>
    %275 = vector.extract_strided_slice %258 {offsets = [0, 8], sizes = [16, 8], strides = [1, 1]} : vector<16x32xf32> to vector<16x8xf32>
    %276 = vector.extract_strided_slice %259 {offsets = [0, 8], sizes = [8, 8], strides = [1, 1]} : vector<8x32xf32> to vector<8x8xf32>
    %277 = tpu.transpose %276, [1, 0] : vector<8x8xf32> -> vector<8x8xf32>
    %cst_81 = arith.constant dense<0.000000e+00> : vector<16x8xf32>
    %278 = tpu.matmul %275, %277, %cst_81 {dimension_numbers = #tpu.dot_dimension_numbers<[1], [0], [0], [1], [0, 0, 1, 1], [], []>} : vector<16x8xf32>, vector<8x8xf32>, vector<16x8xf32> -> vector<16x8xf32>
    %cst_82 = arith.constant dense<0xFF800000> : vector<16xf32>
    %279 = vector.multi_reduction <maximumf>, %278, %cst_82 [1] : vector<16x8xf32> to vector<16xf32>
    %280 = vector.shape_cast %279 : vector<16xf32> to vector<16x1xf32>
    %281 = vector.broadcast %280 : vector<16x1xf32> to vector<16x8xf32>
    %282 = arith.subf %278, %281 : vector<16x8xf32>
    %283 = math.exp %282 : vector<16x8xf32>
    %cst_83 = arith.constant dense<0.000000e+00> : vector<16xf32>
    %284 = vector.multi_reduction <add>, %283, %cst_83 [1] : vector<16x8xf32> to vector<16xf32>
    %285 = vector.shape_cast %284 : vector<16xf32> to vector<16x1xf32>
    %286 = vector.broadcast %285 : vector<16x1xf32> to vector<16x8xf32>
    %287 = arith.divf %283, %286 : vector<16x8xf32>
    %288 = vector.extract_strided_slice %48 {offsets = [24, 0], sizes = [8, 32], strides = [1, 1]} : vector<32x32xf32> to vector<8x32xf32>
    %cst_84 = arith.constant dense<0.000000e+00> : vector<16x32xf32>
    %289 = tpu.matmul %287, %288, %cst_84 {dimension_numbers = #tpu.dot_dimension_numbers<[1], [0], [0], [1], [0, 0, 1, 1], [], []>} : vector<16x8xf32>, vector<8x32xf32>, vector<16x32xf32> -> vector<16x32xf32>
    %290 = arith.addf %274, %289 : vector<16x32xf32>
    %291 = vector.extract_strided_slice %258 {offsets = [0, 16], sizes = [16, 8], strides = [1, 1]} : vector<16x32xf32> to vector<16x8xf32>
    %292 = vector.extract_strided_slice %259 {offsets = [0, 16], sizes = [8, 8], strides = [1, 1]} : vector<8x32xf32> to vector<8x8xf32>
    %293 = tpu.transpose %292, [1, 0] : vector<8x8xf32> -> vector<8x8xf32>
    %cst_85 = arith.constant dense<0.000000e+00> : vector<16x8xf32>
    %294 = tpu.matmul %291, %293, %cst_85 {dimension_numbers = #tpu.dot_dimension_numbers<[1], [0], [0], [1], [0, 0, 1, 1], [], []>} : vector<16x8xf32>, vector<8x8xf32>, vector<16x8xf32> -> vector<16x8xf32>
    %cst_86 = arith.constant dense<0xFF800000> : vector<16xf32>
    %295 = vector.multi_reduction <maximumf>, %294, %cst_86 [1] : vector<16x8xf32> to vector<16xf32>
    %296 = vector.shape_cast %295 : vector<16xf32> to vector<16x1xf32>
    %297 = vector.broadcast %296 : vector<16x1xf32> to vector<16x8xf32>
    %298 = arith.subf %294, %297 : vector<16x8xf32>
    %299 = math.exp %298 : vector<16x8xf32>
    %cst_87 = arith.constant dense<0.000000e+00> : vector<16xf32>
    %300 = vector.multi_reduction <add>, %299, %cst_87 [1] : vector<16x8xf32> to vector<16xf32>
    %301 = vector.shape_cast %300 : vector<16xf32> to vector<16x1xf32>
    %302 = vector.broadcast %301 : vector<16x1xf32> to vector<16x8xf32>
    %303 = arith.divf %299, %302 : vector<16x8xf32>
    %304 = vector.extract_strided_slice %55 {offsets = [24, 0], sizes = [8, 32], strides = [1, 1]} : vector<32x32xf32> to vector<8x32xf32>
    %cst_88 = arith.constant dense<0.000000e+00> : vector<16x32xf32>
    %305 = tpu.matmul %303, %304, %cst_88 {dimension_numbers = #tpu.dot_dimension_numbers<[1], [0], [0], [1], [0, 0, 1, 1], [], []>} : vector<16x8xf32>, vector<8x32xf32>, vector<16x32xf32> -> vector<16x32xf32>
    %306 = arith.addf %290, %305 : vector<16x32xf32>
    %307 = vector.extract_strided_slice %258 {offsets = [0, 24], sizes = [16, 8], strides = [1, 1]} : vector<16x32xf32> to vector<16x8xf32>
    %308 = vector.extract_strided_slice %259 {offsets = [0, 24], sizes = [8, 8], strides = [1, 1]} : vector<8x32xf32> to vector<8x8xf32>
    %309 = tpu.transpose %308, [1, 0] : vector<8x8xf32> -> vector<8x8xf32>
    %cst_89 = arith.constant dense<0.000000e+00> : vector<16x8xf32>
    %310 = tpu.matmul %307, %309, %cst_89 {dimension_numbers = #tpu.dot_dimension_numbers<[1], [0], [0], [1], [0, 0, 1, 1], [], []>} : vector<16x8xf32>, vector<8x8xf32>, vector<16x8xf32> -> vector<16x8xf32>
    %cst_90 = arith.constant dense<0xFF800000> : vector<16xf32>
    %311 = vector.multi_reduction <maximumf>, %310, %cst_90 [1] : vector<16x8xf32> to vector<16xf32>
    %312 = vector.shape_cast %311 : vector<16xf32> to vector<16x1xf32>
    %313 = vector.broadcast %312 : vector<16x1xf32> to vector<16x8xf32>
    %314 = arith.subf %310, %313 : vector<16x8xf32>
    %315 = math.exp %314 : vector<16x8xf32>
    %cst_91 = arith.constant dense<0.000000e+00> : vector<16xf32>
    %316 = vector.multi_reduction <add>, %315, %cst_91 [1] : vector<16x8xf32> to vector<16xf32>
    %317 = vector.shape_cast %316 : vector<16xf32> to vector<16x1xf32>
    %318 = vector.broadcast %317 : vector<16x1xf32> to vector<16x8xf32>
    %319 = arith.divf %315, %318 : vector<16x8xf32>
    %320 = vector.extract_strided_slice %62 {offsets = [24, 0], sizes = [8, 32], strides = [1, 1]} : vector<32x32xf32> to vector<8x32xf32>
    %cst_92 = arith.constant dense<0.000000e+00> : vector<16x32xf32>
    %321 = tpu.matmul %319, %320, %cst_92 {dimension_numbers = #tpu.dot_dimension_numbers<[1], [0], [0], [1], [0, 0, 1, 1], [], []>} : vector<16x8xf32>, vector<8x32xf32>, vector<16x32xf32> -> vector<16x32xf32>
    %322 = arith.addf %306, %321 : vector<16x32xf32>
    %323 = tpu.concatenate %127, %192, %257, %322 in 0 : vector<16x32xf32>, vector<16x32xf32>, vector<16x32xf32>, vector<16x32xf32> -> vector<64x32xf32>
    %c0_93 = arith.constant 0 : index
    %c0_94 = arith.constant 0 : index
    %324 = vector.load %arg9[%c0_93, %c0_94] : memref<32x32xf32, #tpu.memory_space<vmem>>, vector<32x32xf32>
    %cst_95 = arith.constant dense<0.000000e+00> : vector<64x32xf32>
    %325 = tpu.matmul %323, %324, %cst_95 {dimension_numbers = #tpu.dot_dimension_numbers<[1], [0], [0], [1], [0, 0, 1, 1], [], []>} : vector<64x32xf32>, vector<32x32xf32>, vector<64x32xf32> -> vector<64x32xf32>
    %c0_96 = arith.constant 0 : index
    %c0_97 = arith.constant 0 : index
    %326 = vector.load %arg10[%c0_96, %c0_97] : memref<1x32xf32, #tpu.memory_space<vmem>>, vector<1x32xf32>
    %327 = vector.broadcast %326 : vector<1x32xf32> to vector<64x32xf32>
    %328 = arith.addf %325, %327 : vector<64x32xf32>
    %329 = arith.addf %1, %328 : vector<64x32xf32>
    %cst_98 = arith.constant dense<0.000000e+00> : vector<64xf32>
    %330 = vector.multi_reduction <add>, %329, %cst_98 [1] : vector<64x32xf32> to vector<64xf32>
    %331 = vector.shape_cast %330 : vector<64xf32> to vector<64x1xf32>
    %cst_99 = arith.constant 3.200000e+01 : f32
    %332 = vector.broadcast %cst_99 : f32 to vector<64x1xf32>
    %333 = arith.divf %331, %332 : vector<64x1xf32>
    %334 = vector.broadcast %333 : vector<64x1xf32> to vector<64x32xf32>
    %335 = arith.subf %329, %334 : vector<64x32xf32>
    %336 = arith.mulf %335, %335 : vector<64x32xf32>
    %cst_100 = arith.constant dense<0.000000e+00> : vector<64xf32>
    %337 = vector.multi_reduction <add>, %336, %cst_100 [1] : vector<64x32xf32> to vector<64xf32>
    %338 = vector.shape_cast %337 : vector<64xf32> to vector<64x1xf32>
    %cst_101 = arith.constant 3.200000e+01 : f32
    %339 = vector.broadcast %cst_101 : f32 to vector<64x1xf32>
    %340 = arith.divf %338, %339 : vector<64x1xf32>
    %341 = vector.broadcast %333 : vector<64x1xf32> to vector<64x32xf32>
    %342 = arith.subf %329, %341 : vector<64x32xf32>
    %cst_102 = arith.constant 9.99999974E-6 : f32
    %343 = vector.broadcast %cst_102 : f32 to vector<64x1xf32>
    %344 = arith.addf %340, %343 : vector<64x1xf32>
    %345 = math.rsqrt %344 : vector<64x1xf32>
    %346 = vector.broadcast %345 : vector<64x1xf32> to vector<64x32xf32>
    %347 = arith.mulf %342, %346 : vector<64x32xf32>
    %c0_103 = arith.constant 0 : index
    %c0_104 = arith.constant 0 : index
    %348 = vector.load %arg11[%c0_103, %c0_104] : memref<1x32xf32, #tpu.memory_space<vmem>>, vector<1x32xf32>
    %349 = vector.broadcast %348 : vector<1x32xf32> to vector<64x32xf32>
    %350 = arith.mulf %347, %349 : vector<64x32xf32>
    %c0_105 = arith.constant 0 : index
    %c0_106 = arith.constant 0 : index
    %351 = vector.load %arg12[%c0_105, %c0_106] : memref<1x32xf32, #tpu.memory_space<vmem>>, vector<1x32xf32>
    %352 = vector.broadcast %351 : vector<1x32xf32> to vector<64x32xf32>
    %353 = arith.addf %350, %352 : vector<64x32xf32>
    %c0_107 = arith.constant 0 : index
    %c0_108 = arith.constant 0 : index
    %354 = vector.load %arg13[%c0_107, %c0_108] : memref<32x128xf32, #tpu.memory_space<vmem>>, vector<32x128xf32>
    %cst_109 = arith.constant dense<0.000000e+00> : vector<64x128xf32>
    %355 = tpu.matmul %353, %354, %cst_109 {dimension_numbers = #tpu.dot_dimension_numbers<[1], [0], [0], [1], [0, 0, 1, 1], [], []>} : vector<64x32xf32>, vector<32x128xf32>, vector<64x128xf32> -> vector<64x128xf32>
    %c0_110 = arith.constant 0 : index
    %c0_111 = arith.constant 0 : index
    %356 = vector.load %arg14[%c0_110, %c0_111] : memref<1x128xf32, #tpu.memory_space<vmem>>, vector<1x128xf32>
    %357 = vector.broadcast %356 : vector<1x128xf32> to vector<64x128xf32>
    %358 = arith.addf %355, %357 : vector<64x128xf32>
    %cst_112 = arith.constant 0.000000e+00 : f32
    %359 = vector.broadcast %cst_112 : f32 to vector<64x128xf32>
    %360 = arith.cmpf oge, %358, %359 : vector<64x128xf32>
    %cst_113 = arith.constant 0.00999999977 : f32
    %361 = vector.broadcast %cst_113 : f32 to vector<64x128xf32>
    %362 = arith.mulf %361, %358 : vector<64x128xf32>
    %363 = arith.select %360, %358, %362 : vector<64x128xi1>, vector<64x128xf32>
    %c0_114 = arith.constant 0 : index
    %c0_115 = arith.constant 0 : index
    %364 = vector.load %arg15[%c0_114, %c0_115] : memref<128x32xf32, #tpu.memory_space<vmem>>, vector<128x32xf32>
    %cst_116 = arith.constant dense<0.000000e+00> : vector<64x32xf32>
    %365 = tpu.matmul %363, %364, %cst_116 {dimension_numbers = #tpu.dot_dimension_numbers<[1], [0], [0], [1], [0, 0, 1, 1], [], []>} : vector<64x128xf32>, vector<128x32xf32>, vector<64x32xf32> -> vector<64x32xf32>
    %c0_117 = arith.constant 0 : index
    %c0_118 = arith.constant 0 : index
    %366 = vector.load %arg16[%c0_117, %c0_118] : memref<1x32xf32, #tpu.memory_space<vmem>>, vector<1x32xf32>
    %367 = vector.broadcast %366 : vector<1x32xf32> to vector<64x32xf32>
    %368 = arith.addf %365, %367 : vector<64x32xf32>
    %369 = arith.addf %329, %368 : vector<64x32xf32>
    %370 = vector.shape_cast %369 : vector<64x32xf32> to vector<4x16x32xf32>
    %c0_119 = arith.constant 0 : index
    %c0_120 = arith.constant 0 : index
    %c0_121 = arith.constant 0 : index
    %371 = vector.load %arg17[%c0_119, %c0_120, %c0_121] : memref<4x16x32xf32, #tpu.memory_space<vmem>>, vector<4x16x32xf32>
    tpu.vector_store %arg17[%c0_119, %c0_120, %c0_121], %370 {strides = array<i32>} : memref<4x16x32xf32, #tpu.memory_space<vmem>>, vector<4x16x32xf32>,
    return
  }
  func.func @transform_0(%arg0: i32, %arg1: i32) -> (i32, i32, i32) {
    %c0_i32 = arith.constant 0 : i32
    %c0_i32_0 = arith.constant 0 : i32
    return %arg0, %arg1, %c0_i32 : i32, i32, i32
  }
  func.func @transform_1(%arg0: i32, %arg1: i32) -> (i32, i32, i32) {
    %c0_i32 = arith.constant 0 : i32
    %c0_i32_0 = arith.constant 0 : i32
    %c0_i32_1 = arith.constant 0 : i32
    return %arg0, %c0_i32, %c0_i32_0 : i32, i32, i32
  }
  func.func @transform_2(%arg0: i32, %arg1: i32) -> (i32, i32) {
    %c0_i32 = arith.constant 0 : i32
    %c0_i32_0 = arith.constant 0 : i32
    %c0_i32_1 = arith.constant 0 : i32
    return %c0_i32, %c0_i32_0 : i32, i32
  }
  func.func @transform_3(%arg0: i32, %arg1: i32) -> (i32, i32) {
    %c0_i32 = arith.constant 0 : i32
    %c0_i32_0 = arith.constant 0 : i32
    %c0_i32_1 = arith.constant 0 : i32
    return %c0_i32, %c0_i32_0 : i32, i32
  }
  func.func @transform_4(%arg0: i32, %arg1: i32) -> (i32, i32) {
    %c0_i32 = arith.constant 0 : i32
    %c0_i32_0 = arith.constant 0 : i32
    %c0_i32_1 = arith.constant 0 : i32
    return %c0_i32, %c0_i32_0 : i32, i32
  }
  func.func @transform_5(%arg0: i32, %arg1: i32) -> (i32, i32) {
    %c0_i32 = arith.constant 0 : i32
    %c0_i32_0 = arith.constant 0 : i32
    %c0_i32_1 = arith.constant 0 : i32
    return %c0_i32, %c0_i32_0 : i32, i32
  }
  func.func @transform_6(%arg0: i32, %arg1: i32) -> (i32, i32) {
    %c0_i32 = arith.constant 0 : i32
    %c0_i32_0 = arith.constant 0 : i32
    %c0_i32_1 = arith.constant 0 : i32
    return %c0_i32, %c0_i32_0 : i32, i32
  }
  func.func @transform_7(%arg0: i32, %arg1: i32) -> (i32, i32) {
    %c0_i32 = arith.constant 0 : i32
    %c0_i32_0 = arith.constant 0 : i32
    %c0_i32_1 = arith.constant 0 : i32
    return %c0_i32, %c0_i32_0 : i32, i32
  }
  func.func @transform_8(%arg0: i32, %arg1: i32) -> (i32, i32) {
    %c0_i32 = arith.constant 0 : i32
    %c0_i32_0 = arith.constant 0 : i32
    %c0_i32_1 = arith.constant 0 : i32
    return %c0_i32, %c0_i32_0 : i32, i32
  }
  func.func @transform_9(%arg0: i32, %arg1: i32) -> (i32, i32) {
    %c0_i32 = arith.constant 0 : i32
    %c0_i32_0 = arith.constant 0 : i32
    %c0_i32_1 = arith.constant 0 : i32
    return %c0_i32, %c0_i32_0 : i32, i32
  }
  func.func @transform_10(%arg0: i32, %arg1: i32) -> (i32, i32) {
    %c0_i32 = arith.constant 0 : i32
    %c0_i32_0 = arith.constant 0 : i32
    %c0_i32_1 = arith.constant 0 : i32
    return %c0_i32, %c0_i32_0 : i32, i32
  }
  func.func @transform_11(%arg0: i32, %arg1: i32) -> (i32, i32) {
    %c0_i32 = arith.constant 0 : i32
    %c0_i32_0 = arith.constant 0 : i32
    %c0_i32_1 = arith.constant 0 : i32
    return %c0_i32, %c0_i32_0 : i32, i32
  }
  func.func @transform_12(%arg0: i32, %arg1: i32) -> (i32, i32) {
    %c0_i32 = arith.constant 0 : i32
    %c0_i32_0 = arith.constant 0 : i32
    %c0_i32_1 = arith.constant 0 : i32
    return %c0_i32, %c0_i32_0 : i32, i32
  }
  func.func @transform_13(%arg0: i32, %arg1: i32) -> (i32, i32) {
    %c0_i32 = arith.constant 0 : i32
    %c0_i32_0 = arith.constant 0 : i32
    %c0_i32_1 = arith.constant 0 : i32
    return %c0_i32, %c0_i32_0 : i32, i32
  }
  func.func @transform_14(%arg0: i32, %arg1: i32) -> (i32, i32) {
    %c0_i32 = arith.constant 0 : i32
    %c0_i32_0 = arith.constant 0 : i32
    %c0_i32_1 = arith.constant 0 : i32
    return %c0_i32, %c0_i32_0 : i32, i32
  }
  func.func @transform_15(%arg0: i32, %arg1: i32) -> (i32, i32, i32) {
    %c0_i32 = arith.constant 0 : i32
    %c0_i32_0 = arith.constant 0 : i32
    return %arg0, %arg1, %c0_i32 : i32, i32, i32
  }
}

</mosaic_0001>

<llo_original>
// kernel: tpu_custom_call.1
$region0: #{tpu_custom_call.1}
  #allocation0 [shape = 'u32[]', space=smem, size = 0x4, offset = 0x4, fixed_abs, tag = 'smem constant byte address 0x4 - core index']
  #allocation1 [shape = 'u32[144,128]{1,0:T(1,128)}', space=vmem, size = 0x12000, scoped, tag = 'internal scratch']
  %s0 = inlined_call_operand.vmem [shape: f32[4,16,32], index: 0, kind: input, shape index: {}]
  %s1 = inlined_call_operand.vmem [shape: f32[4,8,16], index: 1, kind: input, shape index: {}]
  %s2 = inlined_call_operand.vmem [shape: f32[1,32], index: 2, kind: input, shape index: {}]
  %s3 = inlined_call_operand.hbm [shape: f32[1,32], index: 3, kind: input, shape index: {}]
  %s4 = inlined_call_operand.vmem [shape: f32[32,32], index: 4, kind: input, shape index: {}]
  %s5 = inlined_call_operand.vmem [shape: f32[16,32], index: 5, kind: input, shape index: {}]
  %s6 = inlined_call_operand.hbm [shape: f32[16,32], index: 6, kind: input, shape index: {}]
  %s7 = inlined_call_operand.vmem [shape: f32[32,32], index: 7, kind: input, shape index: {}]
  %s8 = inlined_call_operand.hbm [shape: f32[1,32], index: 8, kind: input, shape index: {}]
  %s9 = inlined_call_operand.hbm [shape: f32[1,32], index: 9, kind: input, shape index: {}]
  %s10 = inlined_call_operand.hbm [shape: f32[1,32], index: 10, kind: input, shape index: {}]
  %s11 = inlined_call_operand.hbm [shape: f32[32,128], index: 11, kind: input, shape index: {}]
  %s12 = inlined_call_operand.hbm [shape: f32[1,128], index: 12, kind: input, shape index: {}]
  %s13 = inlined_call_operand.vmem [shape: f32[128,32], index: 13, kind: input, shape index: {}]
  %s14 = inlined_call_operand.vmem [shape: f32[1,32], index: 14, kind: input, shape index: {}]
  %s15 = inlined_call_operand.hbm [shape: f32[4,16,32], index: 15, kind: output, shape index: {}]
  %s16 = sld [smem:[#allocation0]]
  $region98: #{tpu_custom_call.1} parent=0
    _
  %s18 = ssub.s32 1, %s16
  %s19 = scalar_select 0, %s18, %s16
  $region1: #{tpu_custom_call.1} parent=0
    #allocation2 [shape = 'u8[512]{0}', space=vmem, size = 0x400, scoped, tag = 'input window, operand 3, single buffered']
    #allocation3 [shape = 's32[1]{0}', space=sflag, size = 0x4, scoped, tag = 'scoped memory for tpu_custom_call.1']
    #allocation4 [shape = 's32[1]{0}', space=sflag, size = 0x4, scoped, tag = 'scoped memory for tpu_custom_call.1']
    #allocation5 [shape = 'u8[8192]{0}', space=vmem, size = 0x2000, scoped, tag = 'input window, operand 6, single buffered']
    #allocation6 [shape = 's32[1]{0}', space=sflag, size = 0x4, scoped, tag = 'scoped memory for tpu_custom_call.1']
    #allocation7 [shape = 'u8[512]{0}', space=vmem, size = 0x400, scoped, tag = 'input window, operand 8, single buffered']
    #allocation8 [shape = 'u8[512]{0}', space=vmem, size = 0x400, scoped, tag = 'input window, operand 9, single buffered']
    #allocation9 [shape = 's32[1]{0}', space=sflag, size = 0x4, scoped, tag = 'scoped memory for tpu_custom_call.1']
    #allocation10 [shape = 'u8[512]{0}', space=vmem, size = 0x400, scoped, tag = 'input window, operand 10, single buffered']
    #allocation11 [shape = 'u8[16384]{0}', space=vmem, size = 0x4000, scoped, tag = 'input window, operand 11, single buffered']
    #allocation12 [shape = 's32[1]{0}', space=sflag, size = 0x4, scoped, tag = 'scoped memory for tpu_custom_call.1']
    #allocation13 [shape = 'u8[512]{0}', space=vmem, size = 0x400, scoped, tag = 'input window, operand 12, single buffered']
    #allocation14 [shape = 'u8[32768]{0}', space=vmem, size = 0x8000, scoped, tag = 'output window, operand 0, single buffered']
    %20 = vsyncpa [#allocation3], 0
    %21 = vsyncpa [#allocation6], 0
    %22 = vsyncpa [#allocation9], 0
    %23 = vsyncpa [#allocation12], 0
    %24 = vsyncpa [#allocation4], 0
    // Predicated region
    $region2: #{tpu_custom_call.1} parent=1 // pred_check
      _
    $region3: #{tpu_custom_call.1} parent=1 // pred_check_branch
      %26 = sbr.rel (0) target = $region5
    $region4: #{tpu_custom_call.1} parent=1 // pred_region
      _
    $region5: #{tpu_custom_call.1} parent=1 // pred_fallthru
      _
    // Predicated region
    $region6: #{tpu_custom_call.1} parent=1 // pred_check
      _
    $region7: #{tpu_custom_call.1} parent=1 // pred_check_branch
      %28 = sbr.rel (0) target = $region9
    $region8: #{tpu_custom_call.1} parent=1 // pred_region
      _
    $region9: #{tpu_custom_call.1} parent=1 // pred_fallthru
      _
    // Predicated region
    $region10: #{tpu_custom_call.1} parent=1 // pred_check
      _
    $region11: #{tpu_custom_call.1} parent=1 // pred_check_branch
      %30 = sbr.rel (0) target = $region13
    $region12: #{tpu_custom_call.1} parent=1 // pred_region
      _
    $region13: #{tpu_custom_call.1} parent=1 // pred_fallthru
      _
    // Predicated region
    $region14: #{tpu_custom_call.1} parent=1 // pred_check
      _
    $region15: #{tpu_custom_call.1} parent=1 // pred_check_branch
      %32 = sbr.rel (0) target = $region17
    $region16: #{tpu_custom_call.1} parent=1 // pred_region
      %s34 = ssub.s32 16, 16
      %35 = vsyncadd [#allocation3], %s34
      %s37 = sshll.u32 [#allocation2], 4
      %s38 = int_to_ptr.vmem [resolvable:$true] %s37
      %40 = dma.hbm_to_vmem [thread:$0]  %s3, 16, %s38, [#allocation3]
    $region17: #{tpu_custom_call.1} parent=1 // pred_fallthru
      _
    // Predicated region
    $region18: #{tpu_custom_call.1} parent=1 // pred_check
      _
    $region19: #{tpu_custom_call.1} parent=1 // pred_check_branch
      %42 = sbr.rel (0) target = $region21
    $region20: #{tpu_custom_call.1} parent=1 // pred_region
      _
    $region21: #{tpu_custom_call.1} parent=1 // pred_fallthru
      _
    // Predicated region
    $region22: #{tpu_custom_call.1} parent=1 // pred_check
      _
    $region23: #{tpu_custom_call.1} parent=1 // pred_check_branch
      %44 = sbr.rel (0) target = $region25
    $region24: #{tpu_custom_call.1} parent=1 // pred_region
      _
    $region25: #{tpu_custom_call.1} parent=1 // pred_fallthru
      _
    // Predicated region
    $region26: #{tpu_custom_call.1} parent=1 // pred_check
      _
    $region27: #{tpu_custom_call.1} parent=1 // pred_check_branch
      %46 = sbr.rel (0) target = $region29
    $region28: #{tpu_custom_call.1} parent=1 // pred_region
      %s48 = ssub.s32 256, 256
      %49 = vsyncadd [#allocation6], %s48
      %s50 = sshll.u32 [#allocation5], 4
      %s51 = int_to_ptr.vmem [resolvable:$true] %s50
      %56 = dma.hbm_to_vmem [thread:$0]  %s6, 256, %s51, [#allocation6], 128, 128, 8
    $region29: #{tpu_custom_call.1} parent=1 // pred_fallthru
      _
    // Predicated region
    $region30: #{tpu_custom_call.1} parent=1 // pred_check
      _
    $region31: #{tpu_custom_call.1} parent=1 // pred_check_branch
      %58 = sbr.rel (0) target = $region33
    $region32: #{tpu_custom_call.1} parent=1 // pred_region
      _
    $region33: #{tpu_custom_call.1} parent=1 // pred_fallthru
      _
    // Predicated region
    $region34: #{tpu_custom_call.1} parent=1 // pred_check
      _
    $region35: #{tpu_custom_call.1} parent=1 // pred_check_branch
      %60 = sbr.rel (0) target = $region37
    $region36: #{tpu_custom_call.1} parent=1 // pred_region
      %s62 = ssub.s32 16, 16
      %63 = vsyncadd [#allocation6], %s62
      %s65 = sshll.u32 [#allocation7], 4
      %s66 = int_to_ptr.vmem [resolvable:$true] %s65
      %68 = dma.hbm_to_vmem [thread:$0]  %s8, 16, %s66, [#allocation6]
    $region37: #{tpu_custom_call.1} parent=1 // pred_fallthru
      _
    // Predicated region
    $region38: #{tpu_custom_call.1} parent=1 // pred_check
      _
    $region39: #{tpu_custom_call.1} parent=1 // pred_check_branch
      %70 = sbr.rel (0) target = $region41
    $region40: #{tpu_custom_call.1} parent=1 // pred_region
      %s72 = ssub.s32 16, 16
      %73 = vsyncadd [#allocation9], %s72
      %s75 = sshll.u32 [#allocation8], 4
      %s76 = int_to_ptr.vmem [resolvable:$true] %s75
      %78 = dma.hbm_to_vmem [thread:$0]  %s9, 16, %s76, [#allocation9]
    $region41: #{tpu_custom_call.1} parent=1 // pred_fallthru
      _
    // Predicated region
    $region42: #{tpu_custom_call.1} parent=1 // pred_check
      _
    $region43: #{tpu_custom_call.1} parent=1 // pred_check_branch
      %80 = sbr.rel (0) target = $region45
    $region44: #{tpu_custom_call.1} parent=1 // pred_region
      %s82 = ssub.s32 16, 16
      %83 = vsyncadd [#allocation9], %s82
      %s85 = sshll.u32 [#allocation10], 4
      %s86 = int_to_ptr.vmem [resolvable:$true] %s85
      %88 = dma.hbm_to_vmem [thread:$0]  %s10, 16, %s86, [#allocation9]
    $region45: #{tpu_custom_call.1} parent=1 // pred_fallthru
      _
    // Predicated region
    $region46: #{tpu_custom_call.1} parent=1 // pred_check
      _
    $region47: #{tpu_custom_call.1} parent=1 // pred_check_branch
      %90 = sbr.rel (0) target = $region49
    $region48: #{tpu_custom_call.1} parent=1 // pred_region
      %s92 = ssub.s32 512, 512
      %93 = vsyncadd [#allocation12], %s92
      %s94 = sshll.u32 [#allocation11], 4
      %s95 = int_to_ptr.vmem [resolvable:$true] %s94
      %100 = dma.hbm_to_vmem [thread:$0]  %s11, 512, %s95, [#allocation12], 128, 128, 8
    $region49: #{tpu_custom_call.1} parent=1 // pred_fallthru
      _
    // Predicated region
    $region50: #{tpu_custom_call.1} parent=1 // pred_check
      _
    $region51: #{tpu_custom_call.1} parent=1 // pred_check_branch
      %102 = sbr.rel (0) target = $region53
    $region52: #{tpu_custom_call.1} parent=1 // pred_region
      %s104 = ssub.s32 16, 16
      %105 = vsyncadd [#allocation12], %s104
      %s107 = sshll.u32 [#allocation13], 4
      %s108 = int_to_ptr.vmem [resolvable:$true] %s107
      %110 = dma.hbm_to_vmem [thread:$0]  %s12, 16, %s108, [#allocation12]
    $region53: #{tpu_custom_call.1} parent=1 // pred_fallthru
      _
    // Predicated region
    $region54: #{tpu_custom_call.1} parent=1 // pred_check
      _
    $region55: #{tpu_custom_call.1} parent=1 // pred_check_branch
      %112 = sbr.rel (0) target = $region57
    $region56: #{tpu_custom_call.1} parent=1 // pred_region
      _
    $region57: #{tpu_custom_call.1} parent=1 // pred_fallthru
      _
    // Predicated region
    $region58: #{tpu_custom_call.1} parent=1 // pred_check
      _
    $region59: #{tpu_custom_call.1} parent=1 // pred_check_branch
      %114 = sbr.rel (0) target = $region61
    $region60: #{tpu_custom_call.1} parent=1 // pred_region
      _
    $region61: #{tpu_custom_call.1} parent=1 // pred_fallthru
      _
    // Predicated region
    $region62: #{tpu_custom_call.1} parent=1 // pred_check
      _
    $region63: #{tpu_custom_call.1} parent=1 // pred_check_branch
      %116 = sbr.rel (0) target = $region65
    $region64: #{tpu_custom_call.1} parent=1 // pred_region
      %117 = dma.done [#allocation3], 16
    $region65: #{tpu_custom_call.1} parent=1 // pred_fallthru
      _
    // Predicated region
    $region66: #{tpu_custom_call.1} parent=1 // pred_check
      _
    $region67: #{tpu_custom_call.1} parent=1 // pred_check_branch
      %119 = sbr.rel (0) target = $region69
    $region68: #{tpu_custom_call.1} parent=1 // pred_region
      %120 = dma.done [#allocation6], 256
    $region69: #{tpu_custom_call.1} parent=1 // pred_fallthru
      _
    // Predicated region
    $region70: #{tpu_custom_call.1} parent=1 // pred_check
      _
    $region71: #{tpu_custom_call.1} parent=1 // pred_check_branch
      %122 = sbr.rel (0) target = $region73
    $region72: #{tpu_custom_call.1} parent=1 // pred_region
      %123 = dma.done [#allocation6], 16
    $region73: #{tpu_custom_call.1} parent=1 // pred_fallthru
      _
    // Predicated region
    $region74: #{tpu_custom_call.1} parent=1 // pred_check
      _
    $region75: #{tpu_custom_call.1} parent=1 // pred_check_branch
      %125 = sbr.rel (0) target = $region77
    $region76: #{tpu_custom_call.1} parent=1 // pred_region
      %126 = dma.done [#allocation9], 16
    $region77: #{tpu_custom_call.1} parent=1 // pred_fallthru
      _
    // Predicated region
    $region78: #{tpu_custom_call.1} parent=1 // pred_check
      _
    $region79: #{tpu_custom_call.1} parent=1 // pred_check_branch
      %128 = sbr.rel (0) target = $region81
    $region80: #{tpu_custom_call.1} parent=1 // pred_region
      %129 = dma.done [#allocation9], 16
    $region81: #{tpu_custom_call.1} parent=1 // pred_fallthru
      _
    // Predicated region
    $region82: #{tpu_custom_call.1} parent=1 // pred_check
      _
    $region83: #{tpu_custom_call.1} parent=1 // pred_check_branch
      %131 = sbr.rel (0) target = $region85
    $region84: #{tpu_custom_call.1} parent=1 // pred_region
      %132 = dma.done [#allocation12], 512
    $region85: #{tpu_custom_call.1} parent=1 // pred_fallthru
      _
    // Predicated region
    $region86: #{tpu_custom_call.1} parent=1 // pred_check
      _
    $region87: #{tpu_custom_call.1} parent=1 // pred_check_branch
      %134 = sbr.rel (0) target = $region89
    $region88: #{tpu_custom_call.1} parent=1 // pred_region
      %135 = dma.done [#allocation12], 16
    $region89: #{tpu_custom_call.1} parent=1 // pred_fallthru
      _
    %v136 = vld [vmem:[%s0] sm:$0xff]
    %v137 = vld [vmem:[%s0 + $0x8] sm:$0xff]
    %v138 = vld [vmem:[%s0 + $0x10] sm:$0xff]
    %v139 = vld [vmem:[%s0 + $0x18] sm:$0xff]
    %v140 = vld [vmem:[%s0 + $0x20] sm:$0xff]
    %v141 = vld [vmem:[%s0 + $0x28] sm:$0xff]
    %v142 = vld [vmem:[%s0 + $0x30] sm:$0xff]
    %v143 = vld [vmem:[%s0 + $0x38] sm:$0xff]
    %v144 = vld [vmem:[%s1] sm:$0xff]
    %v145 = vld [vmem:[%s1 + $0x8] sm:$0xff]
    %v146 = vld [vmem:[%s1 + $0x10] sm:$0xff]
    %v147 = vld [vmem:[%s1 + $0x18] sm:$0xff]
    %vm148 = vcmask 261120
    %v149 = vsel %vm148, %v136, 0.0
    %150 = vadd.xlane.f32.xlu0 %v149
    %v151 = vpop.xlane.xlu0 %150
    %v152 = vsel %vm148, %v137, 0.0
    %153 = vadd.xlane.f32.xlu0 %v152
    %v154 = vpop.xlane.xlu0 %153
    %v155 = vsel %vm148, %v138, 0.0
    %156 = vadd.xlane.f32.xlu0 %v155
    %v157 = vpop.xlane.xlu0 %156
    %v158 = vsel %vm148, %v139, 0.0
    %159 = vadd.xlane.f32.xlu0 %v158
    %v160 = vpop.xlane.xlu0 %159
    %v161 = vsel %vm148, %v140, 0.0
    %162 = vadd.xlane.f32.xlu0 %v161
    %v163 = vpop.xlane.xlu0 %162
    %v164 = vsel %vm148, %v141, 0.0
    %165 = vadd.xlane.f32.xlu0 %v164
    %v166 = vpop.xlane.xlu0 %165
    %v167 = vsel %vm148, %v142, 0.0
    %168 = vadd.xlane.f32.xlu0 %v167
    %v169 = vpop.xlane.xlu0 %168
    %v170 = vsel %vm148, %v143, 0.0
    %171 = vadd.xlane.f32.xlu0 %v170
    %v172 = vpop.xlane.xlu0 %171
    %v173 = vrcp.pop 32.0
    %v174 = vmul.f32 %v151, %v173
    %v175 = vmul.f32 %v154, %v173
    %v176 = vmul.f32 %v157, %v173
    %v177 = vmul.f32 %v160, %v173
    %v178 = vmul.f32 %v163, %v173
    %v179 = vmul.f32 %v166, %v173
    %v180 = vmul.f32 %v169, %v173
    %v181 = vmul.f32 %v172, %v173
    %v182 = vsub.f32 %v136, %v174
    %v183 = vsub.f32 %v137, %v175
    %v184 = vsub.f32 %v138, %v176
    %v185 = vsub.f32 %v139, %v177
    %v186 = vsub.f32 %v140, %v178
    %v187 = vsub.f32 %v141, %v179
    %v188 = vsub.f32 %v142, %v180
    %v189 = vsub.f32 %v143, %v181
    %v190 = vmul.f32 %v182, %v182
    %v191 = vmul.f32 %v183, %v183
    %v192 = vmul.f32 %v184, %v184
    %v193 = vmul.f32 %v185, %v185
    %v194 = vmul.f32 %v186, %v186
    %v195 = vmul.f32 %v187, %v187
    %v196 = vmul.f32 %v188, %v188
    %v197 = vmul.f32 %v189, %v189
    %v198 = vsel %vm148, %v190, 0.0
    %199 = vadd.xlane.f32.xlu0 %v198
    %v200 = vpop.xlane.xlu0 %199
    %v201 = vsel %vm148, %v191, 0.0
    %202 = vadd.xlane.f32.xlu0 %v201
    %v203 = vpop.xlane.xlu0 %202
    %v204 = vsel %vm148, %v192, 0.0
    %205 = vadd.xlane.f32.xlu0 %v204
    %v206 = vpop.xlane.xlu0 %205
    %v207 = vsel %vm148, %v193, 0.0
    %208 = vadd.xlane.f32.xlu0 %v207
    %v209 = vpop.xlane.xlu0 %208
    %v210 = vsel %vm148, %v194, 0.0
    %211 = vadd.xlane.f32.xlu0 %v210
    %v212 = vpop.xlane.xlu0 %211
    %v213 = vsel %vm148, %v195, 0.0
    %214 = vadd.xlane.f32.xlu0 %v213
    %v215 = vpop.xlane.xlu0 %214
    %v216 = vsel %vm148, %v196, 0.0
    %217 = vadd.xlane.f32.xlu0 %v216
    %v218 = vpop.xlane.xlu0 %217
    %v219 = vsel %vm148, %v197, 0.0
    %220 = vadd.xlane.f32.xlu0 %v219
    %v221 = vpop.xlane.xlu0 %220
    %v222 = vmul.f32 %v200, %v173
    %v223 = vmul.f32 %v203, %v173
    %v224 = vmul.f32 %v206, %v173
    %v225 = vmul.f32 %v209, %v173
    %v226 = vmul.f32 %v212, %v173
    %v227 = vmul.f32 %v215, %v173
    %v228 = vmul.f32 %v218, %v173
    %v229 = vmul.f32 %v221, %v173
    %v230 = vadd.f32 %v222, 1e-05
    %v231 = vadd.f32 %v223, 1e-05
    %v232 = vadd.f32 %v224, 1e-05
    %v233 = vadd.f32 %v225, 1e-05
    %v234 = vadd.f32 %v226, 1e-05
    %v235 = vadd.f32 %v227, 1e-05
    %v236 = vadd.f32 %v228, 1e-05
    %v237 = vadd.f32 %v229, 1e-05
    %v238 = vrsqrt.pop %v230
    %v239 = vrsqrt.pop %v231
    %v240 = vrsqrt.pop %v232
    %v241 = vrsqrt.pop %v233
    %v242 = vrsqrt.pop %v234
    %v243 = vrsqrt.pop %v235
    %v244 = vrsqrt.pop %v236
    %v245 = vrsqrt.pop %v237
    %v246 = vmul.f32 %v182, %v238
    %v247 = vmul.f32 %v183, %v239
    %v248 = vmul.f32 %v184, %v240
    %v249 = vmul.f32 %v185, %v241
    %v250 = vmul.f32 %v186, %v242
    %v251 = vmul.f32 %v187, %v243
    %v252 = vmul.f32 %v188, %v244
    %v253 = vmul.f32 %v189, %v245
    %v254 = vld [vmem:[%s2] sm:$0x1]
    %v256 = vlaneseq
    %v257 = vshrl.u32 %v256, 7
    %v258 = vsub.s32 0, %v257
    %v259 = vrot.slane %v254, %v258
    %v261 = vmul.f32 %v246, %v259
    %v262 = vmul.f32 %v247, %v259
    %v263 = vmul.f32 %v248, %v259
    %v264 = vmul.f32 %v249, %v259
    %v265 = vmul.f32 %v250, %v259
    %v266 = vmul.f32 %v251, %v259
    %v267 = vmul.f32 %v252, %v259
    %v268 = vmul.f32 %v253, %v259
    %v269 = vld [vmem:[#allocation2] sm:$0x1]
    %v271 = vlaneseq
    %v272 = vshrl.u32 %v271, 7
    %v273 = vsub.s32 0, %v272
    %v274 = vrot.slane %v269, %v273
    %v276 = vadd.f32 %v261, %v274
    %v277 = vadd.f32 %v262, %v274
    %v278 = vadd.f32 %v263, %v274
    %v279 = vadd.f32 %v264, %v274
    %v280 = vadd.f32 %v265, %v274
    %v281 = vadd.f32 %v266, %v274
    %v282 = vadd.f32 %v267, %v274
    %v283 = vadd.f32 %v268, %v274
    %v284 = vld [vmem:[%s4] sm:$0xff]
    %v285 = vld [vmem:[%s4 + $0x8] sm:$0xff]
    %v286 = vld [vmem:[%s4 + $0x10] sm:$0xff]
    %v287 = vld [vmem:[%s4 + $0x18] sm:$0xff]
    %v289 = vsel %vm148, %v276, 0
    %v292 = vsel %vm148, %v277, 0
    %v295 = vsel %vm148, %v278, 0
    %v298 = vsel %vm148, %v279, 0
    %v301 = vsel %vm148, %v280, 0
    %v304 = vsel %vm148, %v281, 0
    %v307 = vsel %vm148, %v282, 0
    %v310 = vsel %vm148, %v283, 0
    %312 = vmatprep.subr.mxu0 0.0
    %313 = vmatpush1.msra.mxu0 %v284
    %314 = vmatprep.subr.mxu0 0.0
    %315 = vmatpush1.msra.mxu0 %v285
    %316 = vmatprep.subr.mxu0 0.0
    %317 = vmatpush1.msra.mxu0 %v286
    %318 = vmatprep.subr.mxu0 0.0
    %319 = vmatpush1.msra.mxu0 %v287
    %320 = vmatprep.subr.mxu0 0.0
    %321 = vmatpush1.msra.mxu0 0.0
    %322 = vmatprep.subr.mxu0 0.0
    %323 = vmatpush1.msra.mxu0 0.0
    %324 = vmatprep.subr.mxu0 0.0
    %325 = vmatpush1.msra.mxu0 0.0
    %326 = vmatprep.subr.mxu0 0.0
    %327 = vmatpush1.msra.mxu0 0.0
    %328 = vmatprep.subr.mxu0 0.0
    %329 = vmatpush1.msra.mxu0 0.0
    %330 = vmatprep.subr.mxu0 0.0
    %331 = vmatpush1.msra.mxu0 0.0
    %332 = vmatprep.subr.mxu0 0.0
    %333 = vmatpush1.msra.mxu0 0.0
    %334 = vmatprep.subr.mxu0 0.0
    %335 = vmatpush1.msra.mxu0 0.0
    %336 = vmatprep.subr.mxu0 0.0
    %337 = vmatpush1.msra.mxu0 0.0
    %338 = vmatprep.subr.mxu0 0.0
    %339 = vmatpush1.msra.mxu0 0.0
    %340 = vmatprep.subr.mxu0 0.0
    %341 = vmatpush1.msra.mxu0 0.0
    %342 = vmatprep.subr.mxu0 0.0
    %343 = vmatpush1.msra.mxu0 0.0
    %344 = vmatprep.subr.mxu0 0.0
    %345 = vmatpush1.msra.mxu0 0.0
    %346 = vmatprep.subr.mxu0 0.0
    %347 = vmatpush1.msra.mxu0 0.0
    %348 = vmatprep.subr.mxu0 0.0
    %349 = vmatpush1.msra.mxu0 0.0
    %350 = vmatprep.subr.mxu0 0.0
    %351 = vmatpush1.msra.mxu0 0.0
    %352 = vmatprep.subr.mxu0 0.0
    %353 = vmatpush1.msra.mxu0 0.0
    %354 = vmatprep.subr.mxu0 0.0
    %355 = vmatpush1.msra.mxu0 0.0
    %356 = vmatprep.subr.mxu0 0.0
    %357 = vmatpush1.msra.mxu0 0.0
    %358 = vmatprep.subr.mxu0 0.0
    %359 = vmatpush1.msra.mxu0 0.0
    %360 = vmatprep.subr.mxu0 0.0
    %361 = vmatpush1.msra.mxu0 0.0
    %362 = vmatprep.subr.mxu0 0.0
    %363 = vmatpush1.msra.mxu0 0.0
    %364 = vmatprep.subr.mxu0 0.0
    %365 = vmatpush1.msra.mxu0 0.0
    %366 = vmatprep.subr.mxu0 0.0
    %367 = vmatpush1.msra.mxu0 0.0
    %368 = vmatprep.subr.mxu0 0.0
    %369 = vmatpush1.msra.mxu0 0.0
    %370 = vmatprep.subr.mxu0 0.0
    %371 = vmatpush1.msra.mxu0 0.0
    %372 = vmatprep.subr.mxu0 0.0
    %373 = vmatpush1.msra.mxu0 0.0
    %374 = vmatprep.subr.mxu0 0.0
    %375 = vmatpush1.msra.mxu0 0.0
    %376 = vmatprep.mubr.f32.mxu0 0.0
    %377 = vmatmul.mubr.f32.gmra.mrb[0].mxu0 %v289
    %v378 = vpop.f32.mrb[0].mxu0
    %v379 = vadd.f32 0.0, %v378
    %v380 = vpop.f32.mrb[0].mxu0
    %381 = vmatprep.mubr.f32.mxu0 0.0
    %382 = vmatmul.mubr.f32.gmra.mrb[0].mxu0 %v292
    %v383 = vpop.f32.mrb[0].mxu0
    %v384 = vadd.f32 0.0, %v383
    %v385 = vpop.f32.mrb[0].mxu0
    %386 = vmatprep.mubr.f32.mxu0 0.0
    %387 = vmatmul.mubr.f32.gmra.mrb[0].mxu0 %v295
    %v388 = vpop.f32.mrb[0].mxu0
    %v389 = vadd.f32 0.0, %v388
    %v390 = vpop.f32.mrb[0].mxu0
    %391 = vmatprep.mubr.f32.mxu0 0.0
    %392 = vmatmul.mubr.f32.gmra.mrb[0].mxu0 %v298
    %v393 = vpop.f32.mrb[0].mxu0
    %v394 = vadd.f32 0.0, %v393
    %v395 = vpop.f32.mrb[0].mxu0
    %396 = vmatprep.mubr.f32.mxu0 0.0
    %397 = vmatmul.mubr.f32.gmra.mrb[0].mxu0 %v301
    %v398 = vpop.f32.mrb[0].mxu0
    %v399 = vadd.f32 0.0, %v398
    %v400 = vpop.f32.mrb[0].mxu0
    %401 = vmatprep.mubr.f32.mxu0 0.0
    %402 = vmatmul.mubr.f32.gmra.mrb[0].mxu0 %v304
    %v403 = vpop.f32.mrb[0].mxu0
    %v404 = vadd.f32 0.0, %v403
    %v405 = vpop.f32.mrb[0].mxu0
    %406 = vmatprep.mubr.f32.mxu0 0.0
    %407 = vmatmul.mubr.f32.gmra.mrb[0].mxu0 %v307
    %v408 = vpop.f32.mrb[0].mxu0
    %v409 = vadd.f32 0.0, %v408
    %v410 = vpop.f32.mrb[0].mxu0
    %411 = vmatprep.mubr.f32.mxu0 0.0
    %412 = vmatmul.mubr.f32.gmra.mrb[0].mxu0 %v310
    %v413 = vpop.f32.mrb[0].mxu0
    %v414 = vadd.f32 0.0, %v413
    %v415 = vpop.f32.mrb[0].mxu0
    %416 = vdwg.mxu0
    %v417 = vld [vmem:[%s5] sm:$0xff]
    %v418 = vld [vmem:[%s5 + $0x8] sm:$0xff]
    %vm419 = vcmask 130048
    %v421 = vsel %vm419, %v144, 0
    %v424 = vsel %vm419, %v145, 0
    %v427 = vsel %vm419, %v146, 0
    %v430 = vsel %vm419, %v147, 0
    %432 = vmatprep.subr.mxu0 0.0
    %433 = vmatpush1.msra.mxu0 %v417
    %434 = vmatprep.subr.mxu0 0.0
    %435 = vmatpush1.msra.mxu0 %v418
    %436 = vmatprep.subr.mxu0 0.0
    %437 = vmatpush1.msra.mxu0 0.0
    %438 = vmatprep.subr.mxu0 0.0
    %439 = vmatpush1.msra.mxu0 0.0
    %440 = vmatprep.subr.mxu0 0.0
    %441 = vmatpush1.msra.mxu0 0.0
    %442 = vmatprep.subr.mxu0 0.0
    %443 = vmatpush1.msra.mxu0 0.0
    %444 = vmatprep.subr.mxu0 0.0
    %445 = vmatpush1.msra.mxu0 0.0
    %446 = vmatprep.subr.mxu0 0.0
    %447 = vmatpush1.msra.mxu0 0.0
    %448 = vmatprep.subr.mxu0 0.0
    %449 = vmatpush1.msra.mxu0 0.0
    %450 = vmatprep.subr.mxu0 0.0
    %451 = vmatpush1.msra.mxu0 0.0
    %452 = vmatprep.subr.mxu0 0.0
    %453 = vmatpush1.msra.mxu0 0.0
    %454 = vmatprep.subr.mxu0 0.0
    %455 = vmatpush1.msra.mxu0 0.0
    %456 = vmatprep.subr.mxu0 0.0
    %457 = vmatpush1.msra.mxu0 0.0
    %458 = vmatprep.subr.mxu0 0.0
    %459 = vmatpush1.msra.mxu0 0.0
    %460 = vmatprep.subr.mxu0 0.0
    %461 = vmatpush1.msra.mxu0 0.0
    %462 = vmatprep.subr.mxu0 0.0
    %463 = vmatpush1.msra.mxu0 0.0
    %464 = vmatprep.subr.mxu0 0.0
    %465 = vmatpush1.msra.mxu0 0.0
    %466 = vmatprep.subr.mxu0 0.0
    %467 = vmatpush1.msra.mxu0 0.0
    %468 = vmatprep.subr.mxu0 0.0
    %469 = vmatpush1.msra.mxu0 0.0
    %470 = vmatprep.subr.mxu0 0.0
    %471 = vmatpush1.msra.mxu0 0.0
    %472 = vmatprep.subr.mxu0 0.0
    %473 = vmatpush1.msra.mxu0 0.0
    %474 = vmatprep.subr.mxu0 0.0
    %475 = vmatpush1.msra.mxu0 0.0
    %476 = vmatprep.subr.mxu0 0.0
    %477 = vmatpush1.msra.mxu0 0.0
    %478 = vmatprep.subr.mxu0 0.0
    %479 = vmatpush1.msra.mxu0 0.0
    %480 = vmatprep.subr.mxu0 0.0
    %481 = vmatpush1.msra.mxu0 0.0
    %482 = vmatprep.subr.mxu0 0.0
    %483 = vmatpush1.msra.mxu0 0.0
    %484 = vmatprep.subr.mxu0 0.0
    %485 = vmatpush1.msra.mxu0 0.0
    %486 = vmatprep.subr.mxu0 0.0
    %487 = vmatpush1.msra.mxu0 0.0
    %488 = vmatprep.subr.mxu0 0.0
    %489 = vmatpush1.msra.mxu0 0.0
    %490 = vmatprep.subr.mxu0 0.0
    %491 = vmatpush1.msra.mxu0 0.0
    %492 = vmatprep.subr.mxu0 0.0
    %493 = vmatpush1.msra.mxu0 0.0
    %494 = vmatprep.subr.mxu0 0.0
    %495 = vmatpush1.msra.mxu0 0.0
    %496 = vmatprep.mubr.f32.mxu0 0.0
    %497 = vmatmul.mubr.f32.gmra.mrb[0].mxu0 %v421
    %v498 = vpop.f32.mrb[0].mxu0
    %v499 = vadd.f32 0.0, %v498
    %v500 = vpop.f32.mrb[0].mxu0
    %501 = vmatprep.mubr.f32.mxu0 0.0
    %502 = vmatmul.mubr.f32.gmra.mrb[0].mxu0 %v424
    %v503 = vpop.f32.mrb[0].mxu0
    %v504 = vadd.f32 0.0, %v503
    %v505 = vpop.f32.mrb[0].mxu0
    %506 = vmatprep.mubr.f32.mxu0 0.0
    %507 = vmatmul.mubr.f32.gmra.mrb[0].mxu0 %v427
    %v508 = vpop.f32.mrb[0].mxu0
    %v509 = vadd.f32 0.0, %v508
    %v510 = vpop.f32.mrb[0].mxu0
    %511 = vmatprep.mubr.f32.mxu0 0.0
    %512 = vmatmul.mubr.f32.gmra.mrb[0].mxu0 %v430
    %v513 = vpop.f32.mrb[0].mxu0
    %v514 = vadd.f32 0.0, %v513
    %v515 = vpop.f32.mrb[0].mxu0
    %516 = vdwg.mxu0
    %v517 = vld [vmem:[#allocation5] sm:$0xff]
    %v518 = vld [vmem:[#allocation5 + $0x8] sm:$0xff]
    %519 = vmatprep.subr.mxu0 0.0
    %520 = vmatpush1.msra.mxu0 %v517
    %521 = vmatprep.subr.mxu0 0.0
    %522 = vmatpush1.msra.mxu0 %v518
    %523 = vmatprep.subr.mxu0 0.0
    %524 = vmatpush1.msra.mxu0 0.0
    %525 = vmatprep.subr.mxu0 0.0
    %526 = vmatpush1.msra.mxu0 0.0
    %527 = vmatprep.subr.mxu0 0.0
    %528 = vmatpush1.msra.mxu0 0.0
    %529 = vmatprep.subr.mxu0 0.0
    %530 = vmatpush1.msra.mxu0 0.0
    %531 = vmatprep.subr.mxu0 0.0
    %532 = vmatpush1.msra.mxu0 0.0
    %533 = vmatprep.subr.mxu0 0.0
    %534 = vmatpush1.msra.mxu0 0.0
    %535 = vmatprep.subr.mxu0 0.0
    %536 = vmatpush1.msra.mxu0 0.0
    %537 = vmatprep.subr.mxu0 0.0
    %538 = vmatpush1.msra.mxu0 0.0
    %539 = vmatprep.subr.mxu0 0.0
    %540 = vmatpush1.msra.mxu0 0.0
    %541 = vmatprep.subr.mxu0 0.0
    %542 = vmatpush1.msra.mxu0 0.0
    %543 = vmatprep.subr.mxu0 0.0
    %544 = vmatpush1.msra.mxu0 0.0
    %545 = vmatprep.subr.mxu0 0.0
    %546 = vmatpush1.msra.mxu0 0.0
    %547 = vmatprep.subr.mxu0 0.0
    %548 = vmatpush1.msra.mxu0 0.0
    %549 = vmatprep.subr.mxu0 0.0
    %550 = vmatpush1.msra.mxu0 0.0
    %551 = vmatprep.subr.mxu0 0.0
    %552 = vmatpush1.msra.mxu0 0.0
    %553 = vmatprep.subr.mxu0 0.0
    %554 = vmatpush1.msra.mxu0 0.0
    %555 = vmatprep.subr.mxu0 0.0
    %556 = vmatpush1.msra.mxu0 0.0
    %557 = vmatprep.subr.mxu0 0.0
    %558 = vmatpush1.msra.mxu0 0.0
    %559 = vmatprep.subr.mxu0 0.0
    %560 = vmatpush1.msra.mxu0 0.0
    %561 = vmatprep.subr.mxu0 0.0
    %562 = vmatpush1.msra.mxu0 0.0
    %563 = vmatprep.subr.mxu0 0.0
    %564 = vmatpush1.msra.mxu0 0.0
    %565 = vmatprep.subr.mxu0 0.0
    %566 = vmatpush1.msra.mxu0 0.0
    %567 = vmatprep.subr.mxu0 0.0
    %568 = vmatpush1.msra.mxu0 0.0
    %569 = vmatprep.subr.mxu0 0.0
    %570 = vmatpush1.msra.mxu0 0.0
    %571 = vmatprep.subr.mxu0 0.0
    %572 = vmatpush1.msra.mxu0 0.0
    %573 = vmatprep.subr.mxu0 0.0
    %574 = vmatpush1.msra.mxu0 0.0
    %575 = vmatprep.subr.mxu0 0.0
    %576 = vmatpush1.msra.mxu0 0.0
    %577 = vmatprep.subr.mxu0 0.0
    %578 = vmatpush1.msra.mxu0 0.0
    %579 = vmatprep.subr.mxu0 0.0
    %580 = vmatpush1.msra.mxu0 0.0
    %581 = vmatprep.subr.mxu0 0.0
    %582 = vmatpush1.msra.mxu0 0.0
    %583 = vmatprep.mubr.f32.mxu0 0.0
    %584 = vmatmul.mubr.f32.gmra.mrb[0].mxu0 %v421
    %v585 = vpop.f32.mrb[0].mxu0
    %v586 = vadd.f32 0.0, %v585
    %v587 = vpop.f32.mrb[0].mxu0
    %588 = vmatprep.mubr.f32.mxu0 0.0
    %589 = vmatmul.mubr.f32.gmra.mrb[0].mxu0 %v424
    %v590 = vpop.f32.mrb[0].mxu0
    %v591 = vadd.f32 0.0, %v590
    %v592 = vpop.f32.mrb[0].mxu0
    %593 = vmatprep.mubr.f32.mxu0 0.0
    %594 = vmatmul.mubr.f32.gmra.mrb[0].mxu0 %v427
    %v595 = vpop.f32.mrb[0].mxu0
    %v596 = vadd.f32 0.0, %v595
    %v597 = vpop.f32.mrb[0].mxu0
    %598 = vmatprep.mubr.f32.mxu0 0.0
    %599 = vmatmul.mubr.f32.gmra.mrb[0].mxu0 %v430
    %v600 = vpop.f32.mrb[0].mxu0
    %v601 = vadd.f32 0.0, %v600
    %v602 = vpop.f32.mrb[0].mxu0
    %603 = vdwg.mxu0
    %v604 = vlaneseq
    %v605 = vand.u32 %v604, 127
    %vm606 = vcmp.ge.s32.totalorder %v605, 0
    %vm607 = vcmp.lt.s32.totalorder %v605, 8
    %vm608 = vmand %vm606, %vm607
    %v609 = vsel %vm608, %v586, 0.0
    %v610 = vsel %vm608, %v591, 0.0
    %v611 = vsel %vm608, %v596, 0.0
    %v612 = vsel %vm608, %v601, 0.0
    %vm613 = vcmp.ge.s32.totalorder %v605, 8
    %vm614 = vcmp.lt.s32.totalorder %v605, 16
    %vm615 = vmand %vm613, %vm614
    %v616 = vsel %vm615, %v586, 0.0
    %v617 = vsel %vm615, %v591, 0.0
    %v618 = vsel %vm615, %v596, 0.0
    %v619 = vsel %vm615, %v601, 0.0
    %vm620 = vcmp.ge.s32.totalorder %v605, 16
    %vm621 = vcmp.lt.s32.totalorder %v605, 24
    %vm622 = vmand %vm620, %vm621
    %v623 = vsel %vm622, %v586, 0.0
    %v624 = vsel %vm622, %v591, 0.0
    %v625 = vsel %vm622, %v596, 0.0
    %v626 = vsel %vm622, %v601, 0.0
    %vm627 = vcmp.ge.s32.totalorder %v605, 24
    %vm628 = vcmp.lt.s32.totalorder %v605, 32
    %vm629 = vmand %vm627, %vm628
    %v630 = vsel %vm629, %v586, 0.0
    %v631 = vsel %vm629, %v591, 0.0
    %v632 = vsel %vm629, %v596, 0.0
    %v633 = vsel %vm629, %v601, 0.0
    %vm634 = vcmask 64512
    %v636 = vsel %vm634, %v379, 0
    %v639 = vsel %vm634, %v384, 0
    %v642 = vsel %vm634, %v499, 0
    %644 = vmatprep.subr.mxu0 0.0
    %645 = vmatpush1.xpose.msra.mxu0 %v642
    %646 = vmatprep.subr.mxu0 0.0
    %647 = vmatpush1.xpose.msra.mxu0 0.0
    %648 = vmatprep.subr.mxu0 0.0
    %649 = vmatpush1.xpose.msra.mxu0 0.0
    %650 = vmatprep.subr.mxu0 0.0
    %651 = vmatpush1.xpose.msra.mxu0 0.0
    %652 = vmatprep.subr.mxu0 0.0
    %653 = vmatpush1.xpose.msra.mxu0 0.0
    %654 = vmatprep.subr.mxu0 0.0
    %655 = vmatpush1.xpose.msra.mxu0 0.0
    %656 = vmatprep.subr.mxu0 0.0
    %657 = vmatpush1.xpose.msra.mxu0 0.0
    %658 = vmatprep.subr.mxu0 0.0
    %659 = vmatpush1.xpose.msra.mxu0 0.0
    %660 = vmatprep.subr.mxu0 0.0
    %661 = vmatpush1.xpose.msra.mxu0 0.0
    %662 = vmatprep.subr.mxu0 0.0
    %663 = vmatpush1.xpose.msra.mxu0 0.0
    %664 = vmatprep.subr.mxu0 0.0
    %665 = vmatpush1.xpose.msra.mxu0 0.0
    %666 = vmatprep.subr.mxu0 0.0
    %667 = vmatpush1.xpose.msra.mxu0 0.0
    %668 = vmatprep.subr.mxu0 0.0
    %669 = vmatpush1.xpose.msra.mxu0 0.0
    %670 = vmatprep.subr.mxu0 0.0
    %671 = vmatpush1.xpose.msra.mxu0 0.0
    %672 = vmatprep.subr.mxu0 0.0
    %673 = vmatpush1.xpose.msra.mxu0 0.0
    %674 = vmatprep.subr.mxu0 0.0
    %675 = vmatpush1.xpose.msra.mxu0 0.0
    %676 = vmatprep.subr.mxu0 0.0
    %677 = vmatpush1.xpose.msra.mxu0 0.0
    %678 = vmatprep.subr.mxu0 0.0
    %679 = vmatpush1.xpose.msra.mxu0 0.0
    %680 = vmatprep.subr.mxu0 0.0
    %681 = vmatpush1.xpose.msra.mxu0 0.0
    %682 = vmatprep.subr.mxu0 0.0
    %683 = vmatpush1.xpose.msra.mxu0 0.0
    %684 = vmatprep.subr.mxu0 0.0
    %685 = vmatpush1.xpose.msra.mxu0 0.0
    %686 = vmatprep.subr.mxu0 0.0
    %687 = vmatpush1.xpose.msra.mxu0 0.0
    %688 = vmatprep.subr.mxu0 0.0
    %689 = vmatpush1.xpose.msra.mxu0 0.0
    %690 = vmatprep.subr.mxu0 0.0
    %691 = vmatpush1.xpose.msra.mxu0 0.0
    %692 = vmatprep.subr.mxu0 0.0
    %693 = vmatpush1.xpose.msra.mxu0 0.0
    %694 = vmatprep.subr.mxu0 0.0
    %695 = vmatpush1.xpose.msra.mxu0 0.0
    %696 = vmatprep.subr.mxu0 0.0
    %697 = vmatpush1.xpose.msra.mxu0 0.0
    %698 = vmatprep.subr.mxu0 0.0
    %699 = vmatpush1.xpose.msra.mxu0 0.0
    %700 = vmatprep.subr.mxu0 0.0
    %701 = vmatpush1.xpose.msra.mxu0 0.0
    %702 = vmatprep.subr.mxu0 0.0
    %703 = vmatpush1.xpose.msra.mxu0 0.0
    %704 = vmatprep.subr.mxu0 0.0
    %705 = vmatpush1.xpose.msra.mxu0 0.0
    %706 = vmatprep.subr.mxu0 0.0
    %707 = vmatpush1.xpose.msra.mxu0 0.0
    %708 = vmatprep.mubr.f32.mxu0 0.0
    %709 = vmatmul.mubr.f32.gmra.mrb[0].mxu0 %v636
    %v710 = vpop.f32.mrb[0].mxu0
    %v711 = vadd.f32 0.0, %v710
    %v712 = vpop.f32.mrb[0].mxu0
    %713 = vmatprep.mubr.f32.mxu0 0.0
    %714 = vmatmul.mubr.f32.gmra.mrb[0].mxu0 %v639
    %v715 = vpop.f32.mrb[0].mxu0
    %v716 = vadd.f32 0.0, %v715
    %v717 = vpop.f32.mrb[0].mxu0
    %718 = vdwg.mxu0
    %v719 = vsel %vm634, %v711, -inf
    %720 = vmax.xlane.f32.xlu0 %v719
    %v721 = vpop.xlane.xlu0 %720
    %v722 = vsel %vm634, %v716, -inf
    %723 = vmax.xlane.f32.xlu0 %v722
    %v724 = vpop.xlane.xlu0 %723
    %v725 = vsub.f32 %v711, %v721
    %v726 = vsub.f32 %v716, %v724
    %v727 = vmul.f32 %v725, 1.442695
    %v728 = vpow.pop %v727
    %v729 = vmul.f32 %v726, 1.442695
    %v730 = vpow.pop %v729
    %v731 = vsel %vm634, %v728, 0.0
    %732 = vadd.xlane.f32.xlu0 %v731
    %v733 = vpop.xlane.xlu0 %732
    %v734 = vsel %vm634, %v730, 0.0
    %735 = vadd.xlane.f32.xlu0 %v734
    %v736 = vpop.xlane.xlu0 %735
    %v737 = vrcp.pop %v733
    %v738 = vmul.f32 %v728, %v737
    %v739 = vrcp.pop %v736
    %v740 = vmul.f32 %v730, %v739
    %741 = vrot.lane.b32.xlu0 %v379, 120
    %v742 = vpop.permute.xlu0 %741
    %743 = vrot.lane.b32.xlu0 %v384, 120
    %v744 = vpop.permute.xlu0 %743
    %745 = vrot.lane.b32.xlu0 %v499, 120
    %v746 = vpop.permute.xlu0 %745
    %v747 = vsel %vm634, %v742, 0
    %v749 = vsel %vm634, %v744, 0
    %v751 = vsel %vm634, %v746, 0
    %753 = vmatprep.subr.mxu0 0.0
    %754 = vmatpush1.xpose.msra.mxu0 %v751
    %755 = vmatprep.subr.mxu0 0.0
    %756 = vmatpush1.xpose.msra.mxu0 0.0
    %757 = vmatprep.subr.mxu0 0.0
    %758 = vmatpush1.xpose.msra.mxu0 0.0
    %759 = vmatprep.subr.mxu0 0.0
    %760 = vmatpush1.xpose.msra.mxu0 0.0
    %761 = vmatprep.subr.mxu0 0.0
    %762 = vmatpush1.xpose.msra.mxu0 0.0
    %763 = vmatprep.subr.mxu0 0.0
    %764 = vmatpush1.xpose.msra.mxu0 0.0
    %765 = vmatprep.subr.mxu0 0.0
    %766 = vmatpush1.xpose.msra.mxu0 0.0
    %767 = vmatprep.subr.mxu0 0.0
    %768 = vmatpush1.xpose.msra.mxu0 0.0
    %769 = vmatprep.subr.mxu0 0.0
    %770 = vmatpush1.xpose.msra.mxu0 0.0
    %771 = vmatprep.subr.mxu0 0.0
    %772 = vmatpush1.xpose.msra.mxu0 0.0
    %773 = vmatprep.subr.mxu0 0.0
    %774 = vmatpush1.xpose.msra.mxu0 0.0
    %775 = vmatprep.subr.mxu0 0.0
    %776 = vmatpush1.xpose.msra.mxu0 0.0
    %777 = vmatprep.subr.mxu0 0.0
    %778 = vmatpush1.xpose.msra.mxu0 0.0
    %779 = vmatprep.subr.mxu0 0.0
    %780 = vmatpush1.xpose.msra.mxu0 0.0
    %781 = vmatprep.subr.mxu0 0.0
    %782 = vmatpush1.xpose.msra.mxu0 0.0
    %783 = vmatprep.subr.mxu0 0.0
    %784 = vmatpush1.xpose.msra.mxu0 0.0
    %785 = vmatprep.subr.mxu0 0.0
    %786 = vmatpush1.xpose.msra.mxu0 0.0
    %787 = vmatprep.subr.mxu0 0.0
    %788 = vmatpush1.xpose.msra.mxu0 0.0
    %789 = vmatprep.subr.mxu0 0.0
    %790 = vmatpush1.xpose.msra.mxu0 0.0
    %791 = vmatprep.subr.mxu0 0.0
    %792 = vmatpush1.xpose.msra.mxu0 0.0
    %793 = vmatprep.subr.mxu0 0.0
    %794 = vmatpush1.xpose.msra.mxu0 0.0
    %795 = vmatprep.subr.mxu0 0.0
    %796 = vmatpush1.xpose.msra.mxu0 0.0
    %797 = vmatprep.subr.mxu0 0.0
    %798 = vmatpush1.xpose.msra.mxu0 0.0
    %799 = vmatprep.subr.mxu0 0.0
    %800 = vmatpush1.xpose.msra.mxu0 0.0
    %801 = vmatprep.subr.mxu0 0.0
    %802 = vmatpush1.xpose.msra.mxu0 0.0
    %803 = vmatprep.subr.mxu0 0.0
    %804 = vmatpush1.xpose.msra.mxu0 0.0
    %805 = vmatprep.subr.mxu0 0.0
    %806 = vmatpush1.xpose.msra.mxu0 0.0
    %807 = vmatprep.subr.mxu0 0.0
    %808 = vmatpush1.xpose.msra.mxu0 0.0
    %809 = vmatprep.subr.mxu0 0.0
    %810 = vmatpush1.xpose.msra.mxu0 0.0
    %811 = vmatprep.subr.mxu0 0.0
    %812 = vmatpush1.xpose.msra.mxu0 0.0
    %813 = vmatprep.subr.mxu0 0.0
    %814 = vmatpush1.xpose.msra.mxu0 0.0
    %815 = vmatprep.subr.mxu0 0.0
    %816 = vmatpush1.xpose.msra.mxu0 0.0
    %817 = vmatprep.mubr.f32.mxu0 0.0
    %818 = vmatmul.mubr.f32.gmra.mrb[0].mxu0 %v747
    %v819 = vpop.f32.mrb[0].mxu0
    %v820 = vadd.f32 0.0, %v819
    %v821 = vpop.f32.mrb[0].mxu0
    %822 = vmatprep.mubr.f32.mxu0 0.0
    %823 = vmatmul.mubr.f32.gmra.mrb[0].mxu0 %v749
    %v824 = vpop.f32.mrb[0].mxu0
    %v825 = vadd.f32 0.0, %v824
    %v826 = vpop.f32.mrb[0].mxu0
    %827 = vdwg.mxu0
    %v828 = vsel %vm634, %v820, -inf
    %829 = vmax.xlane.f32.xlu0 %v828
    %v830 = vpop.xlane.xlu0 %829
    %v831 = vsel %vm634, %v825, -inf
    %832 = vmax.xlane.f32.xlu0 %v831
    %v833 = vpop.xlane.xlu0 %832
    %v834 = vsub.f32 %v820, %v830
    %v835 = vsub.f32 %v825, %v833
    %v836 = vmul.f32 %v834, 1.442695
    %v837 = vpow.pop %v836
    %v838 = vmul.f32 %v835, 1.442695
    %v839 = vpow.pop %v838
    %v840 = vsel %vm634, %v837, 0.0
    %841 = vadd.xlane.f32.xlu0 %v840
    %v842 = vpop.xlane.xlu0 %841
    %v843 = vsel %vm634, %v839, 0.0
    %844 = vadd.xlane.f32.xlu0 %v843
    %v845 = vpop.xlane.xlu0 %844
    %v846 = vrcp.pop %v842
    %v847 = vmul.f32 %v837, %v846
    %v848 = vrcp.pop %v845
    %v849 = vmul.f32 %v839, %v848
    %v851 = vsel %vm634, %v847, 0
    %v854 = vsel %vm634, %v849, 0
    %856 = vmatprep.subr.mxu0 0.0
    %857 = vmatpush1.msra.mxu0 %v616
    %858 = vmatprep.subr.mxu0 0.0
    %859 = vmatpush1.msra.mxu0 0.0
    %860 = vmatprep.subr.mxu0 0.0
    %861 = vmatpush1.msra.mxu0 0.0
    %862 = vmatprep.subr.mxu0 0.0
    %863 = vmatpush1.msra.mxu0 0.0
    %864 = vmatprep.subr.mxu0 0.0
    %865 = vmatpush1.msra.mxu0 0.0
    %866 = vmatprep.subr.mxu0 0.0
    %867 = vmatpush1.msra.mxu0 0.0
    %868 = vmatprep.subr.mxu0 0.0
    %869 = vmatpush1.msra.mxu0 0.0
    %870 = vmatprep.subr.mxu0 0.0
    %871 = vmatpush1.msra.mxu0 0.0
    %872 = vmatprep.subr.mxu0 0.0
    %873 = vmatpush1.msra.mxu0 0.0
    %874 = vmatprep.subr.mxu0 0.0
    %875 = vmatpush1.msra.mxu0 0.0
    %876 = vmatprep.subr.mxu0 0.0
    %877 = vmatpush1.msra.mxu0 0.0
    %878 = vmatprep.subr.mxu0 0.0
    %879 = vmatpush1.msra.mxu0 0.0
    %880 = vmatprep.subr.mxu0 0.0
    %881 = vmatpush1.msra.mxu0 0.0
    %882 = vmatprep.subr.mxu0 0.0
    %883 = vmatpush1.msra.mxu0 0.0
    %884 = vmatprep.subr.mxu0 0.0
    %885 = vmatpush1.msra.mxu0 0.0
    %886 = vmatprep.subr.mxu0 0.0
    %887 = vmatpush1.msra.mxu0 0.0
    %888 = vmatprep.subr.mxu0 0.0
    %889 = vmatpush1.msra.mxu0 0.0
    %890 = vmatprep.subr.mxu0 0.0
    %891 = vmatpush1.msra.mxu0 0.0
    %892 = vmatprep.subr.mxu0 0.0
    %893 = vmatpush1.msra.mxu0 0.0
    %894 = vmatprep.subr.mxu0 0.0
    %895 = vmatpush1.msra.mxu0 0.0
    %896 = vmatprep.subr.mxu0 0.0
    %897 = vmatpush1.msra.mxu0 0.0
    %898 = vmatprep.subr.mxu0 0.0
    %899 = vmatpush1.msra.mxu0 0.0
    %900 = vmatprep.subr.mxu0 0.0
    %901 = vmatpush1.msra.mxu0 0.0
    %902 = vmatprep.subr.mxu0 0.0
    %903 = vmatpush1.msra.mxu0 0.0
    %904 = vmatprep.subr.mxu0 0.0
    %905 = vmatpush1.msra.mxu0 0.0
    %906 = vmatprep.subr.mxu0 0.0
    %907 = vmatpush1.msra.mxu0 0.0
    %908 = vmatprep.subr.mxu0 0.0
    %909 = vmatpush1.msra.mxu0 0.0
    %910 = vmatprep.subr.mxu0 0.0
    %911 = vmatpush1.msra.mxu0 0.0
    %912 = vmatprep.subr.mxu0 0.0
    %913 = vmatpush1.msra.mxu0 0.0
    %914 = vmatprep.subr.mxu0 0.0
    %915 = vmatpush1.msra.mxu0 0.0
    %916 = vmatprep.subr.mxu0 0.0
    %917 = vmatpush1.msra.mxu0 0.0
    %918 = vmatprep.subr.mxu0 0.0
    %919 = vmatpush1.msra.mxu0 0.0
    %920 = vmatprep.mubr.f32.mxu0 0.0
    %921 = vmatmul.mubr.f32.gmra.mrb[0].mxu0 %v851
    %v922 = vpop.f32.mrb[0].mxu0
    %v923 = vadd.f32 0.0, %v922
    %v924 = vpop.f32.mrb[0].mxu0
    %925 = vmatprep.mubr.f32.mxu0 0.0
    %926 = vmatmul.mubr.f32.gmra.mrb[0].mxu0 %v854
    %v927 = vpop.f32.mrb[0].mxu0
    %v928 = vadd.f32 0.0, %v927
    %v929 = vpop.f32.mrb[0].mxu0
    %930 = vdwg.mxu0
    %v932 = vsel %vm634, %v738, 0
    %v935 = vsel %vm634, %v740, 0
    %937 = vmatprep.subr.mxu0 0.0
    %938 = vmatpush1.msra.mxu0 %v609
    %939 = vmatprep.subr.mxu0 0.0
    %940 = vmatpush1.msra.mxu0 0.0
    %941 = vmatprep.subr.mxu0 0.0
    %942 = vmatpush1.msra.mxu0 0.0
    %943 = vmatprep.subr.mxu0 0.0
    %944 = vmatpush1.msra.mxu0 0.0
    %945 = vmatprep.subr.mxu0 0.0
    %946 = vmatpush1.msra.mxu0 0.0
    %947 = vmatprep.subr.mxu0 0.0
    %948 = vmatpush1.msra.mxu0 0.0
    %949 = vmatprep.subr.mxu0 0.0
    %950 = vmatpush1.msra.mxu0 0.0
    %951 = vmatprep.subr.mxu0 0.0
    %952 = vmatpush1.msra.mxu0 0.0
    %953 = vmatprep.subr.mxu0 0.0
    %954 = vmatpush1.msra.mxu0 0.0
    %955 = vmatprep.subr.mxu0 0.0
    %956 = vmatpush1.msra.mxu0 0.0
    %957 = vmatprep.subr.mxu0 0.0
    %958 = vmatpush1.msra.mxu0 0.0
    %959 = vmatprep.subr.mxu0 0.0
    %960 = vmatpush1.msra.mxu0 0.0
    %961 = vmatprep.subr.mxu0 0.0
    %962 = vmatpush1.msra.mxu0 0.0
    %963 = vmatprep.subr.mxu0 0.0
    %964 = vmatpush1.msra.mxu0 0.0
    %965 = vmatprep.subr.mxu0 0.0
    %966 = vmatpush1.msra.mxu0 0.0
    %967 = vmatprep.subr.mxu0 0.0
    %968 = vmatpush1.msra.mxu0 0.0
    %969 = vmatprep.subr.mxu0 0.0
    %970 = vmatpush1.msra.mxu0 0.0
    %971 = vmatprep.subr.mxu0 0.0
    %972 = vmatpush1.msra.mxu0 0.0
    %973 = vmatprep.subr.mxu0 0.0
    %974 = vmatpush1.msra.mxu0 0.0
    %975 = vmatprep.subr.mxu0 0.0
    %976 = vmatpush1.msra.mxu0 0.0
    %977 = vmatprep.subr.mxu0 0.0
    %978 = vmatpush1.msra.mxu0 0.0
    %979 = vmatprep.subr.mxu0 0.0
    %980 = vmatpush1.msra.mxu0 0.0
    %981 = vmatprep.subr.mxu0 0.0
    %982 = vmatpush1.msra.mxu0 0.0
    %983 = vmatprep.subr.mxu0 0.0
    %984 = vmatpush1.msra.mxu0 0.0
    %985 = vmatprep.subr.mxu0 0.0
    %986 = vmatpush1.msra.mxu0 0.0
    %987 = vmatprep.subr.mxu0 0.0
    %988 = vmatpush1.msra.mxu0 0.0
    %989 = vmatprep.subr.mxu0 0.0
    %990 = vmatpush1.msra.mxu0 0.0
    %991 = vmatprep.subr.mxu0 0.0
    %992 = vmatpush1.msra.mxu0 0.0
    %993 = vmatprep.subr.mxu0 0.0
    %994 = vmatpush1.msra.mxu0 0.0
    %995 = vmatprep.subr.mxu0 0.0
    %996 = vmatpush1.msra.mxu0 0.0
    %997 = vmatprep.subr.mxu0 0.0
    %998 = vmatpush1.msra.mxu0 0.0
    %999 = vmatprep.subr.mxu0 0.0
    %1000 = vmatpush1.msra.mxu0 0.0
    %1001 = vmatprep.mubr.f32.mxu0 0.0
    %1002 = vmatmul.mubr.f32.gmra.mrb[0].mxu0 %v932
    %v1003 = vpop.f32.mrb[0].mxu0
    %v1004 = vadd.f32 %v923, %v1003
    %v1005 = vpop.f32.mrb[0].mxu0
    %1006 = vmatprep.mubr.f32.mxu0 0.0
    %1007 = vmatmul.mubr.f32.gmra.mrb[0].mxu0 %v935
    %v1008 = vpop.f32.mrb[0].mxu0
    %v1009 = vadd.f32 %v928, %v1008
    %v1010 = vpop.f32.mrb[0].mxu0
    %1011 = vdwg.mxu0
    %1012 = vrot.lane.b32.xlu0 %v379, 112
    %v1013 = vpop.permute.xlu0 %1012
    %1014 = vrot.lane.b32.xlu0 %v384, 112
    %v1015 = vpop.permute.xlu0 %1014
    %1016 = vrot.lane.b32.xlu0 %v499, 112
    %v1017 = vpop.permute.xlu0 %1016
    %v1018 = vsel %vm634, %v1013, 0
    %v1020 = vsel %vm634, %v1015, 0
    %v1022 = vsel %vm634, %v1017, 0
    %1024 = vmatprep.subr.mxu0 0.0
    %1025 = vmatpush1.xpose.msra.mxu0 %v1022
    %1026 = vmatprep.subr.mxu0 0.0
    %1027 = vmatpush1.xpose.msra.mxu0 0.0
    %1028 = vmatprep.subr.mxu0 0.0
    %1029 = vmatpush1.xpose.msra.mxu0 0.0
    %1030 = vmatprep.subr.mxu0 0.0
    %1031 = vmatpush1.xpose.msra.mxu0 0.0
    %1032 = vmatprep.subr.mxu0 0.0
    %1033 = vmatpush1.xpose.msra.mxu0 0.0
    %1034 = vmatprep.subr.mxu0 0.0
    %1035 = vmatpush1.xpose.msra.mxu0 0.0
    %1036 = vmatprep.subr.mxu0 0.0
    %1037 = vmatpush1.xpose.msra.mxu0 0.0
    %1038 = vmatprep.subr.mxu0 0.0
    %1039 = vmatpush1.xpose.msra.mxu0 0.0
    %1040 = vmatprep.subr.mxu0 0.0
    %1041 = vmatpush1.xpose.msra.mxu0 0.0
    %1042 = vmatprep.subr.mxu0 0.0
    %1043 = vmatpush1.xpose.msra.mxu0 0.0
    %1044 = vmatprep.subr.mxu0 0.0
    %1045 = vmatpush1.xpose.msra.mxu0 0.0
    %1046 = vmatprep.subr.mxu0 0.0
    %1047 = vmatpush1.xpose.msra.mxu0 0.0
    %1048 = vmatprep.subr.mxu0 0.0
    %1049 = vmatpush1.xpose.msra.mxu0 0.0
    %1050 = vmatprep.subr.mxu0 0.0
    %1051 = vmatpush1.xpose.msra.mxu0 0.0
    %1052 = vmatprep.subr.mxu0 0.0
    %1053 = vmatpush1.xpose.msra.mxu0 0.0
    %1054 = vmatprep.subr.mxu0 0.0
    %1055 = vmatpush1.xpose.msra.mxu0 0.0
    %1056 = vmatprep.subr.mxu0 0.0
    %1057 = vmatpush1.xpose.msra.mxu0 0.0
    %1058 = vmatprep.subr.mxu0 0.0
    %1059 = vmatpush1.xpose.msra.mxu0 0.0
    %1060 = vmatprep.subr.mxu0 0.0
    %1061 = vmatpush1.xpose.msra.mxu0 0.0
    %1062 = vmatprep.subr.mxu0 0.0
    %1063 = vmatpush1.xpose.msra.mxu0 0.0
    %1064 = vmatprep.subr.mxu0 0.0
    %1065 = vmatpush1.xpose.msra.mxu0 0.0
    %1066 = vmatprep.subr.mxu0 0.0
    %1067 = vmatpush1.xpose.msra.mxu0 0.0
    %1068 = vmatprep.subr.mxu0 0.0
    %1069 = vmatpush1.xpose.msra.mxu0 0.0
    %1070 = vmatprep.subr.mxu0 0.0
    %1071 = vmatpush1.xpose.msra.mxu0 0.0
    %1072 = vmatprep.subr.mxu0 0.0
    %1073 = vmatpush1.xpose.msra.mxu0 0.0
    %1074 = vmatprep.subr.mxu0 0.0
    %1075 = vmatpush1.xpose.msra.mxu0 0.0
    %1076 = vmatprep.subr.mxu0 0.0
    %1077 = vmatpush1.xpose.msra.mxu0 0.0
    %1078 = vmatprep.subr.mxu0 0.0
    %1079 = vmatpush1.xpose.msra.mxu0 0.0
    %1080 = vmatprep.subr.mxu0 0.0
    %1081 = vmatpush1.xpose.msra.mxu0 0.0
    %1082 = vmatprep.subr.mxu0 0.0
    %1083 = vmatpush1.xpose.msra.mxu0 0.0
    %1084 = vmatprep.subr.mxu0 0.0
    %1085 = vmatpush1.xpose.msra.mxu0 0.0
    %1086 = vmatprep.subr.mxu0 0.0
    %1087 = vmatpush1.xpose.msra.mxu0 0.0
    %1088 = vmatprep.mubr.f32.mxu0 0.0
    %1089 = vmatmul.mubr.f32.gmra.mrb[0].mxu0 %v1018
    %v1090 = vpop.f32.mrb[0].mxu0
    %v1091 = vadd.f32 0.0, %v1090
    %v1092 = vpop.f32.mrb[0].mxu0
    %1093 = vmatprep.mubr.f32.mxu0 0.0
    %1094 = vmatmul.mubr.f32.gmra.mrb[0].mxu0 %v1020
    %v1095 = vpop.f32.mrb[0].mxu0
    %v1096 = vadd.f32 0.0, %v1095
    %v1097 = vpop.f32.mrb[0].mxu0
    %1098 = vdwg.mxu0
    %v1099 = vsel %vm634, %v1091, -inf
    %1100 = vmax.xlane.f32.xlu0 %v1099
    %v1101 = vpop.xlane.xlu0 %1100
    %v1102 = vsel %vm634, %v1096, -inf
    %1103 = vmax.xlane.f32.xlu0 %v1102
    %v1104 = vpop.xlane.xlu0 %1103
    %v1105 = vsub.f32 %v1091, %v1101
    %v1106 = vsub.f32 %v1096, %v1104
    %v1107 = vmul.f32 %v1105, 1.442695
    %v1108 = vpow.pop %v1107
    %v1109 = vmul.f32 %v1106, 1.442695
    %v1110 = vpow.pop %v1109
    %v1111 = vsel %vm634, %v1108, 0.0
    %1112 = vadd.xlane.f32.xlu0 %v1111
    %v1113 = vpop.xlane.xlu0 %1112
    %v1114 = vsel %vm634, %v1110, 0.0
    %1115 = vadd.xlane.f32.xlu0 %v1114
    %v1116 = vpop.xlane.xlu0 %1115
    %v1117 = vrcp.pop %v1113
    %v1118 = vmul.f32 %v1108, %v1117
    %v1119 = vrcp.pop %v1116
    %v1120 = vmul.f32 %v1110, %v1119
    %v1122 = vsel %vm634, %v1118, 0
    %v1125 = vsel %vm634, %v1120, 0
    %1127 = vmatprep.subr.mxu0 0.0
    %1128 = vmatpush1.msra.mxu0 %v623
    %1129 = vmatprep.subr.mxu0 0.0
    %1130 = vmatpush1.msra.mxu0 0.0
    %1131 = vmatprep.subr.mxu0 0.0
    %1132 = vmatpush1.msra.mxu0 0.0
    %1133 = vmatprep.subr.mxu0 0.0
    %1134 = vmatpush1.msra.mxu0 0.0
    %1135 = vmatprep.subr.mxu0 0.0
    %1136 = vmatpush1.msra.mxu0 0.0
    %1137 = vmatprep.subr.mxu0 0.0
    %1138 = vmatpush1.msra.mxu0 0.0
    %1139 = vmatprep.subr.mxu0 0.0
    %1140 = vmatpush1.msra.mxu0 0.0
    %1141 = vmatprep.subr.mxu0 0.0
    %1142 = vmatpush1.msra.mxu0 0.0
    %1143 = vmatprep.subr.mxu0 0.0
    %1144 = vmatpush1.msra.mxu0 0.0
    %1145 = vmatprep.subr.mxu0 0.0
    %1146 = vmatpush1.msra.mxu0 0.0
    %1147 = vmatprep.subr.mxu0 0.0
    %1148 = vmatpush1.msra.mxu0 0.0
    %1149 = vmatprep.subr.mxu0 0.0
    %1150 = vmatpush1.msra.mxu0 0.0
    %1151 = vmatprep.subr.mxu0 0.0
    %1152 = vmatpush1.msra.mxu0 0.0
    %1153 = vmatprep.subr.mxu0 0.0
    %1154 = vmatpush1.msra.mxu0 0.0
    %1155 = vmatprep.subr.mxu0 0.0
    %1156 = vmatpush1.msra.mxu0 0.0
    %1157 = vmatprep.subr.mxu0 0.0
    %1158 = vmatpush1.msra.mxu0 0.0
    %1159 = vmatprep.subr.mxu0 0.0
    %1160 = vmatpush1.msra.mxu0 0.0
    %1161 = vmatprep.subr.mxu0 0.0
    %1162 = vmatpush1.msra.mxu0 0.0
    %1163 = vmatprep.subr.mxu0 0.0
    %1164 = vmatpush1.msra.mxu0 0.0
    %1165 = vmatprep.subr.mxu0 0.0
    %1166 = vmatpush1.msra.mxu0 0.0
    %1167 = vmatprep.subr.mxu0 0.0
    %1168 = vmatpush1.msra.mxu0 0.0
    %1169 = vmatprep.subr.mxu0 0.0
    %1170 = vmatpush1.msra.mxu0 0.0
    %1171 = vmatprep.subr.mxu0 0.0
    %1172 = vmatpush1.msra.mxu0 0.0
    %1173 = vmatprep.subr.mxu0 0.0
    %1174 = vmatpush1.msra.mxu0 0.0
    %1175 = vmatprep.subr.mxu0 0.0
    %1176 = vmatpush1.msra.mxu0 0.0
    %1177 = vmatprep.subr.mxu0 0.0
    %1178 = vmatpush1.msra.mxu0 0.0
    %1179 = vmatprep.subr.mxu0 0.0
    %1180 = vmatpush1.msra.mxu0 0.0
    %1181 = vmatprep.subr.mxu0 0.0
    %1182 = vmatpush1.msra.mxu0 0.0
    %1183 = vmatprep.subr.mxu0 0.0
    %1184 = vmatpush1.msra.mxu0 0.0
    %1185 = vmatprep.subr.mxu0 0.0
    %1186 = vmatpush1.msra.mxu0 0.0
    %1187 = vmatprep.subr.mxu0 0.0
    %1188 = vmatpush1.msra.mxu0 0.0
    %1189 = vmatprep.subr.mxu0 0.0
    %1190 = vmatpush1.msra.mxu0 0.0
    %1191 = vmatprep.mubr.f32.mxu0 0.0
    %1192 = vmatmul.mubr.f32.gmra.mrb[0].mxu0 %v1122
    %v1193 = vpop.f32.mrb[0].mxu0
    %v1194 = vadd.f32 0.0, %v1193
    %v1195 = vpop.f32.mrb[0].mxu0
    %1196 = vmatprep.mubr.f32.mxu0 0.0
    %1197 = vmatmul.mubr.f32.gmra.mrb[0].mxu0 %v1125
    %v1198 = vpop.f32.mrb[0].mxu0
    %v1199 = vadd.f32 0.0, %v1198
    %v1200 = vpop.f32.mrb[0].mxu0
    %1201 = vdwg.mxu0
    %v1202 = vadd.f32 %v1004, %v1194
    %v1203 = vadd.f32 %v1009, %v1199
    %1204 = vrot.lane.b32.xlu0 %v379, 104
    %v1205 = vpop.permute.xlu0 %1204
    %1206 = vrot.lane.b32.xlu0 %v384, 104
    %v1207 = vpop.permute.xlu0 %1206
    %1208 = vrot.lane.b32.xlu0 %v499, 104
    %v1209 = vpop.permute.xlu0 %1208
    %v1210 = vsel %vm634, %v1205, 0
    %v1212 = vsel %vm634, %v1207, 0
    %v1214 = vsel %vm634, %v1209, 0
    %1216 = vmatprep.subr.mxu0 0.0
    %1217 = vmatpush1.xpose.msra.mxu0 %v1214
    %1218 = vmatprep.subr.mxu0 0.0
    %1219 = vmatpush1.xpose.msra.mxu0 0.0
    %1220 = vmatprep.subr.mxu0 0.0
    %1221 = vmatpush1.xpose.msra.mxu0 0.0
    %1222 = vmatprep.subr.mxu0 0.0
    %1223 = vmatpush1.xpose.msra.mxu0 0.0
    %1224 = vmatprep.subr.mxu0 0.0
    %1225 = vmatpush1.xpose.msra.mxu0 0.0
    %1226 = vmatprep.subr.mxu0 0.0
    %1227 = vmatpush1.xpose.msra.mxu0 0.0
    %1228 = vmatprep.subr.mxu0 0.0
    %1229 = vmatpush1.xpose.msra.mxu0 0.0
    %1230 = vmatprep.subr.mxu0 0.0
    %1231 = vmatpush1.xpose.msra.mxu0 0.0
    %1232 = vmatprep.subr.mxu0 0.0
    %1233 = vmatpush1.xpose.msra.mxu0 0.0
    %1234 = vmatprep.subr.mxu0 0.0
    %1235 = vmatpush1.xpose.msra.mxu0 0.0
    %1236 = vmatprep.subr.mxu0 0.0
    %1237 = vmatpush1.xpose.msra.mxu0 0.0
    %1238 = vmatprep.subr.mxu0 0.0
    %1239 = vmatpush1.xpose.msra.mxu0 0.0
    %1240 = vmatprep.subr.mxu0 0.0
    %1241 = vmatpush1.xpose.msra.mxu0 0.0
    %1242 = vmatprep.subr.mxu0 0.0
    %1243 = vmatpush1.xpose.msra.mxu0 0.0
    %1244 = vmatprep.subr.mxu0 0.0
    %1245 = vmatpush1.xpose.msra.mxu0 0.0
    %1246 = vmatprep.subr.mxu0 0.0
    %1247 = vmatpush1.xpose.msra.mxu0 0.0
    %1248 = vmatprep.subr.mxu0 0.0
    %1249 = vmatpush1.xpose.msra.mxu0 0.0
    %1250 = vmatprep.subr.mxu0 0.0
    %1251 = vmatpush1.xpose.msra.mxu0 0.0
    %1252 = vmatprep.subr.mxu0 0.0
    %1253 = vmatpush1.xpose.msra.mxu0 0.0
    %1254 = vmatprep.subr.mxu0 0.0
    %1255 = vmatpush1.xpose.msra.mxu0 0.0
    %1256 = vmatprep.subr.mxu0 0.0
    %1257 = vmatpush1.xpose.msra.mxu0 0.0
    %1258 = vmatprep.subr.mxu0 0.0
    %1259 = vmatpush1.xpose.msra.mxu0 0.0
    %1260 = vmatprep.subr.mxu0 0.0
    %1261 = vmatpush1.xpose.msra.mxu0 0.0
    %1262 = vmatprep.subr.mxu0 0.0
    %1263 = vmatpush1.xpose.msra.mxu0 0.0
    %1264 = vmatprep.subr.mxu0 0.0
    %1265 = vmatpush1.xpose.msra.mxu0 0.0
    %1266 = vmatprep.subr.mxu0 0.0
    %1267 = vmatpush1.xpose.msra.mxu0 0.0
    %1268 = vmatprep.subr.mxu0 0.0
    %1269 = vmatpush1.xpose.msra.mxu0 0.0
    %1270 = vmatprep.subr.mxu0 0.0
    %1271 = vmatpush1.xpose.msra.mxu0 0.0
    %1272 = vmatprep.subr.mxu0 0.0
    %1273 = vmatpush1.xpose.msra.mxu0 0.0
    %1274 = vmatprep.subr.mxu0 0.0
    %1275 = vmatpush1.xpose.msra.mxu0 0.0
    %1276 = vmatprep.subr.mxu0 0.0
    %1277 = vmatpush1.xpose.msra.mxu0 0.0
    %1278 = vmatprep.subr.mxu0 0.0
    %1279 = vmatpush1.xpose.msra.mxu0 0.0
    %1280 = vmatprep.mubr.f32.mxu0 0.0
    %1281 = vmatmul.mubr.f32.gmra.mrb[0].mxu0 %v1210
    %v1282 = vpop.f32.mrb[0].mxu0
    %v1283 = vadd.f32 0.0, %v1282
    %v1284 = vpop.f32.mrb[0].mxu0
    %1285 = vmatprep.mubr.f32.mxu0 0.0
    %1286 = vmatmul.mubr.f32.gmra.mrb[0].mxu0 %v1212
    %v1287 = vpop.f32.mrb[0].mxu0
    %v1288 = vadd.f32 0.0, %v1287
    %v1289 = vpop.f32.mrb[0].mxu0
    %1290 = vdwg.mxu0
    %v1291 = vsel %vm634, %v1283, -inf
    %1292 = vmax.xlane.f32.xlu0 %v1291
    %v1293 = vpop.xlane.xlu0 %1292
    %v1294 = vsel %vm634, %v1288, -inf
    %1295 = vmax.xlane.f32.xlu0 %v1294
    %v1296 = vpop.xlane.xlu0 %1295
    %v1297 = vsub.f32 %v1283, %v1293
    %v1298 = vsub.f32 %v1288, %v1296
    %v1299 = vmul.f32 %v1297, 1.442695
    %v1300 = vpow.pop %v1299
    %v1301 = vmul.f32 %v1298, 1.442695
    %v1302 = vpow.pop %v1301
    %v1303 = vsel %vm634, %v1300, 0.0
    %1304 = vadd.xlane.f32.xlu0 %v1303
    %v1305 = vpop.xlane.xlu0 %1304
    %v1306 = vsel %vm634, %v1302, 0.0
    %1307 = vadd.xlane.f32.xlu0 %v1306
    %v1308 = vpop.xlane.xlu0 %1307
    %v1309 = vrcp.pop %v1305
    %v1310 = vmul.f32 %v1300, %v1309
    %v1311 = vrcp.pop %v1308
    %v1312 = vmul.f32 %v1302, %v1311
    %v1314 = vsel %vm634, %v1310, 0
    %v1317 = vsel %vm634, %v1312, 0
    %1319 = vmatprep.subr.mxu0 0.0
    %1320 = vmatpush1.msra.mxu0 %v630
    %1321 = vmatprep.subr.mxu0 0.0
    %1322 = vmatpush1.msra.mxu0 0.0
    %1323 = vmatprep.subr.mxu0 0.0
    %1324 = vmatpush1.msra.mxu0 0.0
    %1325 = vmatprep.subr.mxu0 0.0
    %1326 = vmatpush1.msra.mxu0 0.0
    %1327 = vmatprep.subr.mxu0 0.0
    %1328 = vmatpush1.msra.mxu0 0.0
    %1329 = vmatprep.subr.mxu0 0.0
    %1330 = vmatpush1.msra.mxu0 0.0
    %1331 = vmatprep.subr.mxu0 0.0
    %1332 = vmatpush1.msra.mxu0 0.0
    %1333 = vmatprep.subr.mxu0 0.0
    %1334 = vmatpush1.msra.mxu0 0.0
    %1335 = vmatprep.subr.mxu0 0.0
    %1336 = vmatpush1.msra.mxu0 0.0
    %1337 = vmatprep.subr.mxu0 0.0
    %1338 = vmatpush1.msra.mxu0 0.0
    %1339 = vmatprep.subr.mxu0 0.0
    %1340 = vmatpush1.msra.mxu0 0.0
    %1341 = vmatprep.subr.mxu0 0.0
    %1342 = vmatpush1.msra.mxu0 0.0
    %1343 = vmatprep.subr.mxu0 0.0
    %1344 = vmatpush1.msra.mxu0 0.0
    %1345 = vmatprep.subr.mxu0 0.0
    %1346 = vmatpush1.msra.mxu0 0.0
    %1347 = vmatprep.subr.mxu0 0.0
    %1348 = vmatpush1.msra.mxu0 0.0
    %1349 = vmatprep.subr.mxu0 0.0
    %1350 = vmatpush1.msra.mxu0 0.0
    %1351 = vmatprep.subr.mxu0 0.0
    %1352 = vmatpush1.msra.mxu0 0.0
    %1353 = vmatprep.subr.mxu0 0.0
    %1354 = vmatpush1.msra.mxu0 0.0
    %1355 = vmatprep.subr.mxu0 0.0
    %1356 = vmatpush1.msra.mxu0 0.0
    %1357 = vmatprep.subr.mxu0 0.0
    %1358 = vmatpush1.msra.mxu0 0.0
    %1359 = vmatprep.subr.mxu0 0.0
    %1360 = vmatpush1.msra.mxu0 0.0
    %1361 = vmatprep.subr.mxu0 0.0
    %1362 = vmatpush1.msra.mxu0 0.0
    %1363 = vmatprep.subr.mxu0 0.0
    %1364 = vmatpush1.msra.mxu0 0.0
    %1365 = vmatprep.subr.mxu0 0.0
    %1366 = vmatpush1.msra.mxu0 0.0
    %1367 = vmatprep.subr.mxu0 0.0
    %1368 = vmatpush1.msra.mxu0 0.0
    %1369 = vmatprep.subr.mxu0 0.0
    %1370 = vmatpush1.msra.mxu0 0.0
    %1371 = vmatprep.subr.mxu0 0.0
    %1372 = vmatpush1.msra.mxu0 0.0
    %1373 = vmatprep.subr.mxu0 0.0
    %1374 = vmatpush1.msra.mxu0 0.0
    %1375 = vmatprep.subr.mxu0 0.0
    %1376 = vmatpush1.msra.mxu0 0.0
    %1377 = vmatprep.subr.mxu0 0.0
    %1378 = vmatpush1.msra.mxu0 0.0
    %1379 = vmatprep.subr.mxu0 0.0
    %1380 = vmatpush1.msra.mxu0 0.0
    %1381 = vmatprep.subr.mxu0 0.0
    %1382 = vmatpush1.msra.mxu0 0.0
    %1383 = vmatprep.mubr.f32.mxu0 0.0
    %1384 = vmatmul.mubr.f32.gmra.mrb[0].mxu0 %v1314
    %v1385 = vpop.f32.mrb[0].mxu0
    %v1386 = vadd.f32 0.0, %v1385
    %v1387 = vpop.f32.mrb[0].mxu0
    %1388 = vmatprep.mubr.f32.mxu0 0.0
    %1389 = vmatmul.mubr.f32.gmra.mrb[0].mxu0 %v1317
    %v1390 = vpop.f32.mrb[0].mxu0
    %v1391 = vadd.f32 0.0, %v1390
    %v1392 = vpop.f32.mrb[0].mxu0
    %1393 = vdwg.mxu0
    %v1394 = vadd.f32 %v1202, %v1386
    %v1395 = vadd.f32 %v1203, %v1391
    %v1397 = vsel %vm634, %v389, 0
    %v1400 = vsel %vm634, %v394, 0
    %v1403 = vsel %vm634, %v504, 0
    %1405 = vmatprep.subr.mxu0 0.0
    %1406 = vmatpush1.xpose.msra.mxu0 %v1403
    %1407 = vmatprep.subr.mxu0 0.0
    %1408 = vmatpush1.xpose.msra.mxu0 0.0
    %1409 = vmatprep.subr.mxu0 0.0
    %1410 = vmatpush1.xpose.msra.mxu0 0.0
    %1411 = vmatprep.subr.mxu0 0.0
    %1412 = vmatpush1.xpose.msra.mxu0 0.0
    %1413 = vmatprep.subr.mxu0 0.0
    %1414 = vmatpush1.xpose.msra.mxu0 0.0
    %1415 = vmatprep.subr.mxu0 0.0
    %1416 = vmatpush1.xpose.msra.mxu0 0.0
    %1417 = vmatprep.subr.mxu0 0.0
    %1418 = vmatpush1.xpose.msra.mxu0 0.0
    %1419 = vmatprep.subr.mxu0 0.0
    %1420 = vmatpush1.xpose.msra.mxu0 0.0
    %1421 = vmatprep.subr.mxu0 0.0
    %1422 = vmatpush1.xpose.msra.mxu0 0.0
    %1423 = vmatprep.subr.mxu0 0.0
    %1424 = vmatpush1.xpose.msra.mxu0 0.0
    %1425 = vmatprep.subr.mxu0 0.0
    %1426 = vmatpush1.xpose.msra.mxu0 0.0
    %1427 = vmatprep.subr.mxu0 0.0
    %1428 = vmatpush1.xpose.msra.mxu0 0.0
    %1429 = vmatprep.subr.mxu0 0.0
    %1430 = vmatpush1.xpose.msra.mxu0 0.0
    %1431 = vmatprep.subr.mxu0 0.0
    %1432 = vmatpush1.xpose.msra.mxu0 0.0
    %1433 = vmatprep.subr.mxu0 0.0
    %1434 = vmatpush1.xpose.msra.mxu0 0.0
    %1435 = vmatprep.subr.mxu0 0.0
    %1436 = vmatpush1.xpose.msra.mxu0 0.0
    %1437 = vmatprep.subr.mxu0 0.0
    %1438 = vmatpush1.xpose.msra.mxu0 0.0
    %1439 = vmatprep.subr.mxu0 0.0
    %1440 = vmatpush1.xpose.msra.mxu0 0.0
    %1441 = vmatprep.subr.mxu0 0.0
    %1442 = vmatpush1.xpose.msra.mxu0 0.0
    %1443 = vmatprep.subr.mxu0 0.0
    %1444 = vmatpush1.xpose.msra.mxu0 0.0
    %1445 = vmatprep.subr.mxu0 0.0
    %1446 = vmatpush1.xpose.msra.mxu0 0.0
    %1447 = vmatprep.subr.mxu0 0.0
    %1448 = vmatpush1.xpose.msra.mxu0 0.0
    %1449 = vmatprep.subr.mxu0 0.0
    %1450 = vmatpush1.xpose.msra.mxu0 0.0
    %1451 = vmatprep.subr.mxu0 0.0
    %1452 = vmatpush1.xpose.msra.mxu0 0.0
    %1453 = vmatprep.subr.mxu0 0.0
    %1454 = vmatpush1.xpose.msra.mxu0 0.0
    %1455 = vmatprep.subr.mxu0 0.0
    %1456 = vmatpush1.xpose.msra.mxu0 0.0
    %1457 = vmatprep.subr.mxu0 0.0
    %1458 = vmatpush1.xpose.msra.mxu0 0.0
    %1459 = vmatprep.subr.mxu0 0.0
    %1460 = vmatpush1.xpose.msra.mxu0 0.0
    %1461 = vmatprep.subr.mxu0 0.0
    %1462 = vmatpush1.xpose.msra.mxu0 0.0
    %1463 = vmatprep.subr.mxu0 0.0
    %1464 = vmatpush1.xpose.msra.mxu0 0.0
    %1465 = vmatprep.subr.mxu0 0.0
    %1466 = vmatpush1.xpose.msra.mxu0 0.0
    %1467 = vmatprep.subr.mxu0 0.0
    %1468 = vmatpush1.xpose.msra.mxu0 0.0
    %1469 = vmatprep.mubr.f32.mxu0 0.0
    %1470 = vmatmul.mubr.f32.gmra.mrb[0].mxu0 %v1397
    %v1471 = vpop.f32.mrb[0].mxu0
    %v1472 = vadd.f32 0.0, %v1471
    %v1473 = vpop.f32.mrb[0].mxu0
    %1474 = vmatprep.mubr.f32.mxu0 0.0
    %1475 = vmatmul.mubr.f32.gmra.mrb[0].mxu0 %v1400
    %v1476 = vpop.f32.mrb[0].mxu0
    %v1477 = vadd.f32 0.0, %v1476
    %v1478 = vpop.f32.mrb[0].mxu0
    %1479 = vdwg.mxu0
    %v1480 = vsel %vm634, %v1472, -inf
    %1481 = vmax.xlane.f32.xlu0 %v1480
    %v1482 = vpop.xlane.xlu0 %1481
    %v1483 = vsel %vm634, %v1477, -inf
    %1484 = vmax.xlane.f32.xlu0 %v1483
    %v1485 = vpop.xlane.xlu0 %1484
    %v1486 = vsub.f32 %v1472, %v1482
    %v1487 = vsub.f32 %v1477, %v1485
    %v1488 = vmul.f32 %v1486, 1.442695
    %v1489 = vpow.pop %v1488
    %v1490 = vmul.f32 %v1487, 1.442695
    %v1491 = vpow.pop %v1490
    %v1492 = vsel %vm634, %v1489, 0.0
    %1493 = vadd.xlane.f32.xlu0 %v1492
    %v1494 = vpop.xlane.xlu0 %1493
    %v1495 = vsel %vm634, %v1491, 0.0
    %1496 = vadd.xlane.f32.xlu0 %v1495
    %v1497 = vpop.xlane.xlu0 %1496
    %v1498 = vrcp.pop %v1494
    %v1499 = vmul.f32 %v1489, %v1498
    %v1500 = vrcp.pop %v1497
    %v1501 = vmul.f32 %v1491, %v1500
    %1502 = vrot.lane.b32.xlu0 %v389, 120
    %v1503 = vpop.permute.xlu0 %1502
    %1504 = vrot.lane.b32.xlu0 %v394, 120
    %v1505 = vpop.permute.xlu0 %1504
    %1506 = vrot.lane.b32.xlu0 %v504, 120
    %v1507 = vpop.permute.xlu0 %1506
    %v1508 = vsel %vm634, %v1503, 0
    %v1510 = vsel %vm634, %v1505, 0
    %v1512 = vsel %vm634, %v1507, 0
    %1514 = vmatprep.subr.mxu0 0.0
    %1515 = vmatpush1.xpose.msra.mxu0 %v1512
    %1516 = vmatprep.subr.mxu0 0.0
    %1517 = vmatpush1.xpose.msra.mxu0 0.0
    %1518 = vmatprep.subr.mxu0 0.0
    %1519 = vmatpush1.xpose.msra.mxu0 0.0
    %1520 = vmatprep.subr.mxu0 0.0
    %1521 = vmatpush1.xpose.msra.mxu0 0.0
    %1522 = vmatprep.subr.mxu0 0.0
    %1523 = vmatpush1.xpose.msra.mxu0 0.0
    %1524 = vmatprep.subr.mxu0 0.0
    %1525 = vmatpush1.xpose.msra.mxu0 0.0
    %1526 = vmatprep.subr.mxu0 0.0
    %1527 = vmatpush1.xpose.msra.mxu0 0.0
    %1528 = vmatprep.subr.mxu0 0.0
    %1529 = vmatpush1.xpose.msra.mxu0 0.0
    %1530 = vmatprep.subr.mxu0 0.0
    %1531 = vmatpush1.xpose.msra.mxu0 0.0
    %1532 = vmatprep.subr.mxu0 0.0
    %1533 = vmatpush1.xpose.msra.mxu0 0.0
    %1534 = vmatprep.subr.mxu0 0.0
    %1535 = vmatpush1.xpose.msra.mxu0 0.0
    %1536 = vmatprep.subr.mxu0 0.0
    %1537 = vmatpush1.xpose.msra.mxu0 0.0
    %1538 = vmatprep.subr.mxu0 0.0
    %1539 = vmatpush1.xpose.msra.mxu0 0.0
    %1540 = vmatprep.subr.mxu0 0.0
    %1541 = vmatpush1.xpose.msra.mxu0 0.0
    %1542 = vmatprep.subr.mxu0 0.0
    %1543 = vmatpush1.xpose.msra.mxu0 0.0
    %1544 = vmatprep.subr.mxu0 0.0
    %1545 = vmatpush1.xpose.msra.mxu0 0.0
    %1546 = vmatprep.subr.mxu0 0.0
    %1547 = vmatpush1.xpose.msra.mxu0 0.0
    %1548 = vmatprep.subr.mxu0 0.0
    %1549 = vmatpush1.xpose.msra.mxu0 0.0
    %1550 = vmatprep.subr.mxu0 0.0
    %1551 = vmatpush1.xpose.msra.mxu0 0.0
    %1552 = vmatprep.subr.mxu0 0.0
    %1553 = vmatpush1.xpose.msra.mxu0 0.0
    %1554 = vmatprep.subr.mxu0 0.0
    %1555 = vmatpush1.xpose.msra.mxu0 0.0
    %1556 = vmatprep.subr.mxu0 0.0
    %1557 = vmatpush1.xpose.msra.mxu0 0.0
    %1558 = vmatprep.subr.mxu0 0.0
    %1559 = vmatpush1.xpose.msra.mxu0 0.0
    %1560 = vmatprep.subr.mxu0 0.0
    %1561 = vmatpush1.xpose.msra.mxu0 0.0
    %1562 = vmatprep.subr.mxu0 0.0
    %1563 = vmatpush1.xpose.msra.mxu0 0.0
    %1564 = vmatprep.subr.mxu0 0.0
    %1565 = vmatpush1.xpose.msra.mxu0 0.0
    %1566 = vmatprep.subr.mxu0 0.0
    %1567 = vmatpush1.xpose.msra.mxu0 0.0
    %1568 = vmatprep.subr.mxu0 0.0
    %1569 = vmatpush1.xpose.msra.mxu0 0.0
    %1570 = vmatprep.subr.mxu0 0.0
    %1571 = vmatpush1.xpose.msra.mxu0 0.0
    %1572 = vmatprep.subr.mxu0 0.0
    %1573 = vmatpush1.xpose.msra.mxu0 0.0
    %1574 = vmatprep.subr.mxu0 0.0
    %1575 = vmatpush1.xpose.msra.mxu0 0.0
    %1576 = vmatprep.subr.mxu0 0.0
    %1577 = vmatpush1.xpose.msra.mxu0 0.0
    %1578 = vmatprep.mubr.f32.mxu0 0.0
    %1579 = vmatmul.mubr.f32.gmra.mrb[0].mxu0 %v1508
    %v1580 = vpop.f32.mrb[0].mxu0
    %v1581 = vadd.f32 0.0, %v1580
    %v1582 = vpop.f32.mrb[0].mxu0
    %1583 = vmatprep.mubr.f32.mxu0 0.0
    %1584 = vmatmul.mubr.f32.gmra.mrb[0].mxu0 %v1510
    %v1585 = vpop.f32.mrb[0].mxu0
    %v1586 = vadd.f32 0.0, %v1585
    %v1587 = vpop.f32.mrb[0].mxu0
    %1588 = vdwg.mxu0
    %v1589 = vsel %vm634, %v1581, -inf
    %1590 = vmax.xlane.f32.xlu0 %v1589
    %v1591 = vpop.xlane.xlu0 %1590
    %v1592 = vsel %vm634, %v1586, -inf
    %1593 = vmax.xlane.f32.xlu0 %v1592
    %v1594 = vpop.xlane.xlu0 %1593
    %v1595 = vsub.f32 %v1581, %v1591
    %v1596 = vsub.f32 %v1586, %v1594
    %v1597 = vmul.f32 %v1595, 1.442695
    %v1598 = vpow.pop %v1597
    %v1599 = vmul.f32 %v1596, 1.442695
    %v1600 = vpow.pop %v1599
    %v1601 = vsel %vm634, %v1598, 0.0
    %1602 = vadd.xlane.f32.xlu0 %v1601
    %v1603 = vpop.xlane.xlu0 %1602
    %v1604 = vsel %vm634, %v1600, 0.0
    %1605 = vadd.xlane.f32.xlu0 %v1604
    %v1606 = vpop.xlane.xlu0 %1605
    %v1607 = vrcp.pop %v1603
    %v1608 = vmul.f32 %v1598, %v1607
    %v1609 = vrcp.pop %v1606
    %v1610 = vmul.f32 %v1600, %v1609
    %v1612 = vsel %vm634, %v1608, 0
    %v1615 = vsel %vm634, %v1610, 0
    %1617 = vmatprep.subr.mxu0 0.0
    %1618 = vmatpush1.msra.mxu0 %v617
    %1619 = vmatprep.subr.mxu0 0.0
    %1620 = vmatpush1.msra.mxu0 0.0
    %1621 = vmatprep.subr.mxu0 0.0
    %1622 = vmatpush1.msra.mxu0 0.0
    %1623 = vmatprep.subr.mxu0 0.0
    %1624 = vmatpush1.msra.mxu0 0.0
    %1625 = vmatprep.subr.mxu0 0.0
    %1626 = vmatpush1.msra.mxu0 0.0
    %1627 = vmatprep.subr.mxu0 0.0
    %1628 = vmatpush1.msra.mxu0 0.0
    %1629 = vmatprep.subr.mxu0 0.0
    %1630 = vmatpush1.msra.mxu0 0.0
    %1631 = vmatprep.subr.mxu0 0.0
    %1632 = vmatpush1.msra.mxu0 0.0
    %1633 = vmatprep.subr.mxu0 0.0
    %1634 = vmatpush1.msra.mxu0 0.0
    %1635 = vmatprep.subr.mxu0 0.0
    %1636 = vmatpush1.msra.mxu0 0.0
    %1637 = vmatprep.subr.mxu0 0.0
    %1638 = vmatpush1.msra.mxu0 0.0
    %1639 = vmatprep.subr.mxu0 0.0
    %1640 = vmatpush1.msra.mxu0 0.0
    %1641 = vmatprep.subr.mxu0 0.0
    %1642 = vmatpush1.msra.mxu0 0.0
    %1643 = vmatprep.subr.mxu0 0.0
    %1644 = vmatpush1.msra.mxu0 0.0
    %1645 = vmatprep.subr.mxu0 0.0
    %1646 = vmatpush1.msra.mxu0 0.0
    %1647 = vmatprep.subr.mxu0 0.0
    %1648 = vmatpush1.msra.mxu0 0.0
    %1649 = vmatprep.subr.mxu0 0.0
    %1650 = vmatpush1.msra.mxu0 0.0
    %1651 = vmatprep.subr.mxu0 0.0
    %1652 = vmatpush1.msra.mxu0 0.0
    %1653 = vmatprep.subr.mxu0 0.0
    %1654 = vmatpush1.msra.mxu0 0.0
    %1655 = vmatprep.subr.mxu0 0.0
    %1656 = vmatpush1.msra.mxu0 0.0
    %1657 = vmatprep.subr.mxu0 0.0
    %1658 = vmatpush1.msra.mxu0 0.0
    %1659 = vmatprep.subr.mxu0 0.0
    %1660 = vmatpush1.msra.mxu0 0.0
    %1661 = vmatprep.subr.mxu0 0.0
    %1662 = vmatpush1.msra.mxu0 0.0
    %1663 = vmatprep.subr.mxu0 0.0
    %1664 = vmatpush1.msra.mxu0 0.0
    %1665 = vmatprep.subr.mxu0 0.0
    %1666 = vmatpush1.msra.mxu0 0.0
    %1667 = vmatprep.subr.mxu0 0.0
    %1668 = vmatpush1.msra.mxu0 0.0
    %1669 = vmatprep.subr.mxu0 0.0
    %1670 = vmatpush1.msra.mxu0 0.0
    %1671 = vmatprep.subr.mxu0 0.0
    %1672 = vmatpush1.msra.mxu0 0.0
    %1673 = vmatprep.subr.mxu0 0.0
    %1674 = vmatpush1.msra.mxu0 0.0
    %1675 = vmatprep.subr.mxu0 0.0
    %1676 = vmatpush1.msra.mxu0 0.0
    %1677 = vmatprep.subr.mxu0 0.0
    %1678 = vmatpush1.msra.mxu0 0.0
    %1679 = vmatprep.subr.mxu0 0.0
    %1680 = vmatpush1.msra.mxu0 0.0
    %1681 = vmatprep.mubr.f32.mxu0 0.0
    %1682 = vmatmul.mubr.f32.gmra.mrb[0].mxu0 %v1612
    %v1683 = vpop.f32.mrb[0].mxu0
    %v1684 = vadd.f32 0.0, %v1683
    %v1685 = vpop.f32.mrb[0].mxu0
    %1686 = vmatprep.mubr.f32.mxu0 0.0
    %1687 = vmatmul.mubr.f32.gmra.mrb[0].mxu0 %v1615
    %v1688 = vpop.f32.mrb[0].mxu0
    %v1689 = vadd.f32 0.0, %v1688
    %v1690 = vpop.f32.mrb[0].mxu0
    %1691 = vdwg.mxu0
    %v1693 = vsel %vm634, %v1499, 0
    %v1696 = vsel %vm634, %v1501, 0
    %1698 = vmatprep.subr.mxu0 0.0
    %1699 = vmatpush1.msra.mxu0 %v610
    %1700 = vmatprep.subr.mxu0 0.0
    %1701 = vmatpush1.msra.mxu0 0.0
    %1702 = vmatprep.subr.mxu0 0.0
    %1703 = vmatpush1.msra.mxu0 0.0
    %1704 = vmatprep.subr.mxu0 0.0
    %1705 = vmatpush1.msra.mxu0 0.0
    %1706 = vmatprep.subr.mxu0 0.0
    %1707 = vmatpush1.msra.mxu0 0.0
    %1708 = vmatprep.subr.mxu0 0.0
    %1709 = vmatpush1.msra.mxu0 0.0
    %1710 = vmatprep.subr.mxu0 0.0
    %1711 = vmatpush1.msra.mxu0 0.0
    %1712 = vmatprep.subr.mxu0 0.0
    %1713 = vmatpush1.msra.mxu0 0.0
    %1714 = vmatprep.subr.mxu0 0.0
    %1715 = vmatpush1.msra.mxu0 0.0
    %1716 = vmatprep.subr.mxu0 0.0
    %1717 = vmatpush1.msra.mxu0 0.0
    %1718 = vmatprep.subr.mxu0 0.0
    %1719 = vmatpush1.msra.mxu0 0.0
    %1720 = vmatprep.subr.mxu0 0.0
    %1721 = vmatpush1.msra.mxu0 0.0
    %1722 = vmatprep.subr.mxu0 0.0
    %1723 = vmatpush1.msra.mxu0 0.0
    %1724 = vmatprep.subr.mxu0 0.0
    %1725 = vmatpush1.msra.mxu0 0.0
    %1726 = vmatprep.subr.mxu0 0.0
    %1727 = vmatpush1.msra.mxu0 0.0
    %1728 = vmatprep.subr.mxu0 0.0
    %1729 = vmatpush1.msra.mxu0 0.0
    %1730 = vmatprep.subr.mxu0 0.0
    %1731 = vmatpush1.msra.mxu0 0.0
    %1732 = vmatprep.subr.mxu0 0.0
    %1733 = vmatpush1.msra.mxu0 0.0
    %1734 = vmatprep.subr.mxu0 0.0
    %1735 = vmatpush1.msra.mxu0 0.0
    %1736 = vmatprep.subr.mxu0 0.0
    %1737 = vmatpush1.msra.mxu0 0.0
    %1738 = vmatprep.subr.mxu0 0.0
    %1739 = vmatpush1.msra.mxu0 0.0
    %1740 = vmatprep.subr.mxu0 0.0
    %1741 = vmatpush1.msra.mxu0 0.0
    %1742 = vmatprep.subr.mxu0 0.0
    %1743 = vmatpush1.msra.mxu0 0.0
    %1744 = vmatprep.subr.mxu0 0.0
    %1745 = vmatpush1.msra.mxu0 0.0
    %1746 = vmatprep.subr.mxu0 0.0
    %1747 = vmatpush1.msra.mxu0 0.0
    %1748 = vmatprep.subr.mxu0 0.0
    %1749 = vmatpush1.msra.mxu0 0.0
    %1750 = vmatprep.subr.mxu0 0.0
    %1751 = vmatpush1.msra.mxu0 0.0
    %1752 = vmatprep.subr.mxu0 0.0
    %1753 = vmatpush1.msra.mxu0 0.0
    %1754 = vmatprep.subr.mxu0 0.0
    %1755 = vmatpush1.msra.mxu0 0.0
    %1756 = vmatprep.subr.mxu0 0.0
    %1757 = vmatpush1.msra.mxu0 0.0
    %1758 = vmatprep.subr.mxu0 0.0
    %1759 = vmatpush1.msra.mxu0 0.0
    %1760 = vmatprep.subr.mxu0 0.0
    %1761 = vmatpush1.msra.mxu0 0.0
    %1762 = vmatprep.mubr.f32.mxu0 0.0
    %1763 = vmatmul.mubr.f32.gmra.mrb[0].mxu0 %v1693
    %v1764 = vpop.f32.mrb[0].mxu0
    %v1765 = vadd.f32 %v1684, %v1764
    %v1766 = vpop.f32.mrb[0].mxu0
    %1767 = vmatprep.mubr.f32.mxu0 0.0
    %1768 = vmatmul.mubr.f32.gmra.mrb[0].mxu0 %v1696
    %v1769 = vpop.f32.mrb[0].mxu0
    %v1770 = vadd.f32 %v1689, %v1769
    %v1771 = vpop.f32.mrb[0].mxu0
    %1772 = vdwg.mxu0
    %1773 = vrot.lane.b32.xlu0 %v389, 112
    %v1774 = vpop.permute.xlu0 %1773
    %1775 = vrot.lane.b32.xlu0 %v394, 112
    %v1776 = vpop.permute.xlu0 %1775
    %1777 = vrot.lane.b32.xlu0 %v504, 112
    %v1778 = vpop.permute.xlu0 %1777
    %v1779 = vsel %vm634, %v1774, 0
    %v1781 = vsel %vm634, %v1776, 0
    %v1783 = vsel %vm634, %v1778, 0
    %1785 = vmatprep.subr.mxu0 0.0
    %1786 = vmatpush1.xpose.msra.mxu0 %v1783
    %1787 = vmatprep.subr.mxu0 0.0
    %1788 = vmatpush1.xpose.msra.mxu0 0.0
    %1789 = vmatprep.subr.mxu0 0.0
    %1790 = vmatpush1.xpose.msra.mxu0 0.0
    %1791 = vmatprep.subr.mxu0 0.0
    %1792 = vmatpush1.xpose.msra.mxu0 0.0
    %1793 = vmatprep.subr.mxu0 0.0
    %1794 = vmatpush1.xpose.msra.mxu0 0.0
    %1795 = vmatprep.subr.mxu0 0.0
    %1796 = vmatpush1.xpose.msra.mxu0 0.0
    %1797 = vmatprep.subr.mxu0 0.0
    %1798 = vmatpush1.xpose.msra.mxu0 0.0
    %1799 = vmatprep.subr.mxu0 0.0
    %1800 = vmatpush1.xpose.msra.mxu0 0.0
    %1801 = vmatprep.subr.mxu0 0.0
    %1802 = vmatpush1.xpose.msra.mxu0 0.0
    %1803 = vmatprep.subr.mxu0 0.0
    %1804 = vmatpush1.xpose.msra.mxu0 0.0
    %1805 = vmatprep.subr.mxu0 0.0
    %1806 = vmatpush1.xpose.msra.mxu0 0.0
    %1807 = vmatprep.subr.mxu0 0.0
    %1808 = vmatpush1.xpose.msra.mxu0 0.0
    %1809 = vmatprep.subr.mxu0 0.0
    %1810 = vmatpush1.xpose.msra.mxu0 0.0
    %1811 = vmatprep.subr.mxu0 0.0
    %1812 = vmatpush1.xpose.msra.mxu0 0.0
    %1813 = vmatprep.subr.mxu0 0.0
    %1814 = vmatpush1.xpose.msra.mxu0 0.0
    %1815 = vmatprep.subr.mxu0 0.0
    %1816 = vmatpush1.xpose.msra.mxu0 0.0
    %1817 = vmatprep.subr.mxu0 0.0
    %1818 = vmatpush1.xpose.msra.mxu0 0.0
    %1819 = vmatprep.subr.mxu0 0.0
    %1820 = vmatpush1.xpose.msra.mxu0 0.0
    %1821 = vmatprep.subr.mxu0 0.0
    %1822 = vmatpush1.xpose.msra.mxu0 0.0
    %1823 = vmatprep.subr.mxu0 0.0
    %1824 = vmatpush1.xpose.msra.mxu0 0.0
    %1825 = vmatprep.subr.mxu0 0.0
    %1826 = vmatpush1.xpose.msra.mxu0 0.0
    %1827 = vmatprep.subr.mxu0 0.0
    %1828 = vmatpush1.xpose.msra.mxu0 0.0
    %1829 = vmatprep.subr.mxu0 0.0
    %1830 = vmatpush1.xpose.msra.mxu0 0.0
    %1831 = vmatprep.subr.mxu0 0.0
    %1832 = vmatpush1.xpose.msra.mxu0 0.0
    %1833 = vmatprep.subr.mxu0 0.0
    %1834 = vmatpush1.xpose.msra.mxu0 0.0
    %1835 = vmatprep.subr.mxu0 0.0
    %1836 = vmatpush1.xpose.msra.mxu0 0.0
    %1837 = vmatprep.subr.mxu0 0.0
    %1838 = vmatpush1.xpose.msra.mxu0 0.0
    %1839 = vmatprep.subr.mxu0 0.0
    %1840 = vmatpush1.xpose.msra.mxu0 0.0
    %1841 = vmatprep.subr.mxu0 0.0
    %1842 = vmatpush1.xpose.msra.mxu0 0.0
    %1843 = vmatprep.subr.mxu0 0.0
    %1844 = vmatpush1.xpose.msra.mxu0 0.0
    %1845 = vmatprep.subr.mxu0 0.0
    %1846 = vmatpush1.xpose.msra.mxu0 0.0
    %1847 = vmatprep.subr.mxu0 0.0
    %1848 = vmatpush1.xpose.msra.mxu0 0.0
    %1849 = vmatprep.mubr.f32.mxu0 0.0
    %1850 = vmatmul.mubr.f32.gmra.mrb[0].mxu0 %v1779
    %v1851 = vpop.f32.mrb[0].mxu0
    %v1852 = vadd.f32 0.0, %v1851
    %v1853 = vpop.f32.mrb[0].mxu0
    %1854 = vmatprep.mubr.f32.mxu0 0.0
    %1855 = vmatmul.mubr.f32.gmra.mrb[0].mxu0 %v1781
    %v1856 = vpop.f32.mrb[0].mxu0
    %v1857 = vadd.f32 0.0, %v1856
    %v1858 = vpop.f32.mrb[0].mxu0
    %1859 = vdwg.mxu0
    %v1860 = vsel %vm634, %v1852, -inf
    %1861 = vmax.xlane.f32.xlu0 %v1860
    %v1862 = vpop.xlane.xlu0 %1861
    %v1863 = vsel %vm634, %v1857, -inf
    %1864 = vmax.xlane.f32.xlu0 %v1863
    %v1865 = vpop.xlane.xlu0 %1864
    %v1866 = vsub.f32 %v1852, %v1862
    %v1867 = vsub.f32 %v1857, %v1865
    %v1868 = vmul.f32 %v1866, 1.442695
    %v1869 = vpow.pop %v1868
    %v1870 = vmul.f32 %v1867, 1.442695
    %v1871 = vpow.pop %v1870
    %v1872 = vsel %vm634, %v1869, 0.0
    %1873 = vadd.xlane.f32.xlu0 %v1872
    %v1874 = vpop.xlane.xlu0 %1873
    %v1875 = vsel %vm634, %v1871, 0.0
    %1876 = vadd.xlane.f32.xlu0 %v1875
    %v1877 = vpop.xlane.xlu0 %1876
    %v1878 = vrcp.pop %v1874
    %v1879 = vmul.f32 %v1869, %v1878
    %v1880 = vrcp.pop %v1877
    %v1881 = vmul.f32 %v1871, %v1880
    %v1883 = vsel %vm634, %v1879, 0
    %v1886 = vsel %vm634, %v1881, 0
    %1888 = vmatprep.subr.mxu0 0.0
    %1889 = vmatpush1.msra.mxu0 %v624
    %1890 = vmatprep.subr.mxu0 0.0
    %1891 = vmatpush1.msra.mxu0 0.0
    %1892 = vmatprep.subr.mxu0 0.0
    %1893 = vmatpush1.msra.mxu0 0.0
    %1894 = vmatprep.subr.mxu0 0.0
    %1895 = vmatpush1.msra.mxu0 0.0
    %1896 = vmatprep.subr.mxu0 0.0
    %1897 = vmatpush1.msra.mxu0 0.0
    %1898 = vmatprep.subr.mxu0 0.0
    %1899 = vmatpush1.msra.mxu0 0.0
    %1900 = vmatprep.subr.mxu0 0.0
    %1901 = vmatpush1.msra.mxu0 0.0
    %1902 = vmatprep.subr.mxu0 0.0
    %1903 = vmatpush1.msra.mxu0 0.0
    %1904 = vmatprep.subr.mxu0 0.0
    %1905 = vmatpush1.msra.mxu0 0.0
    %1906 = vmatprep.subr.mxu0 0.0
    %1907 = vmatpush1.msra.mxu0 0.0
    %1908 = vmatprep.subr.mxu0 0.0
    %1909 = vmatpush1.msra.mxu0 0.0
    %1910 = vmatprep.subr.mxu0 0.0
    %1911 = vmatpush1.msra.mxu0 0.0
    %1912 = vmatprep.subr.mxu0 0.0
    %1913 = vmatpush1.msra.mxu0 0.0
    %1914 = vmatprep.subr.mxu0 0.0
    %1915 = vmatpush1.msra.mxu0 0.0
    %1916 = vmatprep.subr.mxu0 0.0
    %1917 = vmatpush1.msra.mxu0 0.0
    %1918 = vmatprep.subr.mxu0 0.0
    %1919 = vmatpush1.msra.mxu0 0.0
    %1920 = vmatprep.subr.mxu0 0.0
    %1921 = vmatpush1.msra.mxu0 0.0
    %1922 = vmatprep.subr.mxu0 0.0
    %1923 = vmatpush1.msra.mxu0 0.0
    %1924 = vmatprep.subr.mxu0 0.0
    %1925 = vmatpush1.msra.mxu0 0.0
    %1926 = vmatprep.subr.mxu0 0.0
    %1927 = vmatpush1.msra.mxu0 0.0
    %1928 = vmatprep.subr.mxu0 0.0
    %1929 = vmatpush1.msra.mxu0 0.0
    %1930 = vmatprep.subr.mxu0 0.0
    %1931 = vmatpush1.msra.mxu0 0.0
    %1932 = vmatprep.subr.mxu0 0.0
    %1933 = vmatpush1.msra.mxu0 0.0
    %1934 = vmatprep.subr.mxu0 0.0
    %1935 = vmatpush1.msra.mxu0 0.0
    %1936 = vmatprep.subr.mxu0 0.0
    %1937 = vmatpush1.msra.mxu0 0.0
    %1938 = vmatprep.subr.mxu0 0.0
    %1939 = vmatpush1.msra.mxu0 0.0
    %1940 = vmatprep.subr.mxu0 0.0
    %1941 = vmatpush1.msra.mxu0 0.0
    %1942 = vmatprep.subr.mxu0 0.0
    %1943 = vmatpush1.msra.mxu0 0.0
    %1944 = vmatprep.subr.mxu0 0.0
    %1945 = vmatpush1.msra.mxu0 0.0
    %1946 = vmatprep.subr.mxu0 0.0
    %1947 = vmatpush1.msra.mxu0 0.0
    %1948 = vmatprep.subr.mxu0 0.0
    %1949 = vmatpush1.msra.mxu0 0.0
    %1950 = vmatprep.subr.mxu0 0.0
    %1951 = vmatpush1.msra.mxu0 0.0
    %1952 = vmatprep.mubr.f32.mxu0 0.0
    %1953 = vmatmul.mubr.f32.gmra.mrb[0].mxu0 %v1883
    %v1954 = vpop.f32.mrb[0].mxu0
    %v1955 = vadd.f32 0.0, %v1954
    %v1956 = vpop.f32.mrb[0].mxu0
    %1957 = vmatprep.mubr.f32.mxu0 0.0
    %1958 = vmatmul.mubr.f32.gmra.mrb[0].mxu0 %v1886
    %v1959 = vpop.f32.mrb[0].mxu0
    %v1960 = vadd.f32 0.0, %v1959
    %v1961 = vpop.f32.mrb[0].mxu0
    %1962 = vdwg.mxu0
    %v1963 = vadd.f32 %v1765, %v1955
    %v1964 = vadd.f32 %v1770, %v1960
    %1965 = vrot.lane.b32.xlu0 %v389, 104
    %v1966 = vpop.permute.xlu0 %1965
    %1967 = vrot.lane.b32.xlu0 %v394, 104
    %v1968 = vpop.permute.xlu0 %1967
    %1969 = vrot.lane.b32.xlu0 %v504, 104
    %v1970 = vpop.permute.xlu0 %1969
    %v1971 = vsel %vm634, %v1966, 0
    %v1973 = vsel %vm634, %v1968, 0
    %v1975 = vsel %vm634, %v1970, 0
    %1977 = vmatprep.subr.mxu0 0.0
    %1978 = vmatpush1.xpose.msra.mxu0 %v1975
    %1979 = vmatprep.subr.mxu0 0.0
    %1980 = vmatpush1.xpose.msra.mxu0 0.0
    %1981 = vmatprep.subr.mxu0 0.0
    %1982 = vmatpush1.xpose.msra.mxu0 0.0
    %1983 = vmatprep.subr.mxu0 0.0
    %1984 = vmatpush1.xpose.msra.mxu0 0.0
    %1985 = vmatprep.subr.mxu0 0.0
    %1986 = vmatpush1.xpose.msra.mxu0 0.0
    %1987 = vmatprep.subr.mxu0 0.0
    %1988 = vmatpush1.xpose.msra.mxu0 0.0
    %1989 = vmatprep.subr.mxu0 0.0
    %1990 = vmatpush1.xpose.msra.mxu0 0.0
    %1991 = vmatprep.subr.mxu0 0.0
    %1992 = vmatpush1.xpose.msra.mxu0 0.0
    %1993 = vmatprep.subr.mxu0 0.0
    %1994 = vmatpush1.xpose.msra.mxu0 0.0
    %1995 = vmatprep.subr.mxu0 0.0
    %1996 = vmatpush1.xpose.msra.mxu0 0.0
    %1997 = vmatprep.subr.mxu0 0.0
    %1998 = vmatpush1.xpose.msra.mxu0 0.0
    %1999 = vmatprep.subr.mxu0 0.0
    %2000 = vmatpush1.xpose.msra.mxu0 0.0
    %2001 = vmatprep.subr.mxu0 0.0
    %2002 = vmatpush1.xpose.msra.mxu0 0.0
    %2003 = vmatprep.subr.mxu0 0.0
    %2004 = vmatpush1.xpose.msra.mxu0 0.0
    %2005 = vmatprep.subr.mxu0 0.0
    %2006 = vmatpush1.xpose.msra.mxu0 0.0
    %2007 = vmatprep.subr.mxu0 0.0
    %2008 = vmatpush1.xpose.msra.mxu0 0.0
    %2009 = vmatprep.subr.mxu0 0.0
    %2010 = vmatpush1.xpose.msra.mxu0 0.0
    %2011 = vmatprep.subr.mxu0 0.0
    %2012 = vmatpush1.xpose.msra.mxu0 0.0
    %2013 = vmatprep.subr.mxu0 0.0
    %2014 = vmatpush1.xpose.msra.mxu0 0.0
    %2015 = vmatprep.subr.mxu0 0.0
    %2016 = vmatpush1.xpose.msra.mxu0 0.0
    %2017 = vmatprep.subr.mxu0 0.0
    %2018 = vmatpush1.xpose.msra.mxu0 0.0
    %2019 = vmatprep.subr.mxu0 0.0
    %2020 = vmatpush1.xpose.msra.mxu0 0.0
    %2021 = vmatprep.subr.mxu0 0.0
    %2022 = vmatpush1.xpose.msra.mxu0 0.0
    %2023 = vmatprep.subr.mxu0 0.0
    %2024 = vmatpush1.xpose.msra.mxu0 0.0
    %2025 = vmatprep.subr.mxu0 0.0
    %2026 = vmatpush1.xpose.msra.mxu0 0.0
    %2027 = vmatprep.subr.mxu0 0.0
    %2028 = vmatpush1.xpose.msra.mxu0 0.0
    %2029 = vmatprep.subr.mxu0 0.0
    %2030 = vmatpush1.xpose.msra.mxu0 0.0
    %2031 = vmatprep.subr.mxu0 0.0
    %2032 = vmatpush1.xpose.msra.mxu0 0.0
    %2033 = vmatprep.subr.mxu0 0.0
    %2034 = vmatpush1.xpose.msra.mxu0 0.0
    %2035 = vmatprep.subr.mxu0 0.0
    %2036 = vmatpush1.xpose.msra.mxu0 0.0
    %2037 = vmatprep.subr.mxu0 0.0
    %2038 = vmatpush1.xpose.msra.mxu0 0.0
    %2039 = vmatprep.subr.mxu0 0.0
    %2040 = vmatpush1.xpose.msra.mxu0 0.0
    %2041 = vmatprep.mubr.f32.mxu0 0.0
    %2042 = vmatmul.mubr.f32.gmra.mrb[0].mxu0 %v1971
    %v2043 = vpop.f32.mrb[0].mxu0
    %v2044 = vadd.f32 0.0, %v2043
    %v2045 = vpop.f32.mrb[0].mxu0
    %2046 = vmatprep.mubr.f32.mxu0 0.0
    %2047 = vmatmul.mubr.f32.gmra.mrb[0].mxu0 %v1973
    %v2048 = vpop.f32.mrb[0].mxu0
    %v2049 = vadd.f32 0.0, %v2048
    %v2050 = vpop.f32.mrb[0].mxu0
    %2051 = vdwg.mxu0
    %v2052 = vsel %vm634, %v2044, -inf
    %2053 = vmax.xlane.f32.xlu0 %v2052
    %v2054 = vpop.xlane.xlu0 %2053
    %v2055 = vsel %vm634, %v2049, -inf
    %2056 = vmax.xlane.f32.xlu0 %v2055
    %v2057 = vpop.xlane.xlu0 %2056
    %v2058 = vsub.f32 %v2044, %v2054
    %v2059 = vsub.f32 %v2049, %v2057
    %v2060 = vmul.f32 %v2058, 1.442695
    %v2061 = vpow.pop %v2060
    %v2062 = vmul.f32 %v2059, 1.442695
    %v2063 = vpow.pop %v2062
    %v2064 = vsel %vm634, %v2061, 0.0
    %2065 = vadd.xlane.f32.xlu0 %v2064
    %v2066 = vpop.xlane.xlu0 %2065
    %v2067 = vsel %vm634, %v2063, 0.0
    %2068 = vadd.xlane.f32.xlu0 %v2067
    %v2069 = vpop.xlane.xlu0 %2068
    %v2070 = vrcp.pop %v2066
    %v2071 = vmul.f32 %v2061, %v2070
    %v2072 = vrcp.pop %v2069
    %v2073 = vmul.f32 %v2063, %v2072
    %v2075 = vsel %vm634, %v2071, 0
    %v2078 = vsel %vm634, %v2073, 0
    %2080 = vmatprep.subr.mxu0 0.0
    %2081 = vmatpush1.msra.mxu0 %v631
    %2082 = vmatprep.subr.mxu0 0.0
    %2083 = vmatpush1.msra.mxu0 0.0
    %2084 = vmatprep.subr.mxu0 0.0
    %2085 = vmatpush1.msra.mxu0 0.0
    %2086 = vmatprep.subr.mxu0 0.0
    %2087 = vmatpush1.msra.mxu0 0.0
    %2088 = vmatprep.subr.mxu0 0.0
    %2089 = vmatpush1.msra.mxu0 0.0
    %2090 = vmatprep.subr.mxu0 0.0
    %2091 = vmatpush1.msra.mxu0 0.0
    %2092 = vmatprep.subr.mxu0 0.0
    %2093 = vmatpush1.msra.mxu0 0.0
    %2094 = vmatprep.subr.mxu0 0.0
    %2095 = vmatpush1.msra.mxu0 0.0
    %2096 = vmatprep.subr.mxu0 0.0
    %2097 = vmatpush1.msra.mxu0 0.0
    %2098 = vmatprep.subr.mxu0 0.0
    %2099 = vmatpush1.msra.mxu0 0.0
    %2100 = vmatprep.subr.mxu0 0.0
    %2101 = vmatpush1.msra.mxu0 0.0
    %2102 = vmatprep.subr.mxu0 0.0
    %2103 = vmatpush1.msra.mxu0 0.0
    %2104 = vmatprep.subr.mxu0 0.0
    %2105 = vmatpush1.msra.mxu0 0.0
    %2106 = vmatprep.subr.mxu0 0.0
    %2107 = vmatpush1.msra.mxu0 0.0
    %2108 = vmatprep.subr.mxu0 0.0
    %2109 = vmatpush1.msra.mxu0 0.0
    %2110 = vmatprep.subr.mxu0 0.0
    %2111 = vmatpush1.msra.mxu0 0.0
    %2112 = vmatprep.subr.mxu0 0.0
    %2113 = vmatpush1.msra.mxu0 0.0
    %2114 = vmatprep.subr.mxu0 0.0
    %2115 = vmatpush1.msra.mxu0 0.0
    %2116 = vmatprep.subr.mxu0 0.0
    %2117 = vmatpush1.msra.mxu0 0.0
    %2118 = vmatprep.subr.mxu0 0.0
    %2119 = vmatpush1.msra.mxu0 0.0
    %2120 = vmatprep.subr.mxu0 0.0
    %2121 = vmatpush1.msra.mxu0 0.0
    %2122 = vmatprep.subr.mxu0 0.0
    %2123 = vmatpush1.msra.mxu0 0.0
    %2124 = vmatprep.subr.mxu0 0.0
    %2125 = vmatpush1.msra.mxu0 0.0
    %2126 = vmatprep.subr.mxu0 0.0
    %2127 = vmatpush1.msra.mxu0 0.0
    %2128 = vmatprep.subr.mxu0 0.0
    %2129 = vmatpush1.msra.mxu0 0.0
    %2130 = vmatprep.subr.mxu0 0.0
    %2131 = vmatpush1.msra.mxu0 0.0
    %2132 = vmatprep.subr.mxu0 0.0
    %2133 = vmatpush1.msra.mxu0 0.0
    %2134 = vmatprep.subr.mxu0 0.0
    %2135 = vmatpush1.msra.mxu0 0.0
    %2136 = vmatprep.subr.mxu0 0.0
    %2137 = vmatpush1.msra.mxu0 0.0
    %2138 = vmatprep.subr.mxu0 0.0
    %2139 = vmatpush1.msra.mxu0 0.0
    %2140 = vmatprep.subr.mxu0 0.0
    %2141 = vmatpush1.msra.mxu0 0.0
    %2142 = vmatprep.subr.mxu0 0.0
    %2143 = vmatpush1.msra.mxu0 0.0
    %2144 = vmatprep.mubr.f32.mxu0 0.0
    %2145 = vmatmul.mubr.f32.gmra.mrb[0].mxu0 %v2075
    %v2146 = vpop.f32.mrb[0].mxu0
    %v2147 = vadd.f32 0.0, %v2146
    %v2148 = vpop.f32.mrb[0].mxu0
    %2149 = vmatprep.mubr.f32.mxu0 0.0
    %2150 = vmatmul.mubr.f32.gmra.mrb[0].mxu0 %v2078
    %v2151 = vpop.f32.mrb[0].mxu0
    %v2152 = vadd.f32 0.0, %v2151
    %v2153 = vpop.f32.mrb[0].mxu0
    %2154 = vdwg.mxu0
    %v2155 = vadd.f32 %v1963, %v2147
    %v2156 = vadd.f32 %v1964, %v2152
    %v2158 = vsel %vm634, %v399, 0
    %v2161 = vsel %vm634, %v404, 0
    %v2164 = vsel %vm634, %v509, 0
    %2166 = vmatprep.subr.mxu0 0.0
    %2167 = vmatpush1.xpose.msra.mxu0 %v2164
    %2168 = vmatprep.subr.mxu0 0.0
    %2169 = vmatpush1.xpose.msra.mxu0 0.0
    %2170 = vmatprep.subr.mxu0 0.0
    %2171 = vmatpush1.xpose.msra.mxu0 0.0
    %2172 = vmatprep.subr.mxu0 0.0
    %2173 = vmatpush1.xpose.msra.mxu0 0.0
    %2174 = vmatprep.subr.mxu0 0.0
    %2175 = vmatpush1.xpose.msra.mxu0 0.0
    %2176 = vmatprep.subr.mxu0 0.0
    %2177 = vmatpush1.xpose.msra.mxu0 0.0
    %2178 = vmatprep.subr.mxu0 0.0
    %2179 = vmatpush1.xpose.msra.mxu0 0.0
    %2180 = vmatprep.subr.mxu0 0.0
    %2181 = vmatpush1.xpose.msra.mxu0 0.0
    %2182 = vmatprep.subr.mxu0 0.0
    %2183 = vmatpush1.xpose.msra.mxu0 0.0
    %2184 = vmatprep.subr.mxu0 0.0
    %2185 = vmatpush1.xpose.msra.mxu0 0.0
    %2186 = vmatprep.subr.mxu0 0.0
    %2187 = vmatpush1.xpose.msra.mxu0 0.0
    %2188 = vmatprep.subr.mxu0 0.0
    %2189 = vmatpush1.xpose.msra.mxu0 0.0
    %2190 = vmatprep.subr.mxu0 0.0
    %2191 = vmatpush1.xpose.msra.mxu0 0.0
    %2192 = vmatprep.subr.mxu0 0.0
    %2193 = vmatpush1.xpose.msra.mxu0 0.0
    %2194 = vmatprep.subr.mxu0 0.0
    %2195 = vmatpush1.xpose.msra.mxu0 0.0
    %2196 = vmatprep.subr.mxu0 0.0
    %2197 = vmatpush1.xpose.msra.mxu0 0.0
    %2198 = vmatprep.subr.mxu0 0.0
    %2199 = vmatpush1.xpose.msra.mxu0 0.0
    %2200 = vmatprep.subr.mxu0 0.0
    %2201 = vmatpush1.xpose.msra.mxu0 0.0
    %2202 = vmatprep.subr.mxu0 0.0
    %2203 = vmatpush1.xpose.msra.mxu0 0.0
    %2204 = vmatprep.subr.mxu0 0.0
    %2205 = vmatpush1.xpose.msra.mxu0 0.0
    %2206 = vmatprep.subr.mxu0 0.0
    %2207 = vmatpush1.xpose.msra.mxu0 0.0
    %2208 = vmatprep.subr.mxu0 0.0
    %2209 = vmatpush1.xpose.msra.mxu0 0.0
    %2210 = vmatprep.subr.mxu0 0.0
    %2211 = vmatpush1.xpose.msra.mxu0 0.0
    %2212 = vmatprep.subr.mxu0 0.0
    %2213 = vmatpush1.xpose.msra.mxu0 0.0
    %2214 = vmatprep.subr.mxu0 0.0
    %2215 = vmatpush1.xpose.msra.mxu0 0.0
    %2216 = vmatprep.subr.mxu0 0.0
    %2217 = vmatpush1.xpose.msra.mxu0 0.0
    %2218 = vmatprep.subr.mxu0 0.0
    %2219 = vmatpush1.xpose.msra.mxu0 0.0
    %2220 = vmatprep.subr.mxu0 0.0
    %2221 = vmatpush1.xpose.msra.mxu0 0.0
    %2222 = vmatprep.subr.mxu0 0.0
    %2223 = vmatpush1.xpose.msra.mxu0 0.0
    %2224 = vmatprep.subr.mxu0 0.0
    %2225 = vmatpush1.xpose.msra.mxu0 0.0
    %2226 = vmatprep.subr.mxu0 0.0
    %2227 = vmatpush1.xpose.msra.mxu0 0.0
    %2228 = vmatprep.subr.mxu0 0.0
    %2229 = vmatpush1.xpose.msra.mxu0 0.0
    %2230 = vmatprep.mubr.f32.mxu0 0.0
    %2231 = vmatmul.mubr.f32.gmra.mrb[0].mxu0 %v2158
    %v2232 = vpop.f32.mrb[0].mxu0
    %v2233 = vadd.f32 0.0, %v2232
    %v2234 = vpop.f32.mrb[0].mxu0
    %2235 = vmatprep.mubr.f32.mxu0 0.0
    %2236 = vmatmul.mubr.f32.gmra.mrb[0].mxu0 %v2161
    %v2237 = vpop.f32.mrb[0].mxu0
    %v2238 = vadd.f32 0.0, %v2237
    %v2239 = vpop.f32.mrb[0].mxu0
    %2240 = vdwg.mxu0
    %v2241 = vsel %vm634, %v2233, -inf
    %2242 = vmax.xlane.f32.xlu0 %v2241
    %v2243 = vpop.xlane.xlu0 %2242
    %v2244 = vsel %vm634, %v2238, -inf
    %2245 = vmax.xlane.f32.xlu0 %v2244
    %v2246 = vpop.xlane.xlu0 %2245
    %v2247 = vsub.f32 %v2233, %v2243
    %v2248 = vsub.f32 %v2238, %v2246
    %v2249 = vmul.f32 %v2247, 1.442695
    %v2250 = vpow.pop %v2249
    %v2251 = vmul.f32 %v2248, 1.442695
    %v2252 = vpow.pop %v2251
    %v2253 = vsel %vm634, %v2250, 0.0
    %2254 = vadd.xlane.f32.xlu0 %v2253
    %v2255 = vpop.xlane.xlu0 %2254
    %v2256 = vsel %vm634, %v2252, 0.0
    %2257 = vadd.xlane.f32.xlu0 %v2256
    %v2258 = vpop.xlane.xlu0 %2257
    %v2259 = vrcp.pop %v2255
    %v2260 = vmul.f32 %v2250, %v2259
    %v2261 = vrcp.pop %v2258
    %v2262 = vmul.f32 %v2252, %v2261
    %2263 = vrot.lane.b32.xlu0 %v399, 120
    %v2264 = vpop.permute.xlu0 %2263
    %2265 = vrot.lane.b32.xlu0 %v404, 120
    %v2266 = vpop.permute.xlu0 %2265
    %2267 = vrot.lane.b32.xlu0 %v509, 120
    %v2268 = vpop.permute.xlu0 %2267
    %v2269 = vsel %vm634, %v2264, 0
    %v2271 = vsel %vm634, %v2266, 0
    %v2273 = vsel %vm634, %v2268, 0
    %2275 = vmatprep.subr.mxu0 0.0
    %2276 = vmatpush1.xpose.msra.mxu0 %v2273
    %2277 = vmatprep.subr.mxu0 0.0
    %2278 = vmatpush1.xpose.msra.mxu0 0.0
    %2279 = vmatprep.subr.mxu0 0.0
    %2280 = vmatpush1.xpose.msra.mxu0 0.0
    %2281 = vmatprep.subr.mxu0 0.0
    %2282 = vmatpush1.xpose.msra.mxu0 0.0
    %2283 = vmatprep.subr.mxu0 0.0
    %2284 = vmatpush1.xpose.msra.mxu0 0.0
    %2285 = vmatprep.subr.mxu0 0.0
    %2286 = vmatpush1.xpose.msra.mxu0 0.0
    %2287 = vmatprep.subr.mxu0 0.0
    %2288 = vmatpush1.xpose.msra.mxu0 0.0
    %2289 = vmatprep.subr.mxu0 0.0
    %2290 = vmatpush1.xpose.msra.mxu0 0.0
    %2291 = vmatprep.subr.mxu0 0.0
    %2292 = vmatpush1.xpose.msra.mxu0 0.0
    %2293 = vmatprep.subr.mxu0 0.0
    %2294 = vmatpush1.xpose.msra.mxu0 0.0
    %2295 = vmatprep.subr.mxu0 0.0
    %2296 = vmatpush1.xpose.msra.mxu0 0.0
    %2297 = vmatprep.subr.mxu0 0.0
    %2298 = vmatpush1.xpose.msra.mxu0 0.0
    %2299 = vmatprep.subr.mxu0 0.0
    %2300 = vmatpush1.xpose.msra.mxu0 0.0
    %2301 = vmatprep.subr.mxu0 0.0
    %2302 = vmatpush1.xpose.msra.mxu0 0.0
    %2303 = vmatprep.subr.mxu0 0.0
    %2304 = vmatpush1.xpose.msra.mxu0 0.0
    %2305 = vmatprep.subr.mxu0 0.0
    %2306 = vmatpush1.xpose.msra.mxu0 0.0
    %2307 = vmatprep.subr.mxu0 0.0
    %2308 = vmatpush1.xpose.msra.mxu0 0.0
    %2309 = vmatprep.subr.mxu0 0.0
    %2310 = vmatpush1.xpose.msra.mxu0 0.0
    %2311 = vmatprep.subr.mxu0 0.0
    %2312 = vmatpush1.xpose.msra.mxu0 0.0
    %2313 = vmatprep.subr.mxu0 0.0
    %2314 = vmatpush1.xpose.msra.mxu0 0.0
    %2315 = vmatprep.subr.mxu0 0.0
    %2316 = vmatpush1.xpose.msra.mxu0 0.0
    %2317 = vmatprep.subr.mxu0 0.0
    %2318 = vmatpush1.xpose.msra.mxu0 0.0
    %2319 = vmatprep.subr.mxu0 0.0
    %2320 = vmatpush1.xpose.msra.mxu0 0.0
    %2321 = vmatprep.subr.mxu0 0.0
    %2322 = vmatpush1.xpose.msra.mxu0 0.0
    %2323 = vmatprep.subr.mxu0 0.0
    %2324 = vmatpush1.xpose.msra.mxu0 0.0
    %2325 = vmatprep.subr.mxu0 0.0
    %2326 = vmatpush1.xpose.msra.mxu0 0.0
    %2327 = vmatprep.subr.mxu0 0.0
    %2328 = vmatpush1.xpose.msra.mxu0 0.0
    %2329 = vmatprep.subr.mxu0 0.0
    %2330 = vmatpush1.xpose.msra.mxu0 0.0
    %2331 = vmatprep.subr.mxu0 0.0
    %2332 = vmatpush1.xpose.msra.mxu0 0.0
    %2333 = vmatprep.subr.mxu0 0.0
    %2334 = vmatpush1.xpose.msra.mxu0 0.0
    %2335 = vmatprep.subr.mxu0 0.0
    %2336 = vmatpush1.xpose.msra.mxu0 0.0
    %2337 = vmatprep.subr.mxu0 0.0
    %2338 = vmatpush1.xpose.msra.mxu0 0.0
    %2339 = vmatprep.mubr.f32.mxu0 0.0
    %2340 = vmatmul.mubr.f32.gmra.mrb[0].mxu0 %v2269
    %v2341 = vpop.f32.mrb[0].mxu0
    %v2342 = vadd.f32 0.0, %v2341
    %v2343 = vpop.f32.mrb[0].mxu0
    %2344 = vmatprep.mubr.f32.mxu0 0.0
    %2345 = vmatmul.mubr.f32.gmra.mrb[0].mxu0 %v2271
    %v2346 = vpop.f32.mrb[0].mxu0
    %v2347 = vadd.f32 0.0, %v2346
    %v2348 = vpop.f32.mrb[0].mxu0
    %2349 = vdwg.mxu0
    %v2350 = vsel %vm634, %v2342, -inf
    %2351 = vmax.xlane.f32.xlu0 %v2350
    %v2352 = vpop.xlane.xlu0 %2351
    %v2353 = vsel %vm634, %v2347, -inf
    %2354 = vmax.xlane.f32.xlu0 %v2353
    %v2355 = vpop.xlane.xlu0 %2354
    %v2356 = vsub.f32 %v2342, %v2352
    %v2357 = vsub.f32 %v2347, %v2355
    %v2358 = vmul.f32 %v2356, 1.442695
    %v2359 = vpow.pop %v2358
    %v2360 = vmul.f32 %v2357, 1.442695
    %v2361 = vpow.pop %v2360
    %v2362 = vsel %vm634, %v2359, 0.0
    %2363 = vadd.xlane.f32.xlu0 %v2362
    %v2364 = vpop.xlane.xlu0 %2363
    %v2365 = vsel %vm634, %v2361, 0.0
    %2366 = vadd.xlane.f32.xlu0 %v2365
    %v2367 = vpop.xlane.xlu0 %2366
    %v2368 = vrcp.pop %v2364
    %v2369 = vmul.f32 %v2359, %v2368
    %v2370 = vrcp.pop %v2367
    %v2371 = vmul.f32 %v2361, %v2370
    %v2373 = vsel %vm634, %v2369, 0
    %v2376 = vsel %vm634, %v2371, 0
    %2378 = vmatprep.subr.mxu0 0.0
    %2379 = vmatpush1.msra.mxu0 %v618
    %2380 = vmatprep.subr.mxu0 0.0
    %2381 = vmatpush1.msra.mxu0 0.0
    %2382 = vmatprep.subr.mxu0 0.0
    %2383 = vmatpush1.msra.mxu0 0.0
    %2384 = vmatprep.subr.mxu0 0.0
    %2385 = vmatpush1.msra.mxu0 0.0
    %2386 = vmatprep.subr.mxu0 0.0
    %2387 = vmatpush1.msra.mxu0 0.0
    %2388 = vmatprep.subr.mxu0 0.0
    %2389 = vmatpush1.msra.mxu0 0.0
    %2390 = vmatprep.subr.mxu0 0.0
    %2391 = vmatpush1.msra.mxu0 0.0
    %2392 = vmatprep.subr.mxu0 0.0
    %2393 = vmatpush1.msra.mxu0 0.0
    %2394 = vmatprep.subr.mxu0 0.0
    %2395 = vmatpush1.msra.mxu0 0.0
    %2396 = vmatprep.subr.mxu0 0.0
    %2397 = vmatpush1.msra.mxu0 0.0
    %2398 = vmatprep.subr.mxu0 0.0
    %2399 = vmatpush1.msra.mxu0 0.0
    %2400 = vmatprep.subr.mxu0 0.0
    %2401 = vmatpush1.msra.mxu0 0.0
    %2402 = vmatprep.subr.mxu0 0.0
    %2403 = vmatpush1.msra.mxu0 0.0
    %2404 = vmatprep.subr.mxu0 0.0
    %2405 = vmatpush1.msra.mxu0 0.0
    %2406 = vmatprep.subr.mxu0 0.0
    %2407 = vmatpush1.msra.mxu0 0.0
    %2408 = vmatprep.subr.mxu0 0.0
    %2409 = vmatpush1.msra.mxu0 0.0
    %2410 = vmatprep.subr.mxu0 0.0
    %2411 = vmatpush1.msra.mxu0 0.0
    %2412 = vmatprep.subr.mxu0 0.0
    %2413 = vmatpush1.msra.mxu0 0.0
    %2414 = vmatprep.subr.mxu0 0.0
    %2415 = vmatpush1.msra.mxu0 0.0
    %2416 = vmatprep.subr.mxu0 0.0
    %2417 = vmatpush1.msra.mxu0 0.0
    %2418 = vmatprep.subr.mxu0 0.0
    %2419 = vmatpush1.msra.mxu0 0.0
    %2420 = vmatprep.subr.mxu0 0.0
    %2421 = vmatpush1.msra.mxu0 0.0
    %2422 = vmatprep.subr.mxu0 0.0
    %2423 = vmatpush1.msra.mxu0 0.0
    %2424 = vmatprep.subr.mxu0 0.0
    %2425 = vmatpush1.msra.mxu0 0.0
    %2426 = vmatprep.subr.mxu0 0.0
    %2427 = vmatpush1.msra.mxu0 0.0
    %2428 = vmatprep.subr.mxu0 0.0
    %2429 = vmatpush1.msra.mxu0 0.0
    %2430 = vmatprep.subr.mxu0 0.0
    %2431 = vmatpush1.msra.mxu0 0.0
    %2432 = vmatprep.subr.mxu0 0.0
    %2433 = vmatpush1.msra.mxu0 0.0
    %2434 = vmatprep.subr.mxu0 0.0
    %2435 = vmatpush1.msra.mxu0 0.0
    %2436 = vmatprep.subr.mxu0 0.0
    %2437 = vmatpush1.msra.mxu0 0.0
    %2438 = vmatprep.subr.mxu0 0.0
    %2439 = vmatpush1.msra.mxu0 0.0
    %2440 = vmatprep.subr.mxu0 0.0
    %2441 = vmatpush1.msra.mxu0 0.0
    %2442 = vmatprep.mubr.f32.mxu0 0.0
    %2443 = vmatmul.mubr.f32.gmra.mrb[0].mxu0 %v2373
    %v2444 = vpop.f32.mrb[0].mxu0
    %v2445 = vadd.f32 0.0, %v2444
    %v2446 = vpop.f32.mrb[0].mxu0
    %2447 = vmatprep.mubr.f32.mxu0 0.0
    %2448 = vmatmul.mubr.f32.gmra.mrb[0].mxu0 %v2376
    %v2449 = vpop.f32.mrb[0].mxu0
    %v2450 = vadd.f32 0.0, %v2449
    %v2451 = vpop.f32.mrb[0].mxu0
    %2452 = vdwg.mxu0
    %v2454 = vsel %vm634, %v2260, 0
    %v2457 = vsel %vm634, %v2262, 0
    %2459 = vmatprep.subr.mxu0 0.0
    %2460 = vmatpush1.msra.mxu0 %v611
    %2461 = vmatprep.subr.mxu0 0.0
    %2462 = vmatpush1.msra.mxu0 0.0
    %2463 = vmatprep.subr.mxu0 0.0
    %2464 = vmatpush1.msra.mxu0 0.0
    %2465 = vmatprep.subr.mxu0 0.0
    %2466 = vmatpush1.msra.mxu0 0.0
    %2467 = vmatprep.subr.mxu0 0.0
    %2468 = vmatpush1.msra.mxu0 0.0
    %2469 = vmatprep.subr.mxu0 0.0
    %2470 = vmatpush1.msra.mxu0 0.0
    %2471 = vmatprep.subr.mxu0 0.0
    %2472 = vmatpush1.msra.mxu0 0.0
    %2473 = vmatprep.subr.mxu0 0.0
    %2474 = vmatpush1.msra.mxu0 0.0
    %2475 = vmatprep.subr.mxu0 0.0
    %2476 = vmatpush1.msra.mxu0 0.0
    %2477 = vmatprep.subr.mxu0 0.0
    %2478 = vmatpush1.msra.mxu0 0.0
    %2479 = vmatprep.subr.mxu0 0.0
    %2480 = vmatpush1.msra.mxu0 0.0
    %2481 = vmatprep.subr.mxu0 0.0
    %2482 = vmatpush1.msra.mxu0 0.0
    %2483 = vmatprep.subr.mxu0 0.0
    %2484 = vmatpush1.msra.mxu0 0.0
    %2485 = vmatprep.subr.mxu0 0.0
    %2486 = vmatpush1.msra.mxu0 0.0
    %2487 = vmatprep.subr.mxu0 0.0
    %2488 = vmatpush1.msra.mxu0 0.0
    %2489 = vmatprep.subr.mxu0 0.0
    %2490 = vmatpush1.msra.mxu0 0.0
    %2491 = vmatprep.subr.mxu0 0.0
    %2492 = vmatpush1.msra.mxu0 0.0
    %2493 = vmatprep.subr.mxu0 0.0
    %2494 = vmatpush1.msra.mxu0 0.0
    %2495 = vmatprep.subr.mxu0 0.0
    %2496 = vmatpush1.msra.mxu0 0.0
    %2497 = vmatprep.subr.mxu0 0.0
    %2498 = vmatpush1.msra.mxu0 0.0
    %2499 = vmatprep.subr.mxu0 0.0
    %2500 = vmatpush1.msra.mxu0 0.0
    %2501 = vmatprep.subr.mxu0 0.0
    %2502 = vmatpush1.msra.mxu0 0.0
    %2503 = vmatprep.subr.mxu0 0.0
    %2504 = vmatpush1.msra.mxu0 0.0
    %2505 = vmatprep.subr.mxu0 0.0
    %2506 = vmatpush1.msra.mxu0 0.0
    %2507 = vmatprep.subr.mxu0 0.0
    %2508 = vmatpush1.msra.mxu0 0.0
    %2509 = vmatprep.subr.mxu0 0.0
    %2510 = vmatpush1.msra.mxu0 0.0
    %2511 = vmatprep.subr.mxu0 0.0
    %2512 = vmatpush1.msra.mxu0 0.0
    %2513 = vmatprep.subr.mxu0 0.0
    %2514 = vmatpush1.msra.mxu0 0.0
    %2515 = vmatprep.subr.mxu0 0.0
    %2516 = vmatpush1.msra.mxu0 0.0
    %2517 = vmatprep.subr.mxu0 0.0
    %2518 = vmatpush1.msra.mxu0 0.0
    %2519 = vmatprep.subr.mxu0 0.0
    %2520 = vmatpush1.msra.mxu0 0.0
    %2521 = vmatprep.subr.mxu0 0.0
    %2522 = vmatpush1.msra.mxu0 0.0
    %2523 = vmatprep.mubr.f32.mxu0 0.0
    %2524 = vmatmul.mubr.f32.gmra.mrb[0].mxu0 %v2454
    %v2525 = vpop.f32.mrb[0].mxu0
    %v2526 = vadd.f32 %v2445, %v2525
    %v2527 = vpop.f32.mrb[0].mxu0
    %2528 = vmatprep.mubr.f32.mxu0 0.0
    %2529 = vmatmul.mubr.f32.gmra.mrb[0].mxu0 %v2457
    %v2530 = vpop.f32.mrb[0].mxu0
    %v2531 = vadd.f32 %v2450, %v2530
    %v2532 = vpop.f32.mrb[0].mxu0
    %2533 = vdwg.mxu0
    %2534 = vrot.lane.b32.xlu0 %v399, 112
    %v2535 = vpop.permute.xlu0 %2534
    %2536 = vrot.lane.b32.xlu0 %v404, 112
    %v2537 = vpop.permute.xlu0 %2536
    %2538 = vrot.lane.b32.xlu0 %v509, 112
    %v2539 = vpop.permute.xlu0 %2538
    %v2540 = vsel %vm634, %v2535, 0
    %v2542 = vsel %vm634, %v2537, 0
    %v2544 = vsel %vm634, %v2539, 0
    %2546 = vmatprep.subr.mxu0 0.0
    %2547 = vmatpush1.xpose.msra.mxu0 %v2544
    %2548 = vmatprep.subr.mxu0 0.0
    %2549 = vmatpush1.xpose.msra.mxu0 0.0
    %2550 = vmatprep.subr.mxu0 0.0
    %2551 = vmatpush1.xpose.msra.mxu0 0.0
    %2552 = vmatprep.subr.mxu0 0.0
    %2553 = vmatpush1.xpose.msra.mxu0 0.0
    %2554 = vmatprep.subr.mxu0 0.0
    %2555 = vmatpush1.xpose.msra.mxu0 0.0
    %2556 = vmatprep.subr.mxu0 0.0
    %2557 = vmatpush1.xpose.msra.mxu0 0.0
    %2558 = vmatprep.subr.mxu0 0.0
    %2559 = vmatpush1.xpose.msra.mxu0 0.0
    %2560 = vmatprep.subr.mxu0 0.0
    %2561 = vmatpush1.xpose.msra.mxu0 0.0
    %2562 = vmatprep.subr.mxu0 0.0
    %2563 = vmatpush1.xpose.msra.mxu0 0.0
    %2564 = vmatprep.subr.mxu0 0.0
    %2565 = vmatpush1.xpose.msra.mxu0 0.0
    %2566 = vmatprep.subr.mxu0 0.0
    %2567 = vmatpush1.xpose.msra.mxu0 0.0
    %2568 = vmatprep.subr.mxu0 0.0
    %2569 = vmatpush1.xpose.msra.mxu0 0.0
    %2570 = vmatprep.subr.mxu0 0.0
    %2571 = vmatpush1.xpose.msra.mxu0 0.0
    %2572 = vmatprep.subr.mxu0 0.0
    %2573 = vmatpush1.xpose.msra.mxu0 0.0
    %2574 = vmatprep.subr.mxu0 0.0
    %2575 = vmatpush1.xpose.msra.mxu0 0.0
    %2576 = vmatprep.subr.mxu0 0.0
    %2577 = vmatpush1.xpose.msra.mxu0 0.0
    %2578 = vmatprep.subr.mxu0 0.0
    %2579 = vmatpush1.xpose.msra.mxu0 0.0
    %2580 = vmatprep.subr.mxu0 0.0
    %2581 = vmatpush1.xpose.msra.mxu0 0.0
    %2582 = vmatprep.subr.mxu0 0.0
    %2583 = vmatpush1.xpose.msra.mxu0 0.0
    %2584 = vmatprep.subr.mxu0 0.0
    %2585 = vmatpush1.xpose.msra.mxu0 0.0
    %2586 = vmatprep.subr.mxu0 0.0
    %2587 = vmatpush1.xpose.msra.mxu0 0.0
    %2588 = vmatprep.subr.mxu0 0.0
    %2589 = vmatpush1.xpose.msra.mxu0 0.0
    %2590 = vmatprep.subr.mxu0 0.0
    %2591 = vmatpush1.xpose.msra.mxu0 0.0
    %2592 = vmatprep.subr.mxu0 0.0
    %2593 = vmatpush1.xpose.msra.mxu0 0.0
    %2594 = vmatprep.subr.mxu0 0.0
    %2595 = vmatpush1.xpose.msra.mxu0 0.0
    %2596 = vmatprep.subr.mxu0 0.0
    %2597 = vmatpush1.xpose.msra.mxu0 0.0
    %2598 = vmatprep.subr.mxu0 0.0
    %2599 = vmatpush1.xpose.msra.mxu0 0.0
    %2600 = vmatprep.subr.mxu0 0.0
    %2601 = vmatpush1.xpose.msra.mxu0 0.0
    %2602 = vmatprep.subr.mxu0 0.0
    %2603 = vmatpush1.xpose.msra.mxu0 0.0
    %2604 = vmatprep.subr.mxu0 0.0
    %2605 = vmatpush1.xpose.msra.mxu0 0.0
    %2606 = vmatprep.subr.mxu0 0.0
    %2607 = vmatpush1.xpose.msra.mxu0 0.0
    %2608 = vmatprep.subr.mxu0 0.0
    %2609 = vmatpush1.xpose.msra.mxu0 0.0
    %2610 = vmatprep.mubr.f32.mxu0 0.0
    %2611 = vmatmul.mubr.f32.gmra.mrb[0].mxu0 %v2540
    %v2612 = vpop.f32.mrb[0].mxu0
    %v2613 = vadd.f32 0.0, %v2612
    %v2614 = vpop.f32.mrb[0].mxu0
    %2615 = vmatprep.mubr.f32.mxu0 0.0
    %2616 = vmatmul.mubr.f32.gmra.mrb[0].mxu0 %v2542
    %v2617 = vpop.f32.mrb[0].mxu0
    %v2618 = vadd.f32 0.0, %v2617
    %v2619 = vpop.f32.mrb[0].mxu0
    %2620 = vdwg.mxu0
    %v2621 = vsel %vm634, %v2613, -inf
    %2622 = vmax.xlane.f32.xlu0 %v2621
    %v2623 = vpop.xlane.xlu0 %2622
    %v2624 = vsel %vm634, %v2618, -inf
    %2625 = vmax.xlane.f32.xlu0 %v2624
    %v2626 = vpop.xlane.xlu0 %2625
    %v2627 = vsub.f32 %v2613, %v2623
    %v2628 = vsub.f32 %v2618, %v2626
    %v2629 = vmul.f32 %v2627, 1.442695
    %v2630 = vpow.pop %v2629
    %v2631 = vmul.f32 %v2628, 1.442695
    %v2632 = vpow.pop %v2631
    %v2633 = vsel %vm634, %v2630, 0.0
    %2634 = vadd.xlane.f32.xlu0 %v2633
    %v2635 = vpop.xlane.xlu0 %2634
    %v2636 = vsel %vm634, %v2632, 0.0
    %2637 = vadd.xlane.f32.xlu0 %v2636
    %v2638 = vpop.xlane.xlu0 %2637
    %v2639 = vrcp.pop %v2635
    %v2640 = vmul.f32 %v2630, %v2639
    %v2641 = vrcp.pop %v2638
    %v2642 = vmul.f32 %v2632, %v2641
    %v2644 = vsel %vm634, %v2640, 0
    %v2647 = vsel %vm634, %v2642, 0
    %2649 = vmatprep.subr.mxu0 0.0
    %2650 = vmatpush1.msra.mxu0 %v625
    %2651 = vmatprep.subr.mxu0 0.0
    %2652 = vmatpush1.msra.mxu0 0.0
    %2653 = vmatprep.subr.mxu0 0.0
    %2654 = vmatpush1.msra.mxu0 0.0
    %2655 = vmatprep.subr.mxu0 0.0
    %2656 = vmatpush1.msra.mxu0 0.0
    %2657 = vmatprep.subr.mxu0 0.0
    %2658 = vmatpush1.msra.mxu0 0.0
    %2659 = vmatprep.subr.mxu0 0.0
    %2660 = vmatpush1.msra.mxu0 0.0
    %2661 = vmatprep.subr.mxu0 0.0
    %2662 = vmatpush1.msra.mxu0 0.0
    %2663 = vmatprep.subr.mxu0 0.0
    %2664 = vmatpush1.msra.mxu0 0.0
    %2665 = vmatprep.subr.mxu0 0.0
    %2666 = vmatpush1.msra.mxu0 0.0
    %2667 = vmatprep.subr.mxu0 0.0
    %2668 = vmatpush1.msra.mxu0 0.0
    %2669 = vmatprep.subr.mxu0 0.0
    %2670 = vmatpush1.msra.mxu0 0.0
    %2671 = vmatprep.subr.mxu0 0.0
    %2672 = vmatpush1.msra.mxu0 0.0
    %2673 = vmatprep.subr.mxu0 0.0
    %2674 = vmatpush1.msra.mxu0 0.0
    %2675 = vmatprep.subr.mxu0 0.0
    %2676 = vmatpush1.msra.mxu0 0.0
    %2677 = vmatprep.subr.mxu0 0.0
    %2678 = vmatpush1.msra.mxu0 0.0
    %2679 = vmatprep.subr.mxu0 0.0
    %2680 = vmatpush1.msra.mxu0 0.0
    %2681 = vmatprep.subr.mxu0 0.0
    %2682 = vmatpush1.msra.mxu0 0.0
    %2683 = vmatprep.subr.mxu0 0.0
    %2684 = vmatpush1.msra.mxu0 0.0
    %2685 = vmatprep.subr.mxu0 0.0
    %2686 = vmatpush1.msra.mxu0 0.0
    %2687 = vmatprep.subr.mxu0 0.0
    %2688 = vmatpush1.msra.mxu0 0.0
    %2689 = vmatprep.subr.mxu0 0.0
    %2690 = vmatpush1.msra.mxu0 0.0
    %2691 = vmatprep.subr.mxu0 0.0
    %2692 = vmatpush1.msra.mxu0 0.0
    %2693 = vmatprep.subr.mxu0 0.0
    %2694 = vmatpush1.msra.mxu0 0.0
    %2695 = vmatprep.subr.mxu0 0.0
    %2696 = vmatpush1.msra.mxu0 0.0
    %2697 = vmatprep.subr.mxu0 0.0
    %2698 = vmatpush1.msra.mxu0 0.0
    %2699 = vmatprep.subr.mxu0 0.0
    %2700 = vmatpush1.msra.mxu0 0.0
    %2701 = vmatprep.subr.mxu0 0.0
    %2702 = vmatpush1.msra.mxu0 0.0
    %2703 = vmatprep.subr.mxu0 0.0
    %2704 = vmatpush1.msra.mxu0 0.0
    %2705 = vmatprep.subr.mxu0 0.0
    %2706 = vmatpush1.msra.mxu0 0.0
    %2707 = vmatprep.subr.mxu0 0.0
    %2708 = vmatpush1.msra.mxu0 0.0
    %2709 = vmatprep.subr.mxu0 0.0
    %2710 = vmatpush1.msra.mxu0 0.0
    %2711 = vmatprep.subr.mxu0 0.0
    %2712 = vmatpush1.msra.mxu0 0.0
    %2713 = vmatprep.mubr.f32.mxu0 0.0
    %2714 = vmatmul.mubr.f32.gmra.mrb[0].mxu0 %v2644
    %v2715 = vpop.f32.mrb[0].mxu0
    %v2716 = vadd.f32 0.0, %v2715
    %v2717 = vpop.f32.mrb[0].mxu0
    %2718 = vmatprep.mubr.f32.mxu0 0.0
    %2719 = vmatmul.mubr.f32.gmra.mrb[0].mxu0 %v2647
    %v2720 = vpop.f32.mrb[0].mxu0
    %v2721 = vadd.f32 0.0, %v2720
    %v2722 = vpop.f32.mrb[0].mxu0
    %2723 = vdwg.mxu0
    %v2724 = vadd.f32 %v2526, %v2716
    %v2725 = vadd.f32 %v2531, %v2721
    %2726 = vrot.lane.b32.xlu0 %v399, 104
    %v2727 = vpop.permute.xlu0 %2726
    %2728 = vrot.lane.b32.xlu0 %v404, 104
    %v2729 = vpop.permute.xlu0 %2728
    %2730 = vrot.lane.b32.xlu0 %v509, 104
    %v2731 = vpop.permute.xlu0 %2730
    %v2732 = vsel %vm634, %v2727, 0
    %v2734 = vsel %vm634, %v2729, 0
    %v2736 = vsel %vm634, %v2731, 0
    %2738 = vmatprep.subr.mxu0 0.0
    %2739 = vmatpush1.xpose.msra.mxu0 %v2736
    %2740 = vmatprep.subr.mxu0 0.0
    %2741 = vmatpush1.xpose.msra.mxu0 0.0
    %2742 = vmatprep.subr.mxu0 0.0
    %2743 = vmatpush1.xpose.msra.mxu0 0.0
    %2744 = vmatprep.subr.mxu0 0.0
    %2745 = vmatpush1.xpose.msra.mxu0 0.0
    %2746 = vmatprep.subr.mxu0 0.0
    %2747 = vmatpush1.xpose.msra.mxu0 0.0
    %2748 = vmatprep.subr.mxu0 0.0
    %2749 = vmatpush1.xpose.msra.mxu0 0.0
    %2750 = vmatprep.subr.mxu0 0.0
    %2751 = vmatpush1.xpose.msra.mxu0 0.0
    %2752 = vmatprep.subr.mxu0 0.0
    %2753 = vmatpush1.xpose.msra.mxu0 0.0
    %2754 = vmatprep.subr.mxu0 0.0
    %2755 = vmatpush1.xpose.msra.mxu0 0.0
    %2756 = vmatprep.subr.mxu0 0.0
    %2757 = vmatpush1.xpose.msra.mxu0 0.0
    %2758 = vmatprep.subr.mxu0 0.0
    %2759 = vmatpush1.xpose.msra.mxu0 0.0
    %2760 = vmatprep.subr.mxu0 0.0
    %2761 = vmatpush1.xpose.msra.mxu0 0.0
    %2762 = vmatprep.subr.mxu0 0.0
    %2763 = vmatpush1.xpose.msra.mxu0 0.0
    %2764 = vmatprep.subr.mxu0 0.0
    %2765 = vmatpush1.xpose.msra.mxu0 0.0
    %2766 = vmatprep.subr.mxu0 0.0
    %2767 = vmatpush1.xpose.msra.mxu0 0.0
    %2768 = vmatprep.subr.mxu0 0.0
    %2769 = vmatpush1.xpose.msra.mxu0 0.0
    %2770 = vmatprep.subr.mxu0 0.0
    %2771 = vmatpush1.xpose.msra.mxu0 0.0
    %2772 = vmatprep.subr.mxu0 0.0
    %2773 = vmatpush1.xpose.msra.mxu0 0.0
    %2774 = vmatprep.subr.mxu0 0.0
    %2775 = vmatpush1.xpose.msra.mxu0 0.0
    %2776 = vmatprep.subr.mxu0 0.0
    %2777 = vmatpush1.xpose.msra.mxu0 0.0
    %2778 = vmatprep.subr.mxu0 0.0
    %2779 = vmatpush1.xpose.msra.mxu0 0.0
    %2780 = vmatprep.subr.mxu0 0.0
    %2781 = vmatpush1.xpose.msra.mxu0 0.0
    %2782 = vmatprep.subr.mxu0 0.0
    %2783 = vmatpush1.xpose.msra.mxu0 0.0
    %2784 = vmatprep.subr.mxu0 0.0
    %2785 = vmatpush1.xpose.msra.mxu0 0.0
    %2786 = vmatprep.subr.mxu0 0.0
    %2787 = vmatpush1.xpose.msra.mxu0 0.0
    %2788 = vmatprep.subr.mxu0 0.0
    %2789 = vmatpush1.xpose.msra.mxu0 0.0
    %2790 = vmatprep.subr.mxu0 0.0
    %2791 = vmatpush1.xpose.msra.mxu0 0.0
    %2792 = vmatprep.subr.mxu0 0.0
    %2793 = vmatpush1.xpose.msra.mxu0 0.0
    %2794 = vmatprep.subr.mxu0 0.0
    %2795 = vmatpush1.xpose.msra.mxu0 0.0
    %2796 = vmatprep.subr.mxu0 0.0
    %2797 = vmatpush1.xpose.msra.mxu0 0.0
    %2798 = vmatprep.subr.mxu0 0.0
    %2799 = vmatpush1.xpose.msra.mxu0 0.0
    %2800 = vmatprep.subr.mxu0 0.0
    %2801 = vmatpush1.xpose.msra.mxu0 0.0
    %2802 = vmatprep.mubr.f32.mxu0 0.0
    %2803 = vmatmul.mubr.f32.gmra.mrb[0].mxu0 %v2732
    %v2804 = vpop.f32.mrb[0].mxu0
    %v2805 = vadd.f32 0.0, %v2804
    %v2806 = vpop.f32.mrb[0].mxu0
    %2807 = vmatprep.mubr.f32.mxu0 0.0
    %2808 = vmatmul.mubr.f32.gmra.mrb[0].mxu0 %v2734
    %v2809 = vpop.f32.mrb[0].mxu0
    %v2810 = vadd.f32 0.0, %v2809
    %v2811 = vpop.f32.mrb[0].mxu0
    %2812 = vdwg.mxu0
    %v2813 = vsel %vm634, %v2805, -inf
    %2814 = vmax.xlane.f32.xlu0 %v2813
    %v2815 = vpop.xlane.xlu0 %2814
    %v2816 = vsel %vm634, %v2810, -inf
    %2817 = vmax.xlane.f32.xlu0 %v2816
    %v2818 = vpop.xlane.xlu0 %2817
    %v2819 = vsub.f32 %v2805, %v2815
    %v2820 = vsub.f32 %v2810, %v2818
    %v2821 = vmul.f32 %v2819, 1.442695
    %v2822 = vpow.pop %v2821
    %v2823 = vmul.f32 %v2820, 1.442695
    %v2824 = vpow.pop %v2823
    %v2825 = vsel %vm634, %v2822, 0.0
    %2826 = vadd.xlane.f32.xlu0 %v2825
    %v2827 = vpop.xlane.xlu0 %2826
    %v2828 = vsel %vm634, %v2824, 0.0
    %2829 = vadd.xlane.f32.xlu0 %v2828
    %v2830 = vpop.xlane.xlu0 %2829
    %v2831 = vrcp.pop %v2827
    %v2832 = vmul.f32 %v2822, %v2831
    %v2833 = vrcp.pop %v2830
    %v2834 = vmul.f32 %v2824, %v2833
    %v2836 = vsel %vm634, %v2832, 0
    %v2839 = vsel %vm634, %v2834, 0
    %2841 = vmatprep.subr.mxu0 0.0
    %2842 = vmatpush1.msra.mxu0 %v632
    %2843 = vmatprep.subr.mxu0 0.0
    %2844 = vmatpush1.msra.mxu0 0.0
    %2845 = vmatprep.subr.mxu0 0.0
    %2846 = vmatpush1.msra.mxu0 0.0
    %2847 = vmatprep.subr.mxu0 0.0
    %2848 = vmatpush1.msra.mxu0 0.0
    %2849 = vmatprep.subr.mxu0 0.0
    %2850 = vmatpush1.msra.mxu0 0.0
    %2851 = vmatprep.subr.mxu0 0.0
    %2852 = vmatpush1.msra.mxu0 0.0
    %2853 = vmatprep.subr.mxu0 0.0
    %2854 = vmatpush1.msra.mxu0 0.0
    %2855 = vmatprep.subr.mxu0 0.0
    %2856 = vmatpush1.msra.mxu0 0.0
    %2857 = vmatprep.subr.mxu0 0.0
    %2858 = vmatpush1.msra.mxu0 0.0
    %2859 = vmatprep.subr.mxu0 0.0
    %2860 = vmatpush1.msra.mxu0 0.0
    %2861 = vmatprep.subr.mxu0 0.0
    %2862 = vmatpush1.msra.mxu0 0.0
    %2863 = vmatprep.subr.mxu0 0.0
    %2864 = vmatpush1.msra.mxu0 0.0
    %2865 = vmatprep.subr.mxu0 0.0
    %2866 = vmatpush1.msra.mxu0 0.0
    %2867 = vmatprep.subr.mxu0 0.0
    %2868 = vmatpush1.msra.mxu0 0.0
    %2869 = vmatprep.subr.mxu0 0.0
    %2870 = vmatpush1.msra.mxu0 0.0
    %2871 = vmatprep.subr.mxu0 0.0
    %2872 = vmatpush1.msra.mxu0 0.0
    %2873 = vmatprep.subr.mxu0 0.0
    %2874 = vmatpush1.msra.mxu0 0.0
    %2875 = vmatprep.subr.mxu0 0.0
    %2876 = vmatpush1.msra.mxu0 0.0
    %2877 = vmatprep.subr.mxu0 0.0
    %2878 = vmatpush1.msra.mxu0 0.0
    %2879 = vmatprep.subr.mxu0 0.0
    %2880 = vmatpush1.msra.mxu0 0.0
    %2881 = vmatprep.subr.mxu0 0.0
    %2882 = vmatpush1.msra.mxu0 0.0
    %2883 = vmatprep.subr.mxu0 0.0
    %2884 = vmatpush1.msra.mxu0 0.0
    %2885 = vmatprep.subr.mxu0 0.0
    %2886 = vmatpush1.msra.mxu0 0.0
    %2887 = vmatprep.subr.mxu0 0.0
    %2888 = vmatpush1.msra.mxu0 0.0
    %2889 = vmatprep.subr.mxu0 0.0
    %2890 = vmatpush1.msra.mxu0 0.0
    %2891 = vmatprep.subr.mxu0 0.0
    %2892 = vmatpush1.msra.mxu0 0.0
    %2893 = vmatprep.subr.mxu0 0.0
    %2894 = vmatpush1.msra.mxu0 0.0
    %2895 = vmatprep.subr.mxu0 0.0
    %2896 = vmatpush1.msra.mxu0 0.0
    %2897 = vmatprep.subr.mxu0 0.0
    %2898 = vmatpush1.msra.mxu0 0.0
    %2899 = vmatprep.subr.mxu0 0.0
    %2900 = vmatpush1.msra.mxu0 0.0
    %2901 = vmatprep.subr.mxu0 0.0
    %2902 = vmatpush1.msra.mxu0 0.0
    %2903 = vmatprep.subr.mxu0 0.0
    %2904 = vmatpush1.msra.mxu0 0.0
    %2905 = vmatprep.mubr.f32.mxu0 0.0
    %2906 = vmatmul.mubr.f32.gmra.mrb[0].mxu0 %v2836
    %v2907 = vpop.f32.mrb[0].mxu0
    %v2908 = vadd.f32 0.0, %v2907
    %v2909 = vpop.f32.mrb[0].mxu0
    %2910 = vmatprep.mubr.f32.mxu0 0.0
    %2911 = vmatmul.mubr.f32.gmra.mrb[0].mxu0 %v2839
    %v2912 = vpop.f32.mrb[0].mxu0
    %v2913 = vadd.f32 0.0, %v2912
    %v2914 = vpop.f32.mrb[0].mxu0
    %2915 = vdwg.mxu0
    %v2916 = vadd.f32 %v2724, %v2908
    %v2917 = vadd.f32 %v2725, %v2913
    %v2919 = vsel %vm634, %v409, 0
    %v2922 = vsel %vm634, %v414, 0
    %v2925 = vsel %vm634, %v514, 0
    %2927 = vmatprep.subr.mxu0 0.0
    %2928 = vmatpush1.xpose.msra.mxu0 %v2925
    %2929 = vmatprep.subr.mxu0 0.0
    %2930 = vmatpush1.xpose.msra.mxu0 0.0
    %2931 = vmatprep.subr.mxu0 0.0
    %2932 = vmatpush1.xpose.msra.mxu0 0.0
    %2933 = vmatprep.subr.mxu0 0.0
    %2934 = vmatpush1.xpose.msra.mxu0 0.0
    %2935 = vmatprep.subr.mxu0 0.0
    %2936 = vmatpush1.xpose.msra.mxu0 0.0
    %2937 = vmatprep.subr.mxu0 0.0
    %2938 = vmatpush1.xpose.msra.mxu0 0.0
    %2939 = vmatprep.subr.mxu0 0.0
    %2940 = vmatpush1.xpose.msra.mxu0 0.0
    %2941 = vmatprep.subr.mxu0 0.0
    %2942 = vmatpush1.xpose.msra.mxu0 0.0
    %2943 = vmatprep.subr.mxu0 0.0
    %2944 = vmatpush1.xpose.msra.mxu0 0.0
    %2945 = vmatprep.subr.mxu0 0.0
    %2946 = vmatpush1.xpose.msra.mxu0 0.0
    %2947 = vmatprep.subr.mxu0 0.0
    %2948 = vmatpush1.xpose.msra.mxu0 0.0
    %2949 = vmatprep.subr.mxu0 0.0
    %2950 = vmatpush1.xpose.msra.mxu0 0.0
    %2951 = vmatprep.subr.mxu0 0.0
    %2952 = vmatpush1.xpose.msra.mxu0 0.0
    %2953 = vmatprep.subr.mxu0 0.0
    %2954 = vmatpush1.xpose.msra.mxu0 0.0
    %2955 = vmatprep.subr.mxu0 0.0
    %2956 = vmatpush1.xpose.msra.mxu0 0.0
    %2957 = vmatprep.subr.mxu0 0.0
    %2958 = vmatpush1.xpose.msra.mxu0 0.0
    %2959 = vmatprep.subr.mxu0 0.0
    %2960 = vmatpush1.xpose.msra.mxu0 0.0
    %2961 = vmatprep.subr.mxu0 0.0
    %2962 = vmatpush1.xpose.msra.mxu0 0.0
    %2963 = vmatprep.subr.mxu0 0.0
    %2964 = vmatpush1.xpose.msra.mxu0 0.0
    %2965 = vmatprep.subr.mxu0 0.0
    %2966 = vmatpush1.xpose.msra.mxu0 0.0
    %2967 = vmatprep.subr.mxu0 0.0
    %2968 = vmatpush1.xpose.msra.mxu0 0.0
    %2969 = vmatprep.subr.mxu0 0.0
    %2970 = vmatpush1.xpose.msra.mxu0 0.0
    %2971 = vmatprep.subr.mxu0 0.0
    %2972 = vmatpush1.xpose.msra.mxu0 0.0
    %2973 = vmatprep.subr.mxu0 0.0
    %2974 = vmatpush1.xpose.msra.mxu0 0.0
    %2975 = vmatprep.subr.mxu0 0.0
    %2976 = vmatpush1.xpose.msra.mxu0 0.0
    %2977 = vmatprep.subr.mxu0 0.0
    %2978 = vmatpush1.xpose.msra.mxu0 0.0
    %2979 = vmatprep.subr.mxu0 0.0
    %2980 = vmatpush1.xpose.msra.mxu0 0.0
    %2981 = vmatprep.subr.mxu0 0.0
    %2982 = vmatpush1.xpose.msra.mxu0 0.0
    %2983 = vmatprep.subr.mxu0 0.0
    %2984 = vmatpush1.xpose.msra.mxu0 0.0
    %2985 = vmatprep.subr.mxu0 0.0
    %2986 = vmatpush1.xpose.msra.mxu0 0.0
    %2987 = vmatprep.subr.mxu0 0.0
    %2988 = vmatpush1.xpose.msra.mxu0 0.0
    %2989 = vmatprep.subr.mxu0 0.0
    %2990 = vmatpush1.xpose.msra.mxu0 0.0
    %2991 = vmatprep.mubr.f32.mxu0 0.0
    %2992 = vmatmul.mubr.f32.gmra.mrb[0].mxu0 %v2919
    %v2993 = vpop.f32.mrb[0].mxu0
    %v2994 = vadd.f32 0.0, %v2993
    %v2995 = vpop.f32.mrb[0].mxu0
    %2996 = vmatprep.mubr.f32.mxu0 0.0
    %2997 = vmatmul.mubr.f32.gmra.mrb[0].mxu0 %v2922
    %v2998 = vpop.f32.mrb[0].mxu0
    %v2999 = vadd.f32 0.0, %v2998
    %v3000 = vpop.f32.mrb[0].mxu0
    %3001 = vdwg.mxu0
    %v3002 = vsel %vm634, %v2994, -inf
    %3003 = vmax.xlane.f32.xlu0 %v3002
    %v3004 = vpop.xlane.xlu0 %3003
    %v3005 = vsel %vm634, %v2999, -inf
    %3006 = vmax.xlane.f32.xlu0 %v3005
    %v3007 = vpop.xlane.xlu0 %3006
    %v3008 = vsub.f32 %v2994, %v3004
    %v3009 = vsub.f32 %v2999, %v3007
    %v3010 = vmul.f32 %v3008, 1.442695
    %v3011 = vpow.pop %v3010
    %v3012 = vmul.f32 %v3009, 1.442695
    %v3013 = vpow.pop %v3012
    %v3014 = vsel %vm634, %v3011, 0.0
    %3015 = vadd.xlane.f32.xlu0 %v3014
    %v3016 = vpop.xlane.xlu0 %3015
    %v3017 = vsel %vm634, %v3013, 0.0
    %3018 = vadd.xlane.f32.xlu0 %v3017
    %v3019 = vpop.xlane.xlu0 %3018
    %v3020 = vrcp.pop %v3016
    %v3021 = vmul.f32 %v3011, %v3020
    %v3022 = vrcp.pop %v3019
    %v3023 = vmul.f32 %v3013, %v3022
    %3024 = vrot.lane.b32.xlu0 %v409, 120
    %v3025 = vpop.permute.xlu0 %3024
    %3026 = vrot.lane.b32.xlu0 %v414, 120
    %v3027 = vpop.permute.xlu0 %3026
    %3028 = vrot.lane.b32.xlu0 %v514, 120
    %v3029 = vpop.permute.xlu0 %3028
    %v3030 = vsel %vm634, %v3025, 0
    %v3032 = vsel %vm634, %v3027, 0
    %v3034 = vsel %vm634, %v3029, 0
    %3036 = vmatprep.subr.mxu0 0.0
    %3037 = vmatpush1.xpose.msra.mxu0 %v3034
    %3038 = vmatprep.subr.mxu0 0.0
    %3039 = vmatpush1.xpose.msra.mxu0 0.0
    %3040 = vmatprep.subr.mxu0 0.0
    %3041 = vmatpush1.xpose.msra.mxu0 0.0
    %3042 = vmatprep.subr.mxu0 0.0
    %3043 = vmatpush1.xpose.msra.mxu0 0.0
    %3044 = vmatprep.subr.mxu0 0.0
    %3045 = vmatpush1.xpose.msra.mxu0 0.0
    %3046 = vmatprep.subr.mxu0 0.0
    %3047 = vmatpush1.xpose.msra.mxu0 0.0
    %3048 = vmatprep.subr.mxu0 0.0
    %3049 = vmatpush1.xpose.msra.mxu0 0.0
    %3050 = vmatprep.subr.mxu0 0.0
    %3051 = vmatpush1.xpose.msra.mxu0 0.0
    %3052 = vmatprep.subr.mxu0 0.0
    %3053 = vmatpush1.xpose.msra.mxu0 0.0
    %3054 = vmatprep.subr.mxu0 0.0
    %3055 = vmatpush1.xpose.msra.mxu0 0.0
    %3056 = vmatprep.subr.mxu0 0.0
    %3057 = vmatpush1.xpose.msra.mxu0 0.0
    %3058 = vmatprep.subr.mxu0 0.0
    %3059 = vmatpush1.xpose.msra.mxu0 0.0
    %3060 = vmatprep.subr.mxu0 0.0
    %3061 = vmatpush1.xpose.msra.mxu0 0.0
    %3062 = vmatprep.subr.mxu0 0.0
    %3063 = vmatpush1.xpose.msra.mxu0 0.0
    %3064 = vmatprep.subr.mxu0 0.0
    %3065 = vmatpush1.xpose.msra.mxu0 0.0
    %3066 = vmatprep.subr.mxu0 0.0
    %3067 = vmatpush1.xpose.msra.mxu0 0.0
    %3068 = vmatprep.subr.mxu0 0.0
    %3069 = vmatpush1.xpose.msra.mxu0 0.0
    %3070 = vmatprep.subr.mxu0 0.0
    %3071 = vmatpush1.xpose.msra.mxu0 0.0
    %3072 = vmatprep.subr.mxu0 0.0
    %3073 = vmatpush1.xpose.msra.mxu0 0.0
    %3074 = vmatprep.subr.mxu0 0.0
    %3075 = vmatpush1.xpose.msra.mxu0 0.0
    %3076 = vmatprep.subr.mxu0 0.0
    %3077 = vmatpush1.xpose.msra.mxu0 0.0
    %3078 = vmatprep.subr.mxu0 0.0
    %3079 = vmatpush1.xpose.msra.mxu0 0.0
    %3080 = vmatprep.subr.mxu0 0.0
    %3081 = vmatpush1.xpose.msra.mxu0 0.0
    %3082 = vmatprep.subr.mxu0 0.0
    %3083 = vmatpush1.xpose.msra.mxu0 0.0
    %3084 = vmatprep.subr.mxu0 0.0
    %3085 = vmatpush1.xpose.msra.mxu0 0.0
    %3086 = vmatprep.subr.mxu0 0.0
    %3087 = vmatpush1.xpose.msra.mxu0 0.0
    %3088 = vmatprep.subr.mxu0 0.0
    %3089 = vmatpush1.xpose.msra.mxu0 0.0
    %3090 = vmatprep.subr.mxu0 0.0
    %3091 = vmatpush1.xpose.msra.mxu0 0.0
    %3092 = vmatprep.subr.mxu0 0.0
    %3093 = vmatpush1.xpose.msra.mxu0 0.0
    %3094 = vmatprep.subr.mxu0 0.0
    %3095 = vmatpush1.xpose.msra.mxu0 0.0
    %3096 = vmatprep.subr.mxu0 0.0
    %3097 = vmatpush1.xpose.msra.mxu0 0.0
    %3098 = vmatprep.subr.mxu0 0.0
    %3099 = vmatpush1.xpose.msra.mxu0 0.0
    %3100 = vmatprep.mubr.f32.mxu0 0.0
    %3101 = vmatmul.mubr.f32.gmra.mrb[0].mxu0 %v3030
    %v3102 = vpop.f32.mrb[0].mxu0
    %v3103 = vadd.f32 0.0, %v3102
    %v3104 = vpop.f32.mrb[0].mxu0
    %3105 = vmatprep.mubr.f32.mxu0 0.0
    %3106 = vmatmul.mubr.f32.gmra.mrb[0].mxu0 %v3032
    %v3107 = vpop.f32.mrb[0].mxu0
    %v3108 = vadd.f32 0.0, %v3107
    %v3109 = vpop.f32.mrb[0].mxu0
    %3110 = vdwg.mxu0
    %v3111 = vsel %vm634, %v3103, -inf
    %3112 = vmax.xlane.f32.xlu0 %v3111
    %v3113 = vpop.xlane.xlu0 %3112
    %v3114 = vsel %vm634, %v3108, -inf
    %3115 = vmax.xlane.f32.xlu0 %v3114
    %v3116 = vpop.xlane.xlu0 %3115
    %v3117 = vsub.f32 %v3103, %v3113
    %v3118 = vsub.f32 %v3108, %v3116
    %v3119 = vmul.f32 %v3117, 1.442695
    %v3120 = vpow.pop %v3119
    %v3121 = vmul.f32 %v3118, 1.442695
    %v3122 = vpow.pop %v3121
    %v3123 = vsel %vm634, %v3120, 0.0
    %3124 = vadd.xlane.f32.xlu0 %v3123
    %v3125 = vpop.xlane.xlu0 %3124
    %v3126 = vsel %vm634, %v3122, 0.0
    %3127 = vadd.xlane.f32.xlu0 %v3126
    %v3128 = vpop.xlane.xlu0 %3127
    %v3129 = vrcp.pop %v3125
    %v3130 = vmul.f32 %v3120, %v3129
    %v3131 = vrcp.pop %v3128
    %v3132 = vmul.f32 %v3122, %v3131
    %v3134 = vsel %vm634, %v3130, 0
    %v3137 = vsel %vm634, %v3132, 0
    %3139 = vmatprep.subr.mxu0 0.0
    %3140 = vmatpush1.msra.mxu0 %v619
    %3141 = vmatprep.subr.mxu0 0.0
    %3142 = vmatpush1.msra.mxu0 0.0
    %3143 = vmatprep.subr.mxu0 0.0
    %3144 = vmatpush1.msra.mxu0 0.0
    %3145 = vmatprep.subr.mxu0 0.0
    %3146 = vmatpush1.msra.mxu0 0.0
    %3147 = vmatprep.subr.mxu0 0.0
    %3148 = vmatpush1.msra.mxu0 0.0
    %3149 = vmatprep.subr.mxu0 0.0
    %3150 = vmatpush1.msra.mxu0 0.0
    %3151 = vmatprep.subr.mxu0 0.0
    %3152 = vmatpush1.msra.mxu0 0.0
    %3153 = vmatprep.subr.mxu0 0.0
    %3154 = vmatpush1.msra.mxu0 0.0
    %3155 = vmatprep.subr.mxu0 0.0
    %3156 = vmatpush1.msra.mxu0 0.0
    %3157 = vmatprep.subr.mxu0 0.0
    %3158 = vmatpush1.msra.mxu0 0.0
    %3159 = vmatprep.subr.mxu0 0.0
    %3160 = vmatpush1.msra.mxu0 0.0
    %3161 = vmatprep.subr.mxu0 0.0
    %3162 = vmatpush1.msra.mxu0 0.0
    %3163 = vmatprep.subr.mxu0 0.0
    %3164 = vmatpush1.msra.mxu0 0.0
    %3165 = vmatprep.subr.mxu0 0.0
    %3166 = vmatpush1.msra.mxu0 0.0
    %3167 = vmatprep.subr.mxu0 0.0
    %3168 = vmatpush1.msra.mxu0 0.0
    %3169 = vmatprep.subr.mxu0 0.0
    %3170 = vmatpush1.msra.mxu0 0.0
    %3171 = vmatprep.subr.mxu0 0.0
    %3172 = vmatpush1.msra.mxu0 0.0
    %3173 = vmatprep.subr.mxu0 0.0
    %3174 = vmatpush1.msra.mxu0 0.0
    %3175 = vmatprep.subr.mxu0 0.0
    %3176 = vmatpush1.msra.mxu0 0.0
    %3177 = vmatprep.subr.mxu0 0.0
    %3178 = vmatpush1.msra.mxu0 0.0
    %3179 = vmatprep.subr.mxu0 0.0
    %3180 = vmatpush1.msra.mxu0 0.0
    %3181 = vmatprep.subr.mxu0 0.0
    %3182 = vmatpush1.msra.mxu0 0.0
    %3183 = vmatprep.subr.mxu0 0.0
    %3184 = vmatpush1.msra.mxu0 0.0
    %3185 = vmatprep.subr.mxu0 0.0
    %3186 = vmatpush1.msra.mxu0 0.0
    %3187 = vmatprep.subr.mxu0 0.0
    %3188 = vmatpush1.msra.mxu0 0.0
    %3189 = vmatprep.subr.mxu0 0.0
    %3190 = vmatpush1.msra.mxu0 0.0
    %3191 = vmatprep.subr.mxu0 0.0
    %3192 = vmatpush1.msra.mxu0 0.0
    %3193 = vmatprep.subr.mxu0 0.0
    %3194 = vmatpush1.msra.mxu0 0.0
    %3195 = vmatprep.subr.mxu0 0.0
    %3196 = vmatpush1.msra.mxu0 0.0
    %3197 = vmatprep.subr.mxu0 0.0
    %3198 = vmatpush1.msra.mxu0 0.0
    %3199 = vmatprep.subr.mxu0 0.0
    %3200 = vmatpush1.msra.mxu0 0.0
    %3201 = vmatprep.subr.mxu0 0.0
    %3202 = vmatpush1.msra.mxu0 0.0
    %3203 = vmatprep.mubr.f32.mxu0 0.0
    %3204 = vmatmul.mubr.f32.gmra.mrb[0].mxu0 %v3134
    %v3205 = vpop.f32.mrb[0].mxu0
    %v3206 = vadd.f32 0.0, %v3205
    %v3207 = vpop.f32.mrb[0].mxu0
    %3208 = vmatprep.mubr.f32.mxu0 0.0
    %3209 = vmatmul.mubr.f32.gmra.mrb[0].mxu0 %v3137
    %v3210 = vpop.f32.mrb[0].mxu0
    %v3211 = vadd.f32 0.0, %v3210
    %v3212 = vpop.f32.mrb[0].mxu0
    %3213 = vdwg.mxu0
    %v3215 = vsel %vm634, %v3021, 0
    %v3218 = vsel %vm634, %v3023, 0
    %3220 = vmatprep.subr.mxu0 0.0
    %3221 = vmatpush1.msra.mxu0 %v612
    %3222 = vmatprep.subr.mxu0 0.0
    %3223 = vmatpush1.msra.mxu0 0.0
    %3224 = vmatprep.subr.mxu0 0.0
    %3225 = vmatpush1.msra.mxu0 0.0
    %3226 = vmatprep.subr.mxu0 0.0
    %3227 = vmatpush1.msra.mxu0 0.0
    %3228 = vmatprep.subr.mxu0 0.0
    %3229 = vmatpush1.msra.mxu0 0.0
    %3230 = vmatprep.subr.mxu0 0.0
    %3231 = vmatpush1.msra.mxu0 0.0
    %3232 = vmatprep.subr.mxu0 0.0
    %3233 = vmatpush1.msra.mxu0 0.0
    %3234 = vmatprep.subr.mxu0 0.0
    %3235 = vmatpush1.msra.mxu0 0.0
    %3236 = vmatprep.subr.mxu0 0.0
    %3237 = vmatpush1.msra.mxu0 0.0
    %3238 = vmatprep.subr.mxu0 0.0
    %3239 = vmatpush1.msra.mxu0 0.0
    %3240 = vmatprep.subr.mxu0 0.0
    %3241 = vmatpush1.msra.mxu0 0.0
    %3242 = vmatprep.subr.mxu0 0.0
    %3243 = vmatpush1.msra.mxu0 0.0
    %3244 = vmatprep.subr.mxu0 0.0
    %3245 = vmatpush1.msra.mxu0 0.0
    %3246 = vmatprep.subr.mxu0 0.0
    %3247 = vmatpush1.msra.mxu0 0.0
    %3248 = vmatprep.subr.mxu0 0.0
    %3249 = vmatpush1.msra.mxu0 0.0
    %3250 = vmatprep.subr.mxu0 0.0
    %3251 = vmatpush1.msra.mxu0 0.0
    %3252 = vmatprep.subr.mxu0 0.0
    %3253 = vmatpush1.msra.mxu0 0.0
    %3254 = vmatprep.subr.mxu0 0.0
    %3255 = vmatpush1.msra.mxu0 0.0
    %3256 = vmatprep.subr.mxu0 0.0
    %3257 = vmatpush1.msra.mxu0 0.0
    %3258 = vmatprep.subr.mxu0 0.0
    %3259 = vmatpush1.msra.mxu0 0.0
    %3260 = vmatprep.subr.mxu0 0.0
    %3261 = vmatpush1.msra.mxu0 0.0
    %3262 = vmatprep.subr.mxu0 0.0
    %3263 = vmatpush1.msra.mxu0 0.0
    %3264 = vmatprep.subr.mxu0 0.0
    %3265 = vmatpush1.msra.mxu0 0.0
    %3266 = vmatprep.subr.mxu0 0.0
    %3267 = vmatpush1.msra.mxu0 0.0
    %3268 = vmatprep.subr.mxu0 0.0
    %3269 = vmatpush1.msra.mxu0 0.0
    %3270 = vmatprep.subr.mxu0 0.0
    %3271 = vmatpush1.msra.mxu0 0.0
    %3272 = vmatprep.subr.mxu0 0.0
    %3273 = vmatpush1.msra.mxu0 0.0
    %3274 = vmatprep.subr.mxu0 0.0
    %3275 = vmatpush1.msra.mxu0 0.0
    %3276 = vmatprep.subr.mxu0 0.0
    %3277 = vmatpush1.msra.mxu0 0.0
    %3278 = vmatprep.subr.mxu0 0.0
    %3279 = vmatpush1.msra.mxu0 0.0
    %3280 = vmatprep.subr.mxu0 0.0
    %3281 = vmatpush1.msra.mxu0 0.0
    %3282 = vmatprep.subr.mxu0 0.0
    %3283 = vmatpush1.msra.mxu0 0.0
    %3284 = vmatprep.mubr.f32.mxu0 0.0
    %3285 = vmatmul.mubr.f32.gmra.mrb[0].mxu0 %v3215
    %v3286 = vpop.f32.mrb[0].mxu0
    %v3287 = vadd.f32 %v3206, %v3286
    %v3288 = vpop.f32.mrb[0].mxu0
    %3289 = vmatprep.mubr.f32.mxu0 0.0
    %3290 = vmatmul.mubr.f32.gmra.mrb[0].mxu0 %v3218
    %v3291 = vpop.f32.mrb[0].mxu0
    %v3292 = vadd.f32 %v3211, %v3291
    %v3293 = vpop.f32.mrb[0].mxu0
    %3294 = vdwg.mxu0
    %3295 = vrot.lane.b32.xlu0 %v409, 112
    %v3296 = vpop.permute.xlu0 %3295
    %3297 = vrot.lane.b32.xlu0 %v414, 112
    %v3298 = vpop.permute.xlu0 %3297
    %3299 = vrot.lane.b32.xlu0 %v514, 112
    %v3300 = vpop.permute.xlu0 %3299
    %v3301 = vsel %vm634, %v3296, 0
    %v3303 = vsel %vm634, %v3298, 0
    %v3305 = vsel %vm634, %v3300, 0
    %3307 = vmatprep.subr.mxu0 0.0
    %3308 = vmatpush1.xpose.msra.mxu0 %v3305
    %3309 = vmatprep.subr.mxu0 0.0
    %3310 = vmatpush1.xpose.msra.mxu0 0.0
    %3311 = vmatprep.subr.mxu0 0.0
    %3312 = vmatpush1.xpose.msra.mxu0 0.0
    %3313 = vmatprep.subr.mxu0 0.0
    %3314 = vmatpush1.xpose.msra.mxu0 0.0
    %3315 = vmatprep.subr.mxu0 0.0
    %3316 = vmatpush1.xpose.msra.mxu0 0.0
    %3317 = vmatprep.subr.mxu0 0.0
    %3318 = vmatpush1.xpose.msra.mxu0 0.0
    %3319 = vmatprep.subr.mxu0 0.0
    %3320 = vmatpush1.xpose.msra.mxu0 0.0
    %3321 = vmatprep.subr.mxu0 0.0
    %3322 = vmatpush1.xpose.msra.mxu0 0.0
    %3323 = vmatprep.subr.mxu0 0.0
    %3324 = vmatpush1.xpose.msra.mxu0 0.0
    %3325 = vmatprep.subr.mxu0 0.0
    %3326 = vmatpush1.xpose.msra.mxu0 0.0
    %3327 = vmatprep.subr.mxu0 0.0
    %3328 = vmatpush1.xpose.msra.mxu0 0.0
    %3329 = vmatprep.subr.mxu0 0.0
    %3330 = vmatpush1.xpose.msra.mxu0 0.0
    %3331 = vmatprep.subr.mxu0 0.0
    %3332 = vmatpush1.xpose.msra.mxu0 0.0
    %3333 = vmatprep.subr.mxu0 0.0
    %3334 = vmatpush1.xpose.msra.mxu0 0.0
    %3335 = vmatprep.subr.mxu0 0.0
    %3336 = vmatpush1.xpose.msra.mxu0 0.0
    %3337 = vmatprep.subr.mxu0 0.0
    %3338 = vmatpush1.xpose.msra.mxu0 0.0
    %3339 = vmatprep.subr.mxu0 0.0
    %3340 = vmatpush1.xpose.msra.mxu0 0.0
    %3341 = vmatprep.subr.mxu0 0.0
    %3342 = vmatpush1.xpose.msra.mxu0 0.0
    %3343 = vmatprep.subr.mxu0 0.0
    %3344 = vmatpush1.xpose.msra.mxu0 0.0
    %3345 = vmatprep.subr.mxu0 0.0
    %3346 = vmatpush1.xpose.msra.mxu0 0.0
    %3347 = vmatprep.subr.mxu0 0.0
    %3348 = vmatpush1.xpose.msra.mxu0 0.0
    %3349 = vmatprep.subr.mxu0 0.0
    %3350 = vmatpush1.xpose.msra.mxu0 0.0
    %3351 = vmatprep.subr.mxu0 0.0
    %3352 = vmatpush1.xpose.msra.mxu0 0.0
    %3353 = vmatprep.subr.mxu0 0.0
    %3354 = vmatpush1.xpose.msra.mxu0 0.0
    %3355 = vmatprep.subr.mxu0 0.0
    %3356 = vmatpush1.xpose.msra.mxu0 0.0
    %3357 = vmatprep.subr.mxu0 0.0
    %3358 = vmatpush1.xpose.msra.mxu0 0.0
    %3359 = vmatprep.subr.mxu0 0.0
    %3360 = vmatpush1.xpose.msra.mxu0 0.0
    %3361 = vmatprep.subr.mxu0 0.0
    %3362 = vmatpush1.xpose.msra.mxu0 0.0
    %3363 = vmatprep.subr.mxu0 0.0
    %3364 = vmatpush1.xpose.msra.mxu0 0.0
    %3365 = vmatprep.subr.mxu0 0.0
    %3366 = vmatpush1.xpose.msra.mxu0 0.0
    %3367 = vmatprep.subr.mxu0 0.0
    %3368 = vmatpush1.xpose.msra.mxu0 0.0
    %3369 = vmatprep.subr.mxu0 0.0
    %3370 = vmatpush1.xpose.msra.mxu0 0.0
    %3371 = vmatprep.mubr.f32.mxu0 0.0
    %3372 = vmatmul.mubr.f32.gmra.mrb[0].mxu0 %v3301
    %v3373 = vpop.f32.mrb[0].mxu0
    %v3374 = vadd.f32 0.0, %v3373
    %v3375 = vpop.f32.mrb[0].mxu0
    %3376 = vmatprep.mubr.f32.mxu0 0.0
    %3377 = vmatmul.mubr.f32.gmra.mrb[0].mxu0 %v3303
    %v3378 = vpop.f32.mrb[0].mxu0
    %v3379 = vadd.f32 0.0, %v3378
    %v3380 = vpop.f32.mrb[0].mxu0
    %3381 = vdwg.mxu0
    %v3382 = vsel %vm634, %v3374, -inf
    %3383 = vmax.xlane.f32.xlu0 %v3382
    %v3384 = vpop.xlane.xlu0 %3383
    %v3385 = vsel %vm634, %v3379, -inf
    %3386 = vmax.xlane.f32.xlu0 %v3385
    %v3387 = vpop.xlane.xlu0 %3386
    %v3388 = vsub.f32 %v3374, %v3384
    %v3389 = vsub.f32 %v3379, %v3387
    %v3390 = vmul.f32 %v3388, 1.442695
    %v3391 = vpow.pop %v3390
    %v3392 = vmul.f32 %v3389, 1.442695
    %v3393 = vpow.pop %v3392
    %v3394 = vsel %vm634, %v3391, 0.0
    %3395 = vadd.xlane.f32.xlu0 %v3394
    %v3396 = vpop.xlane.xlu0 %3395
    %v3397 = vsel %vm634, %v3393, 0.0
    %3398 = vadd.xlane.f32.xlu0 %v3397
    %v3399 = vpop.xlane.xlu0 %3398
    %v3400 = vrcp.pop %v3396
    %v3401 = vmul.f32 %v3391, %v3400
    %v3402 = vrcp.pop %v3399
    %v3403 = vmul.f32 %v3393, %v3402
    %v3405 = vsel %vm634, %v3401, 0
    %v3408 = vsel %vm634, %v3403, 0
    %3410 = vmatprep.subr.mxu0 0.0
    %3411 = vmatpush1.msra.mxu0 %v626
    %3412 = vmatprep.subr.mxu0 0.0
    %3413 = vmatpush1.msra.mxu0 0.0
    %3414 = vmatprep.subr.mxu0 0.0
    %3415 = vmatpush1.msra.mxu0 0.0
    %3416 = vmatprep.subr.mxu0 0.0
    %3417 = vmatpush1.msra.mxu0 0.0
    %3418 = vmatprep.subr.mxu0 0.0
    %3419 = vmatpush1.msra.mxu0 0.0
    %3420 = vmatprep.subr.mxu0 0.0
    %3421 = vmatpush1.msra.mxu0 0.0
    %3422 = vmatprep.subr.mxu0 0.0
    %3423 = vmatpush1.msra.mxu0 0.0
    %3424 = vmatprep.subr.mxu0 0.0
    %3425 = vmatpush1.msra.mxu0 0.0
    %3426 = vmatprep.subr.mxu0 0.0
    %3427 = vmatpush1.msra.mxu0 0.0
    %3428 = vmatprep.subr.mxu0 0.0
    %3429 = vmatpush1.msra.mxu0 0.0
    %3430 = vmatprep.subr.mxu0 0.0
    %3431 = vmatpush1.msra.mxu0 0.0
    %3432 = vmatprep.subr.mxu0 0.0
    %3433 = vmatpush1.msra.mxu0 0.0
    %3434 = vmatprep.subr.mxu0 0.0
    %3435 = vmatpush1.msra.mxu0 0.0
    %3436 = vmatprep.subr.mxu0 0.0
    %3437 = vmatpush1.msra.mxu0 0.0
    %3438 = vmatprep.subr.mxu0 0.0
    %3439 = vmatpush1.msra.mxu0 0.0
    %3440 = vmatprep.subr.mxu0 0.0
    %3441 = vmatpush1.msra.mxu0 0.0
    %3442 = vmatprep.subr.mxu0 0.0
    %3443 = vmatpush1.msra.mxu0 0.0
    %3444 = vmatprep.subr.mxu0 0.0
    %3445 = vmatpush1.msra.mxu0 0.0
    %3446 = vmatprep.subr.mxu0 0.0
    %3447 = vmatpush1.msra.mxu0 0.0
    %3448 = vmatprep.subr.mxu0 0.0
    %3449 = vmatpush1.msra.mxu0 0.0
    %3450 = vmatprep.subr.mxu0 0.0
    %3451 = vmatpush1.msra.mxu0 0.0
    %3452 = vmatprep.subr.mxu0 0.0
    %3453 = vmatpush1.msra.mxu0 0.0
    %3454 = vmatprep.subr.mxu0 0.0
    %3455 = vmatpush1.msra.mxu0 0.0
    %3456 = vmatprep.subr.mxu0 0.0
    %3457 = vmatpush1.msra.mxu0 0.0
    %3458 = vmatprep.subr.mxu0 0.0
    %3459 = vmatpush1.msra.mxu0 0.0
    %3460 = vmatprep.subr.mxu0 0.0
    %3461 = vmatpush1.msra.mxu0 0.0
    %3462 = vmatprep.subr.mxu0 0.0
    %3463 = vmatpush1.msra.mxu0 0.0
    %3464 = vmatprep.subr.mxu0 0.0
    %3465 = vmatpush1.msra.mxu0 0.0
    %3466 = vmatprep.subr.mxu0 0.0
    %3467 = vmatpush1.msra.mxu0 0.0
    %3468 = vmatprep.subr.mxu0 0.0
    %3469 = vmatpush1.msra.mxu0 0.0
    %3470 = vmatprep.subr.mxu0 0.0
    %3471 = vmatpush1.msra.mxu0 0.0
    %3472 = vmatprep.subr.mxu0 0.0
    %3473 = vmatpush1.msra.mxu0 0.0
    %3474 = vmatprep.mubr.f32.mxu0 0.0
    %3475 = vmatmul.mubr.f32.gmra.mrb[0].mxu0 %v3405
    %v3476 = vpop.f32.mrb[0].mxu0
    %v3477 = vadd.f32 0.0, %v3476
    %v3478 = vpop.f32.mrb[0].mxu0
    %3479 = vmatprep.mubr.f32.mxu0 0.0
    %3480 = vmatmul.mubr.f32.gmra.mrb[0].mxu0 %v3408
    %v3481 = vpop.f32.mrb[0].mxu0
    %v3482 = vadd.f32 0.0, %v3481
    %v3483 = vpop.f32.mrb[0].mxu0
    %3484 = vdwg.mxu0
    %v3485 = vadd.f32 %v3287, %v3477
    %v3486 = vadd.f32 %v3292, %v3482
    %3487 = vrot.lane.b32.xlu0 %v409, 104
    %v3488 = vpop.permute.xlu0 %3487
    %3489 = vrot.lane.b32.xlu0 %v414, 104
    %v3490 = vpop.permute.xlu0 %3489
    %3491 = vrot.lane.b32.xlu0 %v514, 104
    %v3492 = vpop.permute.xlu0 %3491
    %v3493 = vsel %vm634, %v3488, 0
    %v3495 = vsel %vm634, %v3490, 0
    %v3497 = vsel %vm634, %v3492, 0
    %3499 = vmatprep.subr.mxu0 0.0
    %3500 = vmatpush1.xpose.msra.mxu0 %v3497
    %3501 = vmatprep.subr.mxu0 0.0
    %3502 = vmatpush1.xpose.msra.mxu0 0.0
    %3503 = vmatprep.subr.mxu0 0.0
    %3504 = vmatpush1.xpose.msra.mxu0 0.0
    %3505 = vmatprep.subr.mxu0 0.0
    %3506 = vmatpush1.xpose.msra.mxu0 0.0
    %3507 = vmatprep.subr.mxu0 0.0
    %3508 = vmatpush1.xpose.msra.mxu0 0.0
    %3509 = vmatprep.subr.mxu0 0.0
    %3510 = vmatpush1.xpose.msra.mxu0 0.0
    %3511 = vmatprep.subr.mxu0 0.0
    %3512 = vmatpush1.xpose.msra.mxu0 0.0
    %3513 = vmatprep.subr.mxu0 0.0
    %3514 = vmatpush1.xpose.msra.mxu0 0.0
    %3515 = vmatprep.subr.mxu0 0.0
    %3516 = vmatpush1.xpose.msra.mxu0 0.0
    %3517 = vmatprep.subr.mxu0 0.0
    %3518 = vmatpush1.xpose.msra.mxu0 0.0
    %3519 = vmatprep.subr.mxu0 0.0
    %3520 = vmatpush1.xpose.msra.mxu0 0.0
    %3521 = vmatprep.subr.mxu0 0.0
    %3522 = vmatpush1.xpose.msra.mxu0 0.0
    %3523 = vmatprep.subr.mxu0 0.0
    %3524 = vmatpush1.xpose.msra.mxu0 0.0
    %3525 = vmatprep.subr.mxu0 0.0
    %3526 = vmatpush1.xpose.msra.mxu0 0.0
    %3527 = vmatprep.subr.mxu0 0.0
    %3528 = vmatpush1.xpose.msra.mxu0 0.0
    %3529 = vmatprep.subr.mxu0 0.0
    %3530 = vmatpush1.xpose.msra.mxu0 0.0
    %3531 = vmatprep.subr.mxu0 0.0
    %3532 = vmatpush1.xpose.msra.mxu0 0.0
    %3533 = vmatprep.subr.mxu0 0.0
    %3534 = vmatpush1.xpose.msra.mxu0 0.0
    %3535 = vmatprep.subr.mxu0 0.0
    %3536 = vmatpush1.xpose.msra.mxu0 0.0
    %3537 = vmatprep.subr.mxu0 0.0
    %3538 = vmatpush1.xpose.msra.mxu0 0.0
    %3539 = vmatprep.subr.mxu0 0.0
    %3540 = vmatpush1.xpose.msra.mxu0 0.0
    %3541 = vmatprep.subr.mxu0 0.0
    %3542 = vmatpush1.xpose.msra.mxu0 0.0
    %3543 = vmatprep.subr.mxu0 0.0
    %3544 = vmatpush1.xpose.msra.mxu0 0.0
    %3545 = vmatprep.subr.mxu0 0.0
    %3546 = vmatpush1.xpose.msra.mxu0 0.0
    %3547 = vmatprep.subr.mxu0 0.0
    %3548 = vmatpush1.xpose.msra.mxu0 0.0
    %3549 = vmatprep.subr.mxu0 0.0
    %3550 = vmatpush1.xpose.msra.mxu0 0.0
    %3551 = vmatprep.subr.mxu0 0.0
    %3552 = vmatpush1.xpose.msra.mxu0 0.0
    %3553 = vmatprep.subr.mxu0 0.0
    %3554 = vmatpush1.xpose.msra.mxu0 0.0
    %3555 = vmatprep.subr.mxu0 0.0
    %3556 = vmatpush1.xpose.msra.mxu0 0.0
    %3557 = vmatprep.subr.mxu0 0.0
    %3558 = vmatpush1.xpose.msra.mxu0 0.0
    %3559 = vmatprep.subr.mxu0 0.0
    %3560 = vmatpush1.xpose.msra.mxu0 0.0
    %3561 = vmatprep.subr.mxu0 0.0
    %3562 = vmatpush1.xpose.msra.mxu0 0.0
    %3563 = vmatprep.mubr.f32.mxu0 0.0
    %3564 = vmatmul.mubr.f32.gmra.mrb[0].mxu0 %v3493
    %v3565 = vpop.f32.mrb[0].mxu0
    %v3566 = vadd.f32 0.0, %v3565
    %v3567 = vpop.f32.mrb[0].mxu0
    %3568 = vmatprep.mubr.f32.mxu0 0.0
    %3569 = vmatmul.mubr.f32.gmra.mrb[0].mxu0 %v3495
    %v3570 = vpop.f32.mrb[0].mxu0
    %v3571 = vadd.f32 0.0, %v3570
    %v3572 = vpop.f32.mrb[0].mxu0
    %3573 = vdwg.mxu0
    %v3574 = vsel %vm634, %v3566, -inf
    %3575 = vmax.xlane.f32.xlu0 %v3574
    %v3576 = vpop.xlane.xlu0 %3575
    %v3577 = vsel %vm634, %v3571, -inf
    %3578 = vmax.xlane.f32.xlu0 %v3577
    %v3579 = vpop.xlane.xlu0 %3578
    %v3580 = vsub.f32 %v3566, %v3576
    %v3581 = vsub.f32 %v3571, %v3579
    %v3582 = vmul.f32 %v3580, 1.442695
    %v3583 = vpow.pop %v3582
    %v3584 = vmul.f32 %v3581, 1.442695
    %v3585 = vpow.pop %v3584
    %v3586 = vsel %vm634, %v3583, 0.0
    %3587 = vadd.xlane.f32.xlu0 %v3586
    %v3588 = vpop.xlane.xlu0 %3587
    %v3589 = vsel %vm634, %v3585, 0.0
    %3590 = vadd.xlane.f32.xlu0 %v3589
    %v3591 = vpop.xlane.xlu0 %3590
    %v3592 = vrcp.pop %v3588
    %v3593 = vmul.f32 %v3583, %v3592
    %v3594 = vrcp.pop %v3591
    %v3595 = vmul.f32 %v3585, %v3594
    %v3597 = vsel %vm634, %v3593, 0
    %v3600 = vsel %vm634, %v3595, 0
    %3602 = vmatprep.subr.mxu0 0.0
    %3603 = vmatpush1.msra.mxu0 %v633
    %3604 = vmatprep.subr.mxu0 0.0
    %3605 = vmatpush1.msra.mxu0 0.0
    %3606 = vmatprep.subr.mxu0 0.0
    %3607 = vmatpush1.msra.mxu0 0.0
    %3608 = vmatprep.subr.mxu0 0.0
    %3609 = vmatpush1.msra.mxu0 0.0
    %3610 = vmatprep.subr.mxu0 0.0
    %3611 = vmatpush1.msra.mxu0 0.0
    %3612 = vmatprep.subr.mxu0 0.0
    %3613 = vmatpush1.msra.mxu0 0.0
    %3614 = vmatprep.subr.mxu0 0.0
    %3615 = vmatpush1.msra.mxu0 0.0
    %3616 = vmatprep.subr.mxu0 0.0
    %3617 = vmatpush1.msra.mxu0 0.0
    %3618 = vmatprep.subr.mxu0 0.0
    %3619 = vmatpush1.msra.mxu0 0.0
    %3620 = vmatprep.subr.mxu0 0.0
    %3621 = vmatpush1.msra.mxu0 0.0
    %3622 = vmatprep.subr.mxu0 0.0
    %3623 = vmatpush1.msra.mxu0 0.0
    %3624 = vmatprep.subr.mxu0 0.0
    %3625 = vmatpush1.msra.mxu0 0.0
    %3626 = vmatprep.subr.mxu0 0.0
    %3627 = vmatpush1.msra.mxu0 0.0
    %3628 = vmatprep.subr.mxu0 0.0
    %3629 = vmatpush1.msra.mxu0 0.0
    %3630 = vmatprep.subr.mxu0 0.0
    %3631 = vmatpush1.msra.mxu0 0.0
    %3632 = vmatprep.subr.mxu0 0.0
    %3633 = vmatpush1.msra.mxu0 0.0
    %3634 = vmatprep.subr.mxu0 0.0
    %3635 = vmatpush1.msra.mxu0 0.0
    %3636 = vmatprep.subr.mxu0 0.0
    %3637 = vmatpush1.msra.mxu0 0.0
    %3638 = vmatprep.subr.mxu0 0.0
    %3639 = vmatpush1.msra.mxu0 0.0
    %3640 = vmatprep.subr.mxu0 0.0
    %3641 = vmatpush1.msra.mxu0 0.0
    %3642 = vmatprep.subr.mxu0 0.0
    %3643 = vmatpush1.msra.mxu0 0.0
    %3644 = vmatprep.subr.mxu0 0.0
    %3645 = vmatpush1.msra.mxu0 0.0
    %3646 = vmatprep.subr.mxu0 0.0
    %3647 = vmatpush1.msra.mxu0 0.0
    %3648 = vmatprep.subr.mxu0 0.0
    %3649 = vmatpush1.msra.mxu0 0.0
    %3650 = vmatprep.subr.mxu0 0.0
    %3651 = vmatpush1.msra.mxu0 0.0
    %3652 = vmatprep.subr.mxu0 0.0
    %3653 = vmatpush1.msra.mxu0 0.0
    %3654 = vmatprep.subr.mxu0 0.0
    %3655 = vmatpush1.msra.mxu0 0.0
    %3656 = vmatprep.subr.mxu0 0.0
    %3657 = vmatpush1.msra.mxu0 0.0
    %3658 = vmatprep.subr.mxu0 0.0
    %3659 = vmatpush1.msra.mxu0 0.0
    %3660 = vmatprep.subr.mxu0 0.0
    %3661 = vmatpush1.msra.mxu0 0.0
    %3662 = vmatprep.subr.mxu0 0.0
    %3663 = vmatpush1.msra.mxu0 0.0
    %3664 = vmatprep.subr.mxu0 0.0
    %3665 = vmatpush1.msra.mxu0 0.0
    %3666 = vmatprep.mubr.f32.mxu0 0.0
    %3667 = vmatmul.mubr.f32.gmra.mrb[0].mxu0 %v3597
    %v3668 = vpop.f32.mrb[0].mxu0
    %v3669 = vadd.f32 0.0, %v3668
    %v3670 = vpop.f32.mrb[0].mxu0
    %3671 = vmatprep.mubr.f32.mxu0 0.0
    %3672 = vmatmul.mubr.f32.gmra.mrb[0].mxu0 %v3600
    %v3673 = vpop.f32.mrb[0].mxu0
    %v3674 = vadd.f32 0.0, %v3673
    %v3675 = vpop.f32.mrb[0].mxu0
    %3676 = vdwg.mxu0
    %v3677 = vadd.f32 %v3485, %v3669
    %v3678 = vadd.f32 %v3486, %v3674
    %v3679 = vld [vmem:[%s7] sm:$0xff]
    %v3680 = vld [vmem:[%s7 + $0x8] sm:$0xff]
    %v3681 = vld [vmem:[%s7 + $0x10] sm:$0xff]
    %v3682 = vld [vmem:[%s7 + $0x18] sm:$0xff]
    %v3683 = vld [vmem:[#allocation7] sm:$0x1]
    %v3685 = vlaneseq
    %v3686 = vshrl.u32 %v3685, 7
    %v3687 = vsub.s32 0, %v3686
    %v3688 = vrot.slane %v3683, %v3687
    %v3691 = vsel %vm148, %v1394, 0
    %v3694 = vsel %vm148, %v1395, 0
    %v3697 = vsel %vm148, %v2155, 0
    %v3700 = vsel %vm148, %v2156, 0
    %v3703 = vsel %vm148, %v2916, 0
    %v3706 = vsel %vm148, %v2917, 0
    %v3709 = vsel %vm148, %v3677, 0
    %v3712 = vsel %vm148, %v3678, 0
    %3714 = vmatprep.subr.mxu0 0.0
    %3715 = vmatpush1.msra.mxu0 %v3679
    %3716 = vmatprep.subr.mxu0 0.0
    %3717 = vmatpush1.msra.mxu0 %v3680
    %3718 = vmatprep.subr.mxu0 0.0
    %3719 = vmatpush1.msra.mxu0 %v3681
    %3720 = vmatprep.subr.mxu0 0.0
    %3721 = vmatpush1.msra.mxu0 %v3682
    %3722 = vmatprep.subr.mxu0 0.0
    %3723 = vmatpush1.msra.mxu0 0.0
    %3724 = vmatprep.subr.mxu0 0.0
    %3725 = vmatpush1.msra.mxu0 0.0
    %3726 = vmatprep.subr.mxu0 0.0
    %3727 = vmatpush1.msra.mxu0 0.0
    %3728 = vmatprep.subr.mxu0 0.0
    %3729 = vmatpush1.msra.mxu0 0.0
    %3730 = vmatprep.subr.mxu0 0.0
    %3731 = vmatpush1.msra.mxu0 0.0
    %3732 = vmatprep.subr.mxu0 0.0
    %3733 = vmatpush1.msra.mxu0 0.0
    %3734 = vmatprep.subr.mxu0 0.0
    %3735 = vmatpush1.msra.mxu0 0.0
    %3736 = vmatprep.subr.mxu0 0.0
    %3737 = vmatpush1.msra.mxu0 0.0
    %3738 = vmatprep.subr.mxu0 0.0
    %3739 = vmatpush1.msra.mxu0 0.0
    %3740 = vmatprep.subr.mxu0 0.0
    %3741 = vmatpush1.msra.mxu0 0.0
    %3742 = vmatprep.subr.mxu0 0.0
    %3743 = vmatpush1.msra.mxu0 0.0
    %3744 = vmatprep.subr.mxu0 0.0
    %3745 = vmatpush1.msra.mxu0 0.0
    %3746 = vmatprep.subr.mxu0 0.0
    %3747 = vmatpush1.msra.mxu0 0.0
    %3748 = vmatprep.subr.mxu0 0.0
    %3749 = vmatpush1.msra.mxu0 0.0
    %3750 = vmatprep.subr.mxu0 0.0
    %3751 = vmatpush1.msra.mxu0 0.0
    %3752 = vmatprep.subr.mxu0 0.0
    %3753 = vmatpush1.msra.mxu0 0.0
    %3754 = vmatprep.subr.mxu0 0.0
    %3755 = vmatpush1.msra.mxu0 0.0
    %3756 = vmatprep.subr.mxu0 0.0
    %3757 = vmatpush1.msra.mxu0 0.0
    %3758 = vmatprep.subr.mxu0 0.0
    %3759 = vmatpush1.msra.mxu0 0.0
    %3760 = vmatprep.subr.mxu0 0.0
    %3761 = vmatpush1.msra.mxu0 0.0
    %3762 = vmatprep.subr.mxu0 0.0
    %3763 = vmatpush1.msra.mxu0 0.0
    %3764 = vmatprep.subr.mxu0 0.0
    %3765 = vmatpush1.msra.mxu0 0.0
    %3766 = vmatprep.subr.mxu0 0.0
    %3767 = vmatpush1.msra.mxu0 0.0
    %3768 = vmatprep.subr.mxu0 0.0
    %3769 = vmatpush1.msra.mxu0 0.0
    %3770 = vmatprep.subr.mxu0 0.0
    %3771 = vmatpush1.msra.mxu0 0.0
    %3772 = vmatprep.subr.mxu0 0.0
    %3773 = vmatpush1.msra.mxu0 0.0
    %3774 = vmatprep.subr.mxu0 0.0
    %3775 = vmatpush1.msra.mxu0 0.0
    %3776 = vmatprep.subr.mxu0 0.0
    %3777 = vmatpush1.msra.mxu0 0.0
    %3778 = vmatprep.mubr.f32.mxu0 0.0
    %3779 = vmatmul.mubr.f32.gmra.mrb[0].mxu0 %v3691
    %v3780 = vpop.f32.mrb[0].mxu0
    %v3781 = vadd.f32 %v3688, %v3780
    %v3782 = vpop.f32.mrb[0].mxu0
    %3783 = vmatprep.mubr.f32.mxu0 0.0
    %3784 = vmatmul.mubr.f32.gmra.mrb[0].mxu0 %v3694
    %v3785 = vpop.f32.mrb[0].mxu0
    %v3786 = vadd.f32 %v3688, %v3785
    %v3787 = vpop.f32.mrb[0].mxu0
    %3788 = vmatprep.mubr.f32.mxu0 0.0
    %3789 = vmatmul.mubr.f32.gmra.mrb[0].mxu0 %v3697
    %v3790 = vpop.f32.mrb[0].mxu0
    %v3791 = vadd.f32 %v3688, %v3790
    %v3792 = vpop.f32.mrb[0].mxu0
    %3793 = vmatprep.mubr.f32.mxu0 0.0
    %3794 = vmatmul.mubr.f32.gmra.mrb[0].mxu0 %v3700
    %v3795 = vpop.f32.mrb[0].mxu0
    %v3796 = vadd.f32 %v3688, %v3795
    %v3797 = vpop.f32.mrb[0].mxu0
    %3798 = vmatprep.mubr.f32.mxu0 0.0
    %3799 = vmatmul.mubr.f32.gmra.mrb[0].mxu0 %v3703
    %v3800 = vpop.f32.mrb[0].mxu0
    %v3801 = vadd.f32 %v3688, %v3800
    %v3802 = vpop.f32.mrb[0].mxu0
    %3803 = vmatprep.mubr.f32.mxu0 0.0
    %3804 = vmatmul.mubr.f32.gmra.mrb[0].mxu0 %v3706
    %v3805 = vpop.f32.mrb[0].mxu0
    %v3806 = vadd.f32 %v3688, %v3805
    %v3807 = vpop.f32.mrb[0].mxu0
    %3808 = vmatprep.mubr.f32.mxu0 0.0
    %3809 = vmatmul.mubr.f32.gmra.mrb[0].mxu0 %v3709
    %v3810 = vpop.f32.mrb[0].mxu0
    %v3811 = vadd.f32 %v3688, %v3810
    %v3812 = vpop.f32.mrb[0].mxu0
    %3813 = vmatprep.mubr.f32.mxu0 0.0
    %3814 = vmatmul.mubr.f32.gmra.mrb[0].mxu0 %v3712
    %v3815 = vpop.f32.mrb[0].mxu0
    %v3816 = vadd.f32 %v3688, %v3815
    %v3817 = vpop.f32.mrb[0].mxu0
    %3818 = vdwg.mxu0
    %v3819 = vadd.f32 %v136, %v3781
    %v3820 = vadd.f32 %v137, %v3786
    %v3821 = vadd.f32 %v138, %v3791
    %v3822 = vadd.f32 %v139, %v3796
    %v3823 = vadd.f32 %v140, %v3801
    %v3824 = vadd.f32 %v141, %v3806
    %v3825 = vadd.f32 %v142, %v3811
    %v3826 = vadd.f32 %v143, %v3816
    %v3827 = vsel %vm148, %v3819, 0.0
    %3828 = vadd.xlane.f32.xlu0 %v3827
    %v3829 = vpop.xlane.xlu0 %3828
    %v3830 = vsel %vm148, %v3820, 0.0
    %3831 = vadd.xlane.f32.xlu0 %v3830
    %v3832 = vpop.xlane.xlu0 %3831
    %v3833 = vsel %vm148, %v3821, 0.0
    %3834 = vadd.xlane.f32.xlu0 %v3833
    %v3835 = vpop.xlane.xlu0 %3834
    %v3836 = vsel %vm148, %v3822, 0.0
    %3837 = vadd.xlane.f32.xlu0 %v3836
    %v3838 = vpop.xlane.xlu0 %3837
    %v3839 = vsel %vm148, %v3823, 0.0
    %3840 = vadd.xlane.f32.xlu0 %v3839
    %v3841 = vpop.xlane.xlu0 %3840
    %v3842 = vsel %vm148, %v3824, 0.0
    %3843 = vadd.xlane.f32.xlu0 %v3842
    %v3844 = vpop.xlane.xlu0 %3843
    %v3845 = vsel %vm148, %v3825, 0.0
    %3846 = vadd.xlane.f32.xlu0 %v3845
    %v3847 = vpop.xlane.xlu0 %3846
    %v3848 = vsel %vm148, %v3826, 0.0
    %3849 = vadd.xlane.f32.xlu0 %v3848
    %v3850 = vpop.xlane.xlu0 %3849
    %v3851 = vmul.f32 %v3829, %v173
    %v3852 = vmul.f32 %v3832, %v173
    %v3853 = vmul.f32 %v3835, %v173
    %v3854 = vmul.f32 %v3838, %v173
    %v3855 = vmul.f32 %v3841, %v173
    %v3856 = vmul.f32 %v3844, %v173
    %v3857 = vmul.f32 %v3847, %v173
    %v3858 = vmul.f32 %v3850, %v173
    %v3859 = vsub.f32 %v3819, %v3851
    %v3860 = vsub.f32 %v3820, %v3852
    %v3861 = vsub.f32 %v3821, %v3853
    %v3862 = vsub.f32 %v3822, %v3854
    %v3863 = vsub.f32 %v3823, %v3855
    %v3864 = vsub.f32 %v3824, %v3856
    %v3865 = vsub.f32 %v3825, %v3857
    %v3866 = vsub.f32 %v3826, %v3858
    %v3867 = vmul.f32 %v3859, %v3859
    %v3868 = vmul.f32 %v3860, %v3860
    %v3869 = vmul.f32 %v3861, %v3861
    %v3870 = vmul.f32 %v3862, %v3862
    %v3871 = vmul.f32 %v3863, %v3863
    %v3872 = vmul.f32 %v3864, %v3864
    %v3873 = vmul.f32 %v3865, %v3865
    %v3874 = vmul.f32 %v3866, %v3866
    %v3875 = vsel %vm148, %v3867, 0.0
    %3876 = vadd.xlane.f32.xlu0 %v3875
    %v3877 = vpop.xlane.xlu0 %3876
    %v3878 = vsel %vm148, %v3868, 0.0
    %3879 = vadd.xlane.f32.xlu0 %v3878
    %v3880 = vpop.xlane.xlu0 %3879
    %v3881 = vsel %vm148, %v3869, 0.0
    %3882 = vadd.xlane.f32.xlu0 %v3881
    %v3883 = vpop.xlane.xlu0 %3882
    %v3884 = vsel %vm148, %v3870, 0.0
    %3885 = vadd.xlane.f32.xlu0 %v3884
    %v3886 = vpop.xlane.xlu0 %3885
    %v3887 = vsel %vm148, %v3871, 0.0
    %3888 = vadd.xlane.f32.xlu0 %v3887
    %v3889 = vpop.xlane.xlu0 %3888
    %v3890 = vsel %vm148, %v3872, 0.0
    %3891 = vadd.xlane.f32.xlu0 %v3890
    %v3892 = vpop.xlane.xlu0 %3891
    %v3893 = vsel %vm148, %v3873, 0.0
    %3894 = vadd.xlane.f32.xlu0 %v3893
    %v3895 = vpop.xlane.xlu0 %3894
    %v3896 = vsel %vm148, %v3874, 0.0
    %3897 = vadd.xlane.f32.xlu0 %v3896
    %v3898 = vpop.xlane.xlu0 %3897
    %v3899 = vmul.f32 %v3877, %v173
    %v3900 = vmul.f32 %v3880, %v173
    %v3901 = vmul.f32 %v3883, %v173
    %v3902 = vmul.f32 %v3886, %v173
    %v3903 = vmul.f32 %v3889, %v173
    %v3904 = vmul.f32 %v3892, %v173
    %v3905 = vmul.f32 %v3895, %v173
    %v3906 = vmul.f32 %v3898, %v173
    %v3907 = vadd.f32 %v3899, 1e-05
    %v3908 = vadd.f32 %v3900, 1e-05
    %v3909 = vadd.f32 %v3901, 1e-05
    %v3910 = vadd.f32 %v3902, 1e-05
    %v3911 = vadd.f32 %v3903, 1e-05
    %v3912 = vadd.f32 %v3904, 1e-05
    %v3913 = vadd.f32 %v3905, 1e-05
    %v3914 = vadd.f32 %v3906, 1e-05
    %v3915 = vrsqrt.pop %v3907
    %v3916 = vrsqrt.pop %v3908
    %v3917 = vrsqrt.pop %v3909
    %v3918 = vrsqrt.pop %v3910
    %v3919 = vrsqrt.pop %v3911
    %v3920 = vrsqrt.pop %v3912
    %v3921 = vrsqrt.pop %v3913
    %v3922 = vrsqrt.pop %v3914
    %v3923 = vmul.f32 %v3859, %v3915
    %v3924 = vmul.f32 %v3860, %v3916
    %v3925 = vmul.f32 %v3861, %v3917
    %v3926 = vmul.f32 %v3862, %v3918
    %v3927 = vmul.f32 %v3863, %v3919
    %v3928 = vmul.f32 %v3864, %v3920
    %v3929 = vmul.f32 %v3865, %v3921
    %v3930 = vmul.f32 %v3866, %v3922
    %v3931 = vld [vmem:[#allocation8] sm:$0x1]
    %v3933 = vlaneseq
    %v3934 = vshrl.u32 %v3933, 7
    %v3935 = vsub.s32 0, %v3934
    %v3936 = vrot.slane %v3931, %v3935
    %v3938 = vmul.f32 %v3923, %v3936
    %v3939 = vmul.f32 %v3924, %v3936
    %v3940 = vmul.f32 %v3925, %v3936
    %v3941 = vmul.f32 %v3926, %v3936
    %v3942 = vmul.f32 %v3927, %v3936
    %v3943 = vmul.f32 %v3928, %v3936
    %v3944 = vmul.f32 %v3929, %v3936
    %v3945 = vmul.f32 %v3930, %v3936
    %v3946 = vld [vmem:[#allocation10] sm:$0x1]
    %v3948 = vlaneseq
    %v3949 = vshrl.u32 %v3948, 7
    %v3950 = vsub.s32 0, %v3949
    %v3951 = vrot.slane %v3946, %v3950
    %v3953 = vadd.f32 %v3938, %v3951
    %v3954 = vadd.f32 %v3939, %v3951
    %v3955 = vadd.f32 %v3940, %v3951
    %v3956 = vadd.f32 %v3941, %v3951
    %v3957 = vadd.f32 %v3942, %v3951
    %v3958 = vadd.f32 %v3943, %v3951
    %v3959 = vadd.f32 %v3944, %v3951
    %v3960 = vadd.f32 %v3945, %v3951
    %v3961 = vld [vmem:[#allocation11] sm:$0xff]
    %v3962 = vld [vmem:[#allocation11 + $0x8] sm:$0xff]
    %v3963 = vld [vmem:[#allocation11 + $0x10] sm:$0xff]
    %v3964 = vld [vmem:[#allocation11 + $0x18] sm:$0xff]
    %v3965 = vld [vmem:[#allocation13] sm:$0x1]
    %v3967 = vlaneseq
    %v3968 = vshrl.u32 %v3967, 7
    %v3969 = vsub.s32 0, %v3968
    %v3970 = vrot.slane %v3965, %v3969
    %v3973 = vsel %vm148, %v3953, 0
    %v3976 = vsel %vm148, %v3954, 0
    %v3979 = vsel %vm148, %v3955, 0
    %v3982 = vsel %vm148, %v3956, 0
    %v3985 = vsel %vm148, %v3957, 0
    %v3988 = vsel %vm148, %v3958, 0
    %v3991 = vsel %vm148, %v3959, 0
    %v3994 = vsel %vm148, %v3960, 0
    %3996 = vmatprep.subr.mxu0 0.0
    %3997 = vmatpush1.msra.mxu0 %v3961
    %3998 = vmatprep.subr.mxu0 0.0
    %3999 = vmatpush1.msra.mxu0 %v3962
    %4000 = vmatprep.subr.mxu0 0.0
    %4001 = vmatpush1.msra.mxu0 %v3963
    %4002 = vmatprep.subr.mxu0 0.0
    %4003 = vmatpush1.msra.mxu0 %v3964
    %4004 = vmatprep.subr.mxu0 0.0
    %4005 = vmatpush1.msra.mxu0 0.0
    %4006 = vmatprep.subr.mxu0 0.0
    %4007 = vmatpush1.msra.mxu0 0.0
    %4008 = vmatprep.subr.mxu0 0.0
    %4009 = vmatpush1.msra.mxu0 0.0
    %4010 = vmatprep.subr.mxu0 0.0
    %4011 = vmatpush1.msra.mxu0 0.0
    %4012 = vmatprep.subr.mxu0 0.0
    %4013 = vmatpush1.msra.mxu0 0.0
    %4014 = vmatprep.subr.mxu0 0.0
    %4015 = vmatpush1.msra.mxu0 0.0
    %4016 = vmatprep.subr.mxu0 0.0
    %4017 = vmatpush1.msra.mxu0 0.0
    %4018 = vmatprep.subr.mxu0 0.0
    %4019 = vmatpush1.msra.mxu0 0.0
    %4020 = vmatprep.subr.mxu0 0.0
    %4021 = vmatpush1.msra.mxu0 0.0
    %4022 = vmatprep.subr.mxu0 0.0
    %4023 = vmatpush1.msra.mxu0 0.0
    %4024 = vmatprep.subr.mxu0 0.0
    %4025 = vmatpush1.msra.mxu0 0.0
    %4026 = vmatprep.subr.mxu0 0.0
    %4027 = vmatpush1.msra.mxu0 0.0
    %4028 = vmatprep.subr.mxu0 0.0
    %4029 = vmatpush1.msra.mxu0 0.0
    %4030 = vmatprep.subr.mxu0 0.0
    %4031 = vmatpush1.msra.mxu0 0.0
    %4032 = vmatprep.subr.mxu0 0.0
    %4033 = vmatpush1.msra.mxu0 0.0
    %4034 = vmatprep.subr.mxu0 0.0
    %4035 = vmatpush1.msra.mxu0 0.0
    %4036 = vmatprep.subr.mxu0 0.0
    %4037 = vmatpush1.msra.mxu0 0.0
    %4038 = vmatprep.subr.mxu0 0.0
    %4039 = vmatpush1.msra.mxu0 0.0
    %4040 = vmatprep.subr.mxu0 0.0
    %4041 = vmatpush1.msra.mxu0 0.0
    %4042 = vmatprep.subr.mxu0 0.0
    %4043 = vmatpush1.msra.mxu0 0.0
    %4044 = vmatprep.subr.mxu0 0.0
    %4045 = vmatpush1.msra.mxu0 0.0
    %4046 = vmatprep.subr.mxu0 0.0
    %4047 = vmatpush1.msra.mxu0 0.0
    %4048 = vmatprep.subr.mxu0 0.0
    %4049 = vmatpush1.msra.mxu0 0.0
    %4050 = vmatprep.subr.mxu0 0.0
    %4051 = vmatpush1.msra.mxu0 0.0
    %4052 = vmatprep.subr.mxu0 0.0
    %4053 = vmatpush1.msra.mxu0 0.0
    %4054 = vmatprep.subr.mxu0 0.0
    %4055 = vmatpush1.msra.mxu0 0.0
    %4056 = vmatprep.subr.mxu0 0.0
    %4057 = vmatpush1.msra.mxu0 0.0
    %4058 = vmatprep.subr.mxu0 0.0
    %4059 = vmatpush1.msra.mxu0 0.0
    %4060 = vmatprep.mubr.f32.mxu0 0.0
    %4061 = vmatmul.mubr.f32.gmra.mrb[0].mxu0 %v3973
    %v4062 = vpop.f32.mrb[0].mxu0
    %v4063 = vadd.f32 %v3970, %v4062
    %v4064 = vpop.f32.mrb[0].mxu0
    %4065 = vmatprep.mubr.f32.mxu0 0.0
    %4066 = vmatmul.mubr.f32.gmra.mrb[0].mxu0 %v3976
    %v4067 = vpop.f32.mrb[0].mxu0
    %v4068 = vadd.f32 %v3970, %v4067
    %v4069 = vpop.f32.mrb[0].mxu0
    %4070 = vmatprep.mubr.f32.mxu0 0.0
    %4071 = vmatmul.mubr.f32.gmra.mrb[0].mxu0 %v3979
    %v4072 = vpop.f32.mrb[0].mxu0
    %v4073 = vadd.f32 %v3970, %v4072
    %v4074 = vpop.f32.mrb[0].mxu0
    %4075 = vmatprep.mubr.f32.mxu0 0.0
    %4076 = vmatmul.mubr.f32.gmra.mrb[0].mxu0 %v3982
    %v4077 = vpop.f32.mrb[0].mxu0
    %v4078 = vadd.f32 %v3970, %v4077
    %v4079 = vpop.f32.mrb[0].mxu0
    %4080 = vmatprep.mubr.f32.mxu0 0.0
    %4081 = vmatmul.mubr.f32.gmra.mrb[0].mxu0 %v3985
    %v4082 = vpop.f32.mrb[0].mxu0
    %v4083 = vadd.f32 %v3970, %v4082
    %v4084 = vpop.f32.mrb[0].mxu0
    %4085 = vmatprep.mubr.f32.mxu0 0.0
    %4086 = vmatmul.mubr.f32.gmra.mrb[0].mxu0 %v3988
    %v4087 = vpop.f32.mrb[0].mxu0
    %v4088 = vadd.f32 %v3970, %v4087
    %v4089 = vpop.f32.mrb[0].mxu0
    %4090 = vmatprep.mubr.f32.mxu0 0.0
    %4091 = vmatmul.mubr.f32.gmra.mrb[0].mxu0 %v3991
    %v4092 = vpop.f32.mrb[0].mxu0
    %v4093 = vadd.f32 %v3970, %v4092
    %v4094 = vpop.f32.mrb[0].mxu0
    %4095 = vmatprep.mubr.f32.mxu0 0.0
    %4096 = vmatmul.mubr.f32.gmra.mrb[0].mxu0 %v3994
    %v4097 = vpop.f32.mrb[0].mxu0
    %v4098 = vadd.f32 %v3970, %v4097
    %v4099 = vpop.f32.mrb[0].mxu0
    %4100 = vdwg.mxu0
    %vm4101 = vcmp.ge.f32.partialorder %v4063, 0.0
    %vm4102 = vcmp.ge.f32.partialorder %v4068, 0.0
    %vm4103 = vcmp.ge.f32.partialorder %v4073, 0.0
    %vm4104 = vcmp.ge.f32.partialorder %v4078, 0.0
    %vm4105 = vcmp.ge.f32.partialorder %v4083, 0.0
    %vm4106 = vcmp.ge.f32.partialorder %v4088, 0.0
    %vm4107 = vcmp.ge.f32.partialorder %v4093, 0.0
    %vm4108 = vcmp.ge.f32.partialorder %v4098, 0.0
    %v4109 = vmul.f32 %v4063, 0.01
    %v4110 = vmul.f32 %v4068, 0.01
    %v4111 = vmul.f32 %v4073, 0.01
    %v4112 = vmul.f32 %v4078, 0.01
    %v4113 = vmul.f32 %v4083, 0.01
    %v4114 = vmul.f32 %v4088, 0.01
    %v4115 = vmul.f32 %v4093, 0.01
    %v4116 = vmul.f32 %v4098, 0.01
    %v4117 = vsel %vm4101, %v4063, %v4109
    %v4118 = vsel %vm4102, %v4068, %v4110
    %v4119 = vsel %vm4103, %v4073, %v4111
    %v4120 = vsel %vm4104, %v4078, %v4112
    %v4121 = vsel %vm4105, %v4083, %v4113
    %v4122 = vsel %vm4106, %v4088, %v4114
    %v4123 = vsel %vm4107, %v4093, %v4115
    %v4124 = vsel %vm4108, %v4098, %v4116
    %v4125 = vld [vmem:[%s13] sm:$0xff]
    %v4126 = vld [vmem:[%s13 + $0x8] sm:$0xff]
    %v4127 = vld [vmem:[%s13 + $0x10] sm:$0xff]
    %v4128 = vld [vmem:[%s13 + $0x18] sm:$0xff]
    %v4129 = vld [vmem:[%s13 + $0x20] sm:$0xff]
    %v4130 = vld [vmem:[%s13 + $0x28] sm:$0xff]
    %v4131 = vld [vmem:[%s13 + $0x30] sm:$0xff]
    %v4132 = vld [vmem:[%s13 + $0x38] sm:$0xff]
    %v4133 = vld [vmem:[%s13 + $0x40] sm:$0xff]
    %v4134 = vld [vmem:[%s13 + $0x48] sm:$0xff]
    %v4135 = vld [vmem:[%s13 + $0x50] sm:$0xff]
    %v4136 = vld [vmem:[%s13 + $0x58] sm:$0xff]
    %v4137 = vld [vmem:[%s13 + $0x60] sm:$0xff]
    %v4138 = vld [vmem:[%s13 + $0x68] sm:$0xff]
    %v4139 = vld [vmem:[%s13 + $0x70] sm:$0xff]
    %v4140 = vld [vmem:[%s13 + $0x78] sm:$0xff]
    %v4141 = vld [vmem:[%s14] sm:$0x1]
    %v4143 = vlaneseq
    %v4144 = vshrl.u32 %v4143, 7
    %v4145 = vsub.s32 0, %v4144
    %v4146 = vrot.slane %v4141, %v4145
    %4148 = vmatprep.subr.mxu0 0.0
    %4149 = vmatpush1.msra.mxu0 %v4125
    %4150 = vmatprep.subr.mxu0 0.0
    %4151 = vmatpush1.msra.mxu0 %v4126
    %4152 = vmatprep.subr.mxu0 0.0
    %4153 = vmatpush1.msra.mxu0 %v4127
    %4154 = vmatprep.subr.mxu0 0.0
    %4155 = vmatpush1.msra.mxu0 %v4128
    %4156 = vmatprep.subr.mxu0 0.0
    %4157 = vmatpush1.msra.mxu0 %v4129
    %4158 = vmatprep.subr.mxu0 0.0
    %4159 = vmatpush1.msra.mxu0 %v4130
    %4160 = vmatprep.subr.mxu0 0.0
    %4161 = vmatpush1.msra.mxu0 %v4131
    %4162 = vmatprep.subr.mxu0 0.0
    %4163 = vmatpush1.msra.mxu0 %v4132
    %4164 = vmatprep.subr.mxu0 0.0
    %4165 = vmatpush1.msra.mxu0 %v4133
    %4166 = vmatprep.subr.mxu0 0.0
    %4167 = vmatpush1.msra.mxu0 %v4134
    %4168 = vmatprep.subr.mxu0 0.0
    %4169 = vmatpush1.msra.mxu0 %v4135
    %4170 = vmatprep.subr.mxu0 0.0
    %4171 = vmatpush1.msra.mxu0 %v4136
    %4172 = vmatprep.subr.mxu0 0.0
    %4173 = vmatpush1.msra.mxu0 %v4137
    %4174 = vmatprep.subr.mxu0 0.0
    %4175 = vmatpush1.msra.mxu0 %v4138
    %4176 = vmatprep.subr.mxu0 0.0
    %4177 = vmatpush1.msra.mxu0 %v4139
    %4178 = vmatprep.subr.mxu0 0.0
    %4179 = vmatpush1.msra.mxu0 %v4140
    %4180 = vmatprep.subr.mxu0 0.0
    %4181 = vmatpush1.msra.mxu0 0.0
    %4182 = vmatprep.subr.mxu0 0.0
    %4183 = vmatpush1.msra.mxu0 0.0
    %4184 = vmatprep.subr.mxu0 0.0
    %4185 = vmatpush1.msra.mxu0 0.0
    %4186 = vmatprep.subr.mxu0 0.0
    %4187 = vmatpush1.msra.mxu0 0.0
    %4188 = vmatprep.subr.mxu0 0.0
    %4189 = vmatpush1.msra.mxu0 0.0
    %4190 = vmatprep.subr.mxu0 0.0
    %4191 = vmatpush1.msra.mxu0 0.0
    %4192 = vmatprep.subr.mxu0 0.0
    %4193 = vmatpush1.msra.mxu0 0.0
    %4194 = vmatprep.subr.mxu0 0.0
    %4195 = vmatpush1.msra.mxu0 0.0
    %4196 = vmatprep.subr.mxu0 0.0
    %4197 = vmatpush1.msra.mxu0 0.0
    %4198 = vmatprep.subr.mxu0 0.0
    %4199 = vmatpush1.msra.mxu0 0.0
    %4200 = vmatprep.subr.mxu0 0.0
    %4201 = vmatpush1.msra.mxu0 0.0
    %4202 = vmatprep.subr.mxu0 0.0
    %4203 = vmatpush1.msra.mxu0 0.0
    %4204 = vmatprep.subr.mxu0 0.0
    %4205 = vmatpush1.msra.mxu0 0.0
    %4206 = vmatprep.subr.mxu0 0.0
    %4207 = vmatpush1.msra.mxu0 0.0
    %4208 = vmatprep.subr.mxu0 0.0
    %4209 = vmatpush1.msra.mxu0 0.0
    %4210 = vmatprep.subr.mxu0 0.0
    %4211 = vmatpush1.msra.mxu0 0.0
    %4212 = vmatprep.mubr.f32.mxu0 0.0
    %4213 = vmatmul.mubr.f32.gmra.mrb[0].mxu0 %v4117
    %v4214 = vpop.f32.mrb[0].mxu0
    %v4215 = vadd.f32 %v4146, %v4214
    %v4216 = vpop.f32.mrb[0].mxu0
    %4217 = vmatprep.mubr.f32.mxu0 0.0
    %4218 = vmatmul.mubr.f32.gmra.mrb[0].mxu0 %v4118
    %v4219 = vpop.f32.mrb[0].mxu0
    %v4220 = vadd.f32 %v4146, %v4219
    %v4221 = vpop.f32.mrb[0].mxu0
    %4222 = vmatprep.mubr.f32.mxu0 0.0
    %4223 = vmatmul.mubr.f32.gmra.mrb[0].mxu0 %v4119
    %v4224 = vpop.f32.mrb[0].mxu0
    %v4225 = vadd.f32 %v4146, %v4224
    %v4226 = vpop.f32.mrb[0].mxu0
    %4227 = vmatprep.mubr.f32.mxu0 0.0
    %4228 = vmatmul.mubr.f32.gmra.mrb[0].mxu0 %v4120
    %v4229 = vpop.f32.mrb[0].mxu0
    %v4230 = vadd.f32 %v4146, %v4229
    %v4231 = vpop.f32.mrb[0].mxu0
    %4232 = vmatprep.mubr.f32.mxu0 0.0
    %4233 = vmatmul.mubr.f32.gmra.mrb[0].mxu0 %v4121
    %v4234 = vpop.f32.mrb[0].mxu0
    %v4235 = vadd.f32 %v4146, %v4234
    %v4236 = vpop.f32.mrb[0].mxu0
    %4237 = vmatprep.mubr.f32.mxu0 0.0
    %4238 = vmatmul.mubr.f32.gmra.mrb[0].mxu0 %v4122
    %v4239 = vpop.f32.mrb[0].mxu0
    %v4240 = vadd.f32 %v4146, %v4239
    %v4241 = vpop.f32.mrb[0].mxu0
    %4242 = vmatprep.mubr.f32.mxu0 0.0
    %4243 = vmatmul.mubr.f32.gmra.mrb[0].mxu0 %v4123
    %v4244 = vpop.f32.mrb[0].mxu0
    %v4245 = vadd.f32 %v4146, %v4244
    %v4246 = vpop.f32.mrb[0].mxu0
    %4247 = vmatprep.mubr.f32.mxu0 0.0
    %4248 = vmatmul.mubr.f32.gmra.mrb[0].mxu0 %v4124
    %v4249 = vpop.f32.mrb[0].mxu0
    %v4250 = vadd.f32 %v4146, %v4249
    %v4251 = vpop.f32.mrb[0].mxu0
    %4252 = vdwg.mxu0
    %v4253 = vadd.f32 %v3819, %v4215
    %v4254 = vadd.f32 %v3820, %v4220
    %v4255 = vadd.f32 %v3821, %v4225
    %v4256 = vadd.f32 %v3822, %v4230
    %v4257 = vadd.f32 %v3823, %v4235
    %v4258 = vadd.f32 %v3824, %v4240
    %v4259 = vadd.f32 %v3825, %v4245
    %v4260 = vadd.f32 %v3826, %v4250
    %4261 = vst.msk [vmem:[#allocation14] sm:$0xff] %vm148, %v4253
    %4262 = vst.msk [vmem:[#allocation14 + $0x8] sm:$0xff] %vm148, %v4254
    %4263 = vst.msk [vmem:[#allocation14 + $0x10] sm:$0xff] %vm148, %v4255
    %4264 = vst.msk [vmem:[#allocation14 + $0x18] sm:$0xff] %vm148, %v4256
    %4265 = vst.msk [vmem:[#allocation14 + $0x20] sm:$0xff] %vm148, %v4257
    %4266 = vst.msk [vmem:[#allocation14 + $0x28] sm:$0xff] %vm148, %v4258
    %4267 = vst.msk [vmem:[#allocation14 + $0x30] sm:$0xff] %vm148, %v4259
    %4268 = vst.msk [vmem:[#allocation14 + $0x38] sm:$0xff] %vm148, %v4260
    // Predicated region
    $region90: #{tpu_custom_call.1} parent=1 // pred_check
      _
    $region91: #{tpu_custom_call.1} parent=1 // pred_check_branch
      %4270 = sbr.rel (0) target = $region93
    $region92: #{tpu_custom_call.1} parent=1 // pred_region
      %s4272 = ssub.s32 1024, 1024
      %4273 = vsyncadd [#allocation4], %s4272
      %s4274 = sshll.u32 [#allocation14], 4
      %s4275 = int_to_ptr.vmem [resolvable:$true] %s4274
      %4280 = dma.vmem_to_hbm [thread:$0]  %s4275, 1024, %s15, [#allocation4], 128, 128, 8
    $region93: #{tpu_custom_call.1} parent=1 // pred_fallthru
      _
    // Predicated region
    $region94: #{tpu_custom_call.1} parent=1 // pred_check
      _
    $region95: #{tpu_custom_call.1} parent=1 // pred_check_branch
      %4282 = sbr.rel (0) target = $region97
    $region96: #{tpu_custom_call.1} parent=1 // pred_region
      %4283 = dma.done [#allocation4], 1024
    $region97: #{tpu_custom_call.1} parent=1 // pred_fallthru
      _
    %4284 = vsyncpa [#allocation3], 1
    %4285 = vsyncpa [#allocation6], 1
    %4286 = vsyncpa [#allocation9], 1
    %4287 = vsyncpa [#allocation12], 1
    %4288 = vsyncpa [#allocation4], 1

</llo_original>
